<compile_context>
chip_gen: v7x
topology: tpu7x:2x2x1
jax: 0.10.0
libtpu: 0.0.40
codegen_flags: <defaults>
</compile_context>

<pallas_src>
import jax
import jax.numpy as jnp
from jax.experimental import pallas as pl
from jax.experimental.pallas import tpu as pltpu


def _build_band_matrix(conv_w, H, W):
    """(1,2,K,K) conv weight -> (2*H*W, H*W) band matrix encoding the
    zero-padded KxK conv over the stacked [max_map, avg_map] spatial maps."""
    K = conv_w.shape[-1]
    P = K // 2
    HW = H * W
    pos = jnp.arange(HW, dtype=jnp.int32)
    i_in, j_in = pos // W, pos % W                     # input position (band row)
    i_out, j_out = pos // W, pos % W                   # output position (band col)
    dh = i_in[:, None] - i_out[None, :] + P            # (HW, HW)
    dw = j_in[:, None] - j_out[None, :] + P
    valid = (dh >= 0) & (dh < K) & (dw >= 0) & (dw < K)
    tap = jnp.clip(dh, 0, K - 1) * K + jnp.clip(dw, 0, K - 1)
    wflat = jnp.asarray(conv_w, jnp.float32).reshape(2, K * K)
    band_mx = jnp.where(valid, wflat[0][tap], 0.0)     # max-channel taps
    band_av = jnp.where(valid, wflat[1][tap], 0.0)     # avg-channel taps
    return jnp.concatenate([band_mx, band_av], axis=0)  # (2*HW, HW)


def _make_cbam_kernel(C, HW):
    inv_hw = 1.0 / HW
    inv_c = 1.0 / C
    prec = jax.lax.Precision.HIGHEST   # keep f32 numerics vs. reference

    def kernel(x_ref, w1t_ref, b1_ref, w2t_ref, b2_ref, band_ref, cb_ref, o_ref):
        # Block shapes:
        #   x_ref    : (Bt, C, HW)   VMEM (lane-dense last dim)
        #   w1t_ref  : (C, hid_p)    VMEM (Linear1 weight, pre-transposed, padded)
        #   b1_ref   : (1, hid_p)    VMEM
        #   w2t_ref  : (hid_p, C)    VMEM (Linear2 weight, pre-transposed, padded)
        #   b2_ref   : (1, C)        VMEM
        #   band_ref : (2*HW, HW)    VMEM (7x7 conv as a band matrix)
        #   cb_ref   : (1,)          SMEM (conv bias)
        #   o_ref    : (Bt, C, HW)   VMEM
        Bt = x_ref.shape[0]
        x = x_ref[...].astype(jnp.float32)                     # (Bt, C, HW)

        # ---------------- Channel attention ----------------
        mx = jnp.max(x, axis=2)                                 # (Bt, C) lane reduce
        av = jnp.sum(x, axis=2) * inv_hw                        # (Bt, C)
        p = jnp.concatenate([mx, av], axis=0)                   # (2*Bt, C)  fused MLP pass
        h = jnp.dot(p, w1t_ref[...], precision=prec,
                    preferred_element_type=jnp.float32) + b1_ref[...]
        h = jnp.maximum(h, 0.0)                                 # ReLU
        q = jnp.dot(h, w2t_ref[...], precision=prec,
                    preferred_element_type=jnp.float32) + b2_ref[...]
        ca = jax.nn.sigmoid(q[:Bt] + q[Bt:])                    # (Bt, C)
        x_ca = x * ca[:, :, None]                               # channel-gated feats

        # ---------------- Spatial attention ----------------
        mx_sp = jnp.max(x_ca, axis=1)                           # (Bt, HW) sublane reduce
        av_sp = jnp.sum(x_ca, axis=1) * inv_c                   # (Bt, HW)
        sp = jnp.concatenate([mx_sp, av_sp], axis=1)            # (Bt, 2*HW)
        conv = jnp.dot(sp, band_ref[...], precision=prec,
                       preferred_element_type=jnp.float32)      # (Bt, HW) == 7x7 conv
        sa = jax.nn.sigmoid(conv + cb_ref[0])                   # (Bt, HW)

        o_ref[...] = (x_ca * sa[:, None, :]).astype(o_ref.dtype)

    return kernel


def _pick_bt(Bp, C, HW, bytes_per_elem=4, budget_bytes=6 << 20):
    """Batch tile per grid step: largest multiple of 8 whose (Bt, C, HW) block
    fits a ~6 MiB budget and divides the (already 8-padded) batch.  Single
    grid step on small batches (1-TC chips run the grid sequentially anyway)."""
    per_sample = max(1, C * HW * bytes_per_elem)
    bt = max(8, (budget_bytes // per_sample) // 8 * 8)
    bt = min(bt, Bp)
    while Bp % bt:
        bt -= 8
    return max(bt, 8)


def cbam_pallas(x, w1, b1, w2, b2, conv_w, conv_b):
    """x: (B,C,H,W) f32. w1:(hid,C) b1:(hid,) w2:(C,hid) b2:(C,)
       conv_w:(1,2,K,K) conv_b:(1,)   (PyTorch parameter shapes)."""
    B, C, H, W = x.shape
    hid = w1.shape[0]
    HW = H * W

    # ---- Wrapper-side layout plumbing (lane-dense HW, aligned pads). ----
    Bp = ((B + 7) // 8) * 8                       # sublane-aligned batch
    hid_p = max(8, ((hid + 7) // 8) * 8)          # MXU/sublane-aligned hidden dim

    xf = jnp.asarray(x, jnp.float32).reshape(B, C, HW)
    xf = jnp.pad(xf, ((0, Bp - B), (0, 0), (0, 0)))

    w1t = jnp.zeros((C, hid_p), jnp.float32).at[:, :hid].set(
        jnp.asarray(w1, jnp.float32).T)
    b1r = jnp.zeros((1, hid_p), jnp.float32).at[:, :hid].set(
        jnp.asarray(b1, jnp.float32))
    w2t = jnp.zeros((hid_p, C), jnp.float32).at[:hid, :].set(
        jnp.asarray(w2, jnp.float32).T)
    b2r = jnp.asarray(b2, jnp.float32).reshape(1, C)
    band = _build_band_matrix(conv_w, H, W)                      # (2*HW, HW)
    cb = jnp.asarray(conv_b, jnp.float32).reshape(1)

    Bt = _pick_bt(Bp, C, HW)
    grid = (Bp // Bt,)

    # VMEM budget: 2x dbl-buffered input block + 2x output block + weights
    # (band matrix dominates) + in-kernel f32 intermediates (x_ca, product).
    block_bytes = Bt * C * HW * 4
    weight_bytes = 4 * (C * hid_p + hid_p + hid_p * C + C + 2 * HW * HW + 1)
    vmem_limit = 4 * block_bytes + 2 * weight_bytes + 3 * block_bytes + (2 << 20)
    vmem_limit = int(min(max(vmem_limit, 16 << 20), 64 << 20))

    out = pl.pallas_call(
        _make_cbam_kernel(C, HW),
        out_shape=jax.ShapeDtypeStruct((Bp, C, HW), jnp.float32),
        grid=grid,
        in_specs=[
            pl.BlockSpec((Bt, C, HW), lambda b: (b, 0, 0)),
            pl.BlockSpec((C, hid_p), lambda b: (0, 0)),
            pl.BlockSpec((1, hid_p), lambda b: (0, 0)),
            pl.BlockSpec((hid_p, C), lambda b: (0, 0)),
            pl.BlockSpec((1, C), lambda b: (0, 0)),
            pl.BlockSpec((2 * HW, HW), lambda b: (0, 0)),
            pl.BlockSpec(memory_space=pltpu.MemorySpace.SMEM),
        ],
        out_specs=pl.BlockSpec((Bt, C, HW), lambda b: (b, 0, 0)),
        compiler_params=pltpu.CompilerParams(
            dimension_semantics=("parallel",),
            vmem_limit_bytes=vmem_limit,
        ),
    )(xf, w1t, b1r, w2t, b2r, band, cb)

    return out[:B].reshape(B, C, H, W)


def cbam_reference(x, w1, b1, w2, b2, conv_w, conv_b):
    """Plain-JAX reference matching the PyTorch forward exactly."""
    mx = jnp.max(x, axis=(2, 3))
    av = jnp.mean(x, axis=(2, 3))

    def mlp(p):
        return jax.nn.relu(p @ w1.T + b1) @ w2.T + b2

    scale = jax.nn.sigmoid(mlp(mx) + mlp(av))          # (B, C)
    x_ca = x * scale[:, :, None, None]

    mxc = jnp.max(x_ca, axis=1, keepdims=True)
    avc = jnp.mean(x_ca, axis=1, keepdims=True)
    inp = jnp.concatenate([mxc, avc], axis=1)          # (B, 2, H, W)
    P = conv_w.shape[-1] // 2
    conv = jax.lax.conv_general_dilated(
        inp, conv_w, window_strides=(1, 1), padding=[(P, P), (P, P)],
        dimension_numbers=("NCHW", "OIHW", "NCHW")) + conv_b.reshape(1, 1, 1, 1)
    return jax.nn.sigmoid(conv) * x_ca


if __name__ == "__main__":
    # Full f32 precision for the reference matmuls/conv so the comparison is
    # against true f32 math (the kernel uses Precision.HIGHEST internally).
    jax.config.update("jax_default_matmul_precision", "highest")

    B, C, H, W = 2, 32, 16, 16
    reduction_ratio, kernel_size = 16, 7
    hid = C // reduction_ratio

    key = jax.random.PRNGKey(0)
    kx, k1, k2, k3, k4, k5, k6 = jax.random.split(key, 7)

    x = jax.random.normal(kx, (B, C, H, W), jnp.float32)

    # Deterministic parameter init (PyTorch parameter shapes).
    w1 = 0.2 * jax.random.normal(k1, (hid, C), jnp.float32)
    b1 = 0.1 * jax.random.normal(k2, (hid,), jnp.float32)
    w2 = 0.2 * jax.random.normal(k3, (C, hid), jnp.float32)
    b2 = 0.1 * jax.random.normal(k4, (C,), jnp.float32)
    conv_w = 0.1 * jax.random.normal(k5, (1, 2, kernel_size, kernel_size), jnp.float32)
    conv_b = 0.1 * jax.random.normal(k6, (1,), jnp.float32)

    out = cbam_pallas(x, w1, b1, w2, b2, conv_w, conv_b)
    out = jax.block_until_ready(out)

    ref = cbam_reference(x, w1, b1, w2, b2, conv_w, conv_b)
    assert out.shape == (B, C, H, W)
    assert jnp.allclose(out, ref, atol=1e-4, rtol=1e-4), (
        float(jnp.max(jnp.abs(out - ref))))

    print("KERNEL_OK")
</pallas_src>

<mosaic_0001>
module attributes {stable_mosaic.version = 11 : i64} {
  func.func @kernel(%arg0: i32, %arg1: memref<8x32x256xf32, #tpu.memory_space<vmem>>, %arg2: memref<32x8xf32, #tpu.memory_space<vmem>>, %arg3: memref<1x8xf32, #tpu.memory_space<vmem>>, %arg4: memref<8x32xf32, #tpu.memory_space<vmem>>, %arg5: memref<1x32xf32, #tpu.memory_space<vmem>>, %arg6: memref<512x256xf32, #tpu.memory_space<vmem>>, %arg7: memref<1xf32, #tpu.memory_space<smem>>, %arg8: memref<8x32x256xf32, #tpu.memory_space<vmem>>) attributes {dimension_semantics = [#tpu.dimension_semantics<parallel>], iteration_bounds = array<i64: 1>, scalar_prefetch = 0 : i64, scratch_operands = 0 : i64, tpu.core_type = #tpu.core_type<tc>, window_params = [{transform_indices = @transform_0, window_bounds = array<i64: 8, 32, 256>}, {pipeline_mode = #tpu.pipeline_mode<synchronous>, transform_indices = @transform_1, window_bounds = array<i64: 32, 8>}, {pipeline_mode = #tpu.pipeline_mode<synchronous>, transform_indices = @transform_2, window_bounds = array<i64: 1, 8>}, {pipeline_mode = #tpu.pipeline_mode<synchronous>, transform_indices = @transform_3, window_bounds = array<i64: 8, 32>}, {pipeline_mode = #tpu.pipeline_mode<synchronous>, transform_indices = @transform_4, window_bounds = array<i64: 1, 32>}, {pipeline_mode = #tpu.pipeline_mode<synchronous>, transform_indices = @transform_5, window_bounds = array<i64: 512, 256>}, {transform_indices = @transform_6, window_bounds = array<i64: 1>}, {transform_indices = @transform_7, window_bounds = array<i64: 8, 32, 256>}]} {
    %c0 = arith.constant 0 : index
    %c0_0 = arith.constant 0 : index
    %c0_1 = arith.constant 0 : index
    %0 = vector.load %arg1[%c0, %c0_0, %c0_1] : memref<8x32x256xf32, #tpu.memory_space<vmem>>, vector<8x32x256xf32>
    %cst = arith.constant dense<0xFF800000> : vector<8x32xf32>
    %1 = vector.multi_reduction <maximumf>, %0, %cst [2] : vector<8x32x256xf32> to vector<8x32xf32>
    %cst_2 = arith.constant dense<0.000000e+00> : vector<8x32xf32>
    %2 = vector.multi_reduction <add>, %0, %cst_2 [2] : vector<8x32x256xf32> to vector<8x32xf32>
    %cst_3 = arith.constant 3.906250e-03 : f32
    %3 = vector.broadcast %cst_3 : f32 to vector<8x32xf32>
    %4 = arith.mulf %2, %3 : vector<8x32xf32>
    %5 = tpu.concatenate %1, %4 in 0 : vector<8x32xf32>, vector<8x32xf32> -> vector<16x32xf32>
    %c0_4 = arith.constant 0 : index
    %c0_5 = arith.constant 0 : index
    %6 = vector.load %arg2[%c0_4, %c0_5] : memref<32x8xf32, #tpu.memory_space<vmem>>, vector<32x8xf32>
    %cst_6 = arith.constant dense<0.000000e+00> : vector<16x8xf32>
    %7 = tpu.matmul %5, %6, %cst_6 {dimension_numbers = #tpu.dot_dimension_numbers<[1], [0], [0], [1], [0, 0, 1, 1], [], []>, precision = #tpu.contract_precision<fp32>} : vector<16x32xf32>, vector<32x8xf32>, vector<16x8xf32> -> vector<16x8xf32>
    %c0_7 = arith.constant 0 : index
    %c0_8 = arith.constant 0 : index
    %8 = vector.load %arg3[%c0_7, %c0_8] : memref<1x8xf32, #tpu.memory_space<vmem>>, vector<1x8xf32>
    %9 = vector.broadcast %8 : vector<1x8xf32> to vector<16x8xf32>
    %10 = arith.addf %7, %9 : vector<16x8xf32>
    %cst_9 = arith.constant 0.000000e+00 : f32
    %11 = vector.broadcast %cst_9 : f32 to vector<16x8xf32>
    %12 = arith.maximumf %10, %11 : vector<16x8xf32>
    %c0_10 = arith.constant 0 : index
    %c0_11 = arith.constant 0 : index
    %13 = vector.load %arg4[%c0_10, %c0_11] : memref<8x32xf32, #tpu.memory_space<vmem>>, vector<8x32xf32>
    %cst_12 = arith.constant dense<0.000000e+00> : vector<16x32xf32>
    %14 = tpu.matmul %12, %13, %cst_12 {dimension_numbers = #tpu.dot_dimension_numbers<[1], [0], [0], [1], [0, 0, 1, 1], [], []>, precision = #tpu.contract_precision<fp32>} : vector<16x8xf32>, vector<8x32xf32>, vector<16x32xf32> -> vector<16x32xf32>
    %c0_13 = arith.constant 0 : index
    %c0_14 = arith.constant 0 : index
    %15 = vector.load %arg5[%c0_13, %c0_14] : memref<1x32xf32, #tpu.memory_space<vmem>>, vector<1x32xf32>
    %16 = vector.broadcast %15 : vector<1x32xf32> to vector<16x32xf32>
    %17 = arith.addf %14, %16 : vector<16x32xf32>
    %18 = vector.extract_strided_slice %17 {offsets = [0, 0], sizes = [8, 32], strides = [1, 1]} : vector<16x32xf32> to vector<8x32xf32>
    %19 = vector.extract_strided_slice %17 {offsets = [8, 0], sizes = [8, 32], strides = [1, 1]} : vector<16x32xf32> to vector<8x32xf32>
    %20 = arith.addf %18, %19 : vector<8x32xf32>
    %21 = arith.negf %20 : vector<8x32xf32>
    %22 = math.exp %21 : vector<8x32xf32>
    %cst_15 = arith.constant 1.000000e+00 : f32
    %23 = vector.broadcast %cst_15 : f32 to vector<8x32xf32>
    %24 = arith.addf %23, %22 : vector<8x32xf32>
    %25 = arith.divf %23, %24 : vector<8x32xf32>
    %26 = vector.shape_cast %25 : vector<8x32xf32> to vector<8x32x1xf32>
    %27 = vector.broadcast %26 : vector<8x32x1xf32> to vector<8x32x256xf32>
    %28 = arith.mulf %0, %27 : vector<8x32x256xf32>
    %cst_16 = arith.constant dense<0xFF800000> : vector<8x256xf32>
    %29 = vector.multi_reduction <maximumf>, %28, %cst_16 [1] : vector<8x32x256xf32> to vector<8x256xf32>
    %cst_17 = arith.constant dense<0.000000e+00> : vector<8x256xf32>
    %30 = vector.multi_reduction <add>, %28, %cst_17 [1] : vector<8x32x256xf32> to vector<8x256xf32>
    %cst_18 = arith.constant 3.125000e-02 : f32
    %31 = vector.broadcast %cst_18 : f32 to vector<8x256xf32>
    %32 = arith.mulf %30, %31 : vector<8x256xf32>
    %33 = tpu.concatenate %29, %32 in 1 : vector<8x256xf32>, vector<8x256xf32> -> vector<8x512xf32>
    %c0_19 = arith.constant 0 : index
    %c0_20 = arith.constant 0 : index
    %34 = vector.load %arg6[%c0_19, %c0_20] : memref<512x256xf32, #tpu.memory_space<vmem>>, vector<512x256xf32>
    %cst_21 = arith.constant dense<0.000000e+00> : vector<8x256xf32>
    %35 = tpu.matmul %33, %34, %cst_21 {dimension_numbers = #tpu.dot_dimension_numbers<[1], [0], [0], [1], [0, 0, 1, 1], [], []>, precision = #tpu.contract_precision<fp32>} : vector<8x512xf32>, vector<512x256xf32>, vector<8x256xf32> -> vector<8x256xf32>
    %c0_22 = arith.constant 0 : index
    %36 = memref.load %arg7[%c0_22] : memref<1xf32, #tpu.memory_space<smem>>
    %37 = vector.broadcast %36 : f32 to vector<8x256xf32>
    %38 = arith.addf %35, %37 : vector<8x256xf32>
    %39 = arith.negf %38 : vector<8x256xf32>
    %40 = math.exp %39 : vector<8x256xf32>
    %cst_23 = arith.constant 1.000000e+00 : f32
    %41 = vector.broadcast %cst_23 : f32 to vector<8x256xf32>
    %42 = arith.addf %41, %40 : vector<8x256xf32>
    %43 = arith.divf %41, %42 : vector<8x256xf32>
    %44 = vector.shape_cast %43 : vector<8x256xf32> to vector<8x1x256xf32>
    %45 = vector.broadcast %44 : vector<8x1x256xf32> to vector<8x32x256xf32>
    %46 = arith.mulf %28, %45 : vector<8x32x256xf32>
    %c0_24 = arith.constant 0 : index
    %c0_25 = arith.constant 0 : index
    %c0_26 = arith.constant 0 : index
    %47 = vector.load %arg8[%c0_24, %c0_25, %c0_26] : memref<8x32x256xf32, #tpu.memory_space<vmem>>, vector<8x32x256xf32>
    tpu.vector_store %arg8[%c0_24, %c0_25, %c0_26], %46 {strides = array<i32>} : memref<8x32x256xf32, #tpu.memory_space<vmem>>, vector<8x32x256xf32>,
    return
  }
  func.func @transform_0(%arg0: i32) -> (i32, i32, i32) {
    %c0_i32 = arith.constant 0 : i32
    %c0_i32_0 = arith.constant 0 : i32
    %c0_i32_1 = arith.constant 0 : i32
    return %arg0, %c0_i32, %c0_i32_0 : i32, i32, i32
  }
  func.func @transform_1(%arg0: i32) -> (i32, i32) {
    %c0_i32 = arith.constant 0 : i32
    %c0_i32_0 = arith.constant 0 : i32
    %c0_i32_1 = arith.constant 0 : i32
    return %c0_i32, %c0_i32_0 : i32, i32
  }
  func.func @transform_2(%arg0: i32) -> (i32, i32) {
    %c0_i32 = arith.constant 0 : i32
    %c0_i32_0 = arith.constant 0 : i32
    %c0_i32_1 = arith.constant 0 : i32
    return %c0_i32, %c0_i32_0 : i32, i32
  }
  func.func @transform_3(%arg0: i32) -> (i32, i32) {
    %c0_i32 = arith.constant 0 : i32
    %c0_i32_0 = arith.constant 0 : i32
    %c0_i32_1 = arith.constant 0 : i32
    return %c0_i32, %c0_i32_0 : i32, i32
  }
  func.func @transform_4(%arg0: i32) -> (i32, i32) {
    %c0_i32 = arith.constant 0 : i32
    %c0_i32_0 = arith.constant 0 : i32
    %c0_i32_1 = arith.constant 0 : i32
    return %c0_i32, %c0_i32_0 : i32, i32
  }
  func.func @transform_5(%arg0: i32) -> (i32, i32) {
    %c0_i32 = arith.constant 0 : i32
    %c0_i32_0 = arith.constant 0 : i32
    %c0_i32_1 = arith.constant 0 : i32
    return %c0_i32, %c0_i32_0 : i32, i32
  }
  func.func @transform_6(%arg0: i32) -> i32 {
    %c0_i32 = arith.constant 0 : i32
    %c0_i32_0 = arith.constant 0 : i32
    return %c0_i32 : i32
  }
  func.func @transform_7(%arg0: i32) -> (i32, i32, i32) {
    %c0_i32 = arith.constant 0 : i32
    %c0_i32_0 = arith.constant 0 : i32
    %c0_i32_1 = arith.constant 0 : i32
    return %arg0, %c0_i32, %c0_i32_0 : i32, i32, i32
  }
}

</mosaic_0001>

<llo_original>
// kernel: tpu_custom_call.1
$region0: #{tpu_custom_call.1}
  #allocation0 [shape = 'u32[]', space=smem, size = 0x4, offset = 0x4, fixed_abs, tag = 'smem constant byte address 0x4 - core index']
  #allocation1 [shape = 'u32[144,128]{1,0:T(1,128)}', space=vmem, size = 0x12000, scoped, tag = 'internal scratch']
  #allocation2 [shape = 'f32[1]{0:T(128)S(6)}', space=smem, size = 0x200, scoped, tag = 'scoped memory for tpu_custom_call.1']
  %s0 = inlined_call_operand.hbm [shape: f32[8,32,256], index: 0, kind: input, shape index: {}]
  %s1 = inlined_call_operand.vmem [shape: f32[32,8], index: 1, kind: input, shape index: {}]
  %s2 = inlined_call_operand.vmem [shape: f32[1,8], index: 2, kind: input, shape index: {}]
  %s3 = inlined_call_operand.vmem [shape: f32[8,32], index: 3, kind: input, shape index: {}]
  %s4 = inlined_call_operand.vmem [shape: f32[1,32], index: 4, kind: input, shape index: {}]
  %s5 = inlined_call_operand.hbm [shape: f32[512,256], index: 5, kind: input, shape index: {}]
  %s6 = inlined_call_operand.<no memory space> [shape: f32[1], index: 6, kind: input, shape index: {}]
  %s7 = inlined_call_operand.hbm [shape: f32[8,32,256], index: 7, kind: output, shape index: {}]
  %s8 = sld [smem:[#allocation0]]
  $region46: #{tpu_custom_call.1} parent=0
    _
  %s10 = ssub.s32 1, %s8
  %s11 = scalar_select 0, %s10, %s8
  %12 = sst [smem:[#allocation2]] %s6
  $region1: #{tpu_custom_call.1} parent=0
    #allocation3 [shape = 'u8[262144]{0}', space=vmem, size = 0x40000, scoped, tag = 'input window, operand 0, single buffered']
    #allocation4 [shape = 's32[1]{0}', space=sflag, size = 0x4, scoped, tag = 'scoped memory for tpu_custom_call.1']
    #allocation5 [shape = 's32[1]{0}', space=sflag, size = 0x4, scoped, tag = 'scoped memory for tpu_custom_call.1']
    #allocation6 [shape = 'u8[524288]{0}', space=vmem, size = 0x80000, scoped, tag = 'input window, operand 5, single buffered']
    #allocation7 [shape = 's32[1]{0}', space=sflag, size = 0x4, scoped, tag = 'scoped memory for tpu_custom_call.1']
    #allocation8 [shape = 'u8[262144]{0}', space=vmem, size = 0x40000, scoped, tag = 'output window, operand 0, single buffered']
    %13 = vsyncpa [#allocation4], 0
    %14 = vsyncpa [#allocation7], 0
    %15 = vsyncpa [#allocation5], 0
    // Predicated region
    $region2: #{tpu_custom_call.1} parent=1 // pred_check
      _
    $region3: #{tpu_custom_call.1} parent=1 // pred_check_branch
      %17 = sbr.rel (0) target = $region5
    $region4: #{tpu_custom_call.1} parent=1 // pred_region
      %s19 = ssub.s32 8192, 8192
      %20 = vsyncadd [#allocation4], %s19
      %s21 = sshll.u32 [#allocation3], 4
      %s22 = int_to_ptr.vmem [resolvable:$true] %s21
      %27 = dma.hbm_to_vmem [thread:$0]  %s0, 8192, %s22, [#allocation4], 256, 256, 16
    $region5: #{tpu_custom_call.1} parent=1 // pred_fallthru
      _
    // Predicated region
    $region6: #{tpu_custom_call.1} parent=1 // pred_check
      _
    $region7: #{tpu_custom_call.1} parent=1 // pred_check_branch
      %29 = sbr.rel (0) target = $region9
    $region8: #{tpu_custom_call.1} parent=1 // pred_region
      _
    $region9: #{tpu_custom_call.1} parent=1 // pred_fallthru
      _
    // Predicated region
    $region10: #{tpu_custom_call.1} parent=1 // pred_check
      _
    $region11: #{tpu_custom_call.1} parent=1 // pred_check_branch
      %31 = sbr.rel (0) target = $region13
    $region12: #{tpu_custom_call.1} parent=1 // pred_region
      _
    $region13: #{tpu_custom_call.1} parent=1 // pred_fallthru
      _
    // Predicated region
    $region14: #{tpu_custom_call.1} parent=1 // pred_check
      _
    $region15: #{tpu_custom_call.1} parent=1 // pred_check_branch
      %33 = sbr.rel (0) target = $region17
    $region16: #{tpu_custom_call.1} parent=1 // pred_region
      _
    $region17: #{tpu_custom_call.1} parent=1 // pred_fallthru
      _
    // Predicated region
    $region18: #{tpu_custom_call.1} parent=1 // pred_check
      _
    $region19: #{tpu_custom_call.1} parent=1 // pred_check_branch
      %35 = sbr.rel (0) target = $region21
    $region20: #{tpu_custom_call.1} parent=1 // pred_region
      _
    $region21: #{tpu_custom_call.1} parent=1 // pred_fallthru
      _
    // Predicated region
    $region22: #{tpu_custom_call.1} parent=1 // pred_check
      _
    $region23: #{tpu_custom_call.1} parent=1 // pred_check_branch
      %37 = sbr.rel (0) target = $region25
    $region24: #{tpu_custom_call.1} parent=1 // pred_region
      %s39 = ssub.s32 16384, 16384
      %40 = vsyncadd [#allocation7], %s39
      %s41 = sshll.u32 [#allocation6], 4
      %s42 = int_to_ptr.vmem [resolvable:$true] %s41
      %47 = dma.hbm_to_vmem [thread:$0]  %s5, 16384, %s42, [#allocation7], 256, 256, 16
    $region25: #{tpu_custom_call.1} parent=1 // pred_fallthru
      _
    // Predicated region
    $region26: #{tpu_custom_call.1} parent=1 // pred_check
      _
    $region27: #{tpu_custom_call.1} parent=1 // pred_check_branch
      %49 = sbr.rel (0) target = $region29
    $region28: #{tpu_custom_call.1} parent=1 // pred_region
      _
    $region29: #{tpu_custom_call.1} parent=1 // pred_fallthru
      _
    // Predicated region
    $region30: #{tpu_custom_call.1} parent=1 // pred_check
      _
    $region31: #{tpu_custom_call.1} parent=1 // pred_check_branch
      %51 = sbr.rel (0) target = $region33
    $region32: #{tpu_custom_call.1} parent=1 // pred_region
      %52 = dma.done [#allocation4], 8192
    $region33: #{tpu_custom_call.1} parent=1 // pred_fallthru
      _
    // Predicated region
    $region34: #{tpu_custom_call.1} parent=1 // pred_check
      _
    $region35: #{tpu_custom_call.1} parent=1 // pred_check_branch
      %54 = sbr.rel (0) target = $region37
    $region36: #{tpu_custom_call.1} parent=1 // pred_region
      %55 = dma.done [#allocation7], 16384
    $region37: #{tpu_custom_call.1} parent=1 // pred_fallthru
      _
    %v56 = vld [vmem:[#allocation3] sm:$0xff]
    %v57 = vld [vmem:[#allocation3 + $0x8] sm:$0xff]
    %v58 = vld [vmem:[#allocation3 + $0x10] sm:$0xff]
    %v59 = vld [vmem:[#allocation3 + $0x18] sm:$0xff]
    %v60 = vld [vmem:[#allocation3 + $0x20] sm:$0xff]
    %v61 = vld [vmem:[#allocation3 + $0x28] sm:$0xff]
    %v62 = vld [vmem:[#allocation3 + $0x30] sm:$0xff]
    %v63 = vld [vmem:[#allocation3 + $0x38] sm:$0xff]
    %v64 = vld [vmem:[#allocation3 + $0x40] sm:$0xff]
    %v65 = vld [vmem:[#allocation3 + $0x48] sm:$0xff]
    %v66 = vld [vmem:[#allocation3 + $0x50] sm:$0xff]
    %v67 = vld [vmem:[#allocation3 + $0x58] sm:$0xff]
    %v68 = vld [vmem:[#allocation3 + $0x60] sm:$0xff]
    %v69 = vld [vmem:[#allocation3 + $0x68] sm:$0xff]
    %v70 = vld [vmem:[#allocation3 + $0x70] sm:$0xff]
    %v71 = vld [vmem:[#allocation3 + $0x78] sm:$0xff]
    %v72 = vld [vmem:[#allocation3 + $0x80] sm:$0xff]
    %v73 = vld [vmem:[#allocation3 + $0x88] sm:$0xff]
    %v74 = vld [vmem:[#allocation3 + $0x90] sm:$0xff]
    %v75 = vld [vmem:[#allocation3 + $0x98] sm:$0xff]
    %v76 = vld [vmem:[#allocation3 + $0xa0] sm:$0xff]
    %v77 = vld [vmem:[#allocation3 + $0xa8] sm:$0xff]
    %v78 = vld [vmem:[#allocation3 + $0xb0] sm:$0xff]
    %v79 = vld [vmem:[#allocation3 + $0xb8] sm:$0xff]
    %v80 = vld [vmem:[#allocation3 + $0xc0] sm:$0xff]
    %v81 = vld [vmem:[#allocation3 + $0xc8] sm:$0xff]
    %v82 = vld [vmem:[#allocation3 + $0xd0] sm:$0xff]
    %v83 = vld [vmem:[#allocation3 + $0xd8] sm:$0xff]
    %v84 = vld [vmem:[#allocation3 + $0xe0] sm:$0xff]
    %v85 = vld [vmem:[#allocation3 + $0xe8] sm:$0xff]
    %v86 = vld [vmem:[#allocation3 + $0xf0] sm:$0xff]
    %v87 = vld [vmem:[#allocation3 + $0xf8] sm:$0xff]
    %v88 = vld [vmem:[#allocation3 + $0x100] sm:$0xff]
    %v89 = vld [vmem:[#allocation3 + $0x108] sm:$0xff]
    %v90 = vld [vmem:[#allocation3 + $0x110] sm:$0xff]
    %v91 = vld [vmem:[#allocation3 + $0x118] sm:$0xff]
    %v92 = vld [vmem:[#allocation3 + $0x120] sm:$0xff]
    %v93 = vld [vmem:[#allocation3 + $0x128] sm:$0xff]
    %v94 = vld [vmem:[#allocation3 + $0x130] sm:$0xff]
    %v95 = vld [vmem:[#allocation3 + $0x138] sm:$0xff]
    %v96 = vld [vmem:[#allocation3 + $0x140] sm:$0xff]
    %v97 = vld [vmem:[#allocation3 + $0x148] sm:$0xff]
    %v98 = vld [vmem:[#allocation3 + $0x150] sm:$0xff]
    %v99 = vld [vmem:[#allocation3 + $0x158] sm:$0xff]
    %v100 = vld [vmem:[#allocation3 + $0x160] sm:$0xff]
    %v101 = vld [vmem:[#allocation3 + $0x168] sm:$0xff]
    %v102 = vld [vmem:[#allocation3 + $0x170] sm:$0xff]
    %v103 = vld [vmem:[#allocation3 + $0x178] sm:$0xff]
    %v104 = vld [vmem:[#allocation3 + $0x180] sm:$0xff]
    %v105 = vld [vmem:[#allocation3 + $0x188] sm:$0xff]
    %v106 = vld [vmem:[#allocation3 + $0x190] sm:$0xff]
    %v107 = vld [vmem:[#allocation3 + $0x198] sm:$0xff]
    %v108 = vld [vmem:[#allocation3 + $0x1a0] sm:$0xff]
    %v109 = vld [vmem:[#allocation3 + $0x1a8] sm:$0xff]
    %v110 = vld [vmem:[#allocation3 + $0x1b0] sm:$0xff]
    %v111 = vld [vmem:[#allocation3 + $0x1b8] sm:$0xff]
    %v112 = vld [vmem:[#allocation3 + $0x1c0] sm:$0xff]
    %v113 = vld [vmem:[#allocation3 + $0x1c8] sm:$0xff]
    %v114 = vld [vmem:[#allocation3 + $0x1d0] sm:$0xff]
    %v115 = vld [vmem:[#allocation3 + $0x1d8] sm:$0xff]
    %v116 = vld [vmem:[#allocation3 + $0x1e0] sm:$0xff]
    %v117 = vld [vmem:[#allocation3 + $0x1e8] sm:$0xff]
    %v118 = vld [vmem:[#allocation3 + $0x1f0] sm:$0xff]
    %v119 = vld [vmem:[#allocation3 + $0x1f8] sm:$0xff]
    %v120 = vmax.f32 %v56, %v57
    %121 = vmax.xlane.f32.xlu0 %v120
    %v122 = vpop.xlane.xlu0 %121
    %v123 = vmax.f32 %v58, %v59
    %124 = vmax.xlane.f32.xlu0 %v123
    %v125 = vpop.xlane.xlu0 %124
    %v126 = vmax.f32 %v60, %v61
    %127 = vmax.xlane.f32.xlu0 %v126
    %v128 = vpop.xlane.xlu0 %127
    %v129 = vmax.f32 %v62, %v63
    %130 = vmax.xlane.f32.xlu0 %v129
    %v131 = vpop.xlane.xlu0 %130
    %v132 = vmax.f32 %v64, %v65
    %133 = vmax.xlane.f32.xlu0 %v132
    %v134 = vpop.xlane.xlu0 %133
    %v135 = vmax.f32 %v66, %v67
    %136 = vmax.xlane.f32.xlu0 %v135
    %v137 = vpop.xlane.xlu0 %136
    %v138 = vmax.f32 %v68, %v69
    %139 = vmax.xlane.f32.xlu0 %v138
    %v140 = vpop.xlane.xlu0 %139
    %v141 = vmax.f32 %v70, %v71
    %142 = vmax.xlane.f32.xlu0 %v141
    %v143 = vpop.xlane.xlu0 %142
    %v144 = vmax.f32 %v72, %v73
    %145 = vmax.xlane.f32.xlu0 %v144
    %v146 = vpop.xlane.xlu0 %145
    %v147 = vmax.f32 %v74, %v75
    %148 = vmax.xlane.f32.xlu0 %v147
    %v149 = vpop.xlane.xlu0 %148
    %v150 = vmax.f32 %v76, %v77
    %151 = vmax.xlane.f32.xlu0 %v150
    %v152 = vpop.xlane.xlu0 %151
    %v153 = vmax.f32 %v78, %v79
    %154 = vmax.xlane.f32.xlu0 %v153
    %v155 = vpop.xlane.xlu0 %154
    %v156 = vmax.f32 %v80, %v81
    %157 = vmax.xlane.f32.xlu0 %v156
    %v158 = vpop.xlane.xlu0 %157
    %v159 = vmax.f32 %v82, %v83
    %160 = vmax.xlane.f32.xlu0 %v159
    %v161 = vpop.xlane.xlu0 %160
    %v162 = vmax.f32 %v84, %v85
    %163 = vmax.xlane.f32.xlu0 %v162
    %v164 = vpop.xlane.xlu0 %163
    %v165 = vmax.f32 %v86, %v87
    %166 = vmax.xlane.f32.xlu0 %v165
    %v167 = vpop.xlane.xlu0 %166
    %v168 = vmax.f32 %v88, %v89
    %169 = vmax.xlane.f32.xlu0 %v168
    %v170 = vpop.xlane.xlu0 %169
    %v171 = vmax.f32 %v90, %v91
    %172 = vmax.xlane.f32.xlu0 %v171
    %v173 = vpop.xlane.xlu0 %172
    %v174 = vmax.f32 %v92, %v93
    %175 = vmax.xlane.f32.xlu0 %v174
    %v176 = vpop.xlane.xlu0 %175
    %v177 = vmax.f32 %v94, %v95
    %178 = vmax.xlane.f32.xlu0 %v177
    %v179 = vpop.xlane.xlu0 %178
    %v180 = vmax.f32 %v96, %v97
    %181 = vmax.xlane.f32.xlu0 %v180
    %v182 = vpop.xlane.xlu0 %181
    %v183 = vmax.f32 %v98, %v99
    %184 = vmax.xlane.f32.xlu0 %v183
    %v185 = vpop.xlane.xlu0 %184
    %v186 = vmax.f32 %v100, %v101
    %187 = vmax.xlane.f32.xlu0 %v186
    %v188 = vpop.xlane.xlu0 %187
    %v189 = vmax.f32 %v102, %v103
    %190 = vmax.xlane.f32.xlu0 %v189
    %v191 = vpop.xlane.xlu0 %190
    %v192 = vmax.f32 %v104, %v105
    %193 = vmax.xlane.f32.xlu0 %v192
    %v194 = vpop.xlane.xlu0 %193
    %v195 = vmax.f32 %v106, %v107
    %196 = vmax.xlane.f32.xlu0 %v195
    %v197 = vpop.xlane.xlu0 %196
    %v198 = vmax.f32 %v108, %v109
    %199 = vmax.xlane.f32.xlu0 %v198
    %v200 = vpop.xlane.xlu0 %199
    %v201 = vmax.f32 %v110, %v111
    %202 = vmax.xlane.f32.xlu0 %v201
    %v203 = vpop.xlane.xlu0 %202
    %v204 = vmax.f32 %v112, %v113
    %205 = vmax.xlane.f32.xlu0 %v204
    %v206 = vpop.xlane.xlu0 %205
    %v207 = vmax.f32 %v114, %v115
    %208 = vmax.xlane.f32.xlu0 %v207
    %v209 = vpop.xlane.xlu0 %208
    %v210 = vmax.f32 %v116, %v117
    %211 = vmax.xlane.f32.xlu0 %v210
    %v212 = vpop.xlane.xlu0 %211
    %v213 = vmax.f32 %v118, %v119
    %214 = vmax.xlane.f32.xlu0 %v213
    %v215 = vpop.xlane.xlu0 %214
    %v216 = vadd.f32 %v56, %v57
    %217 = vadd.xlane.f32.xlu0 %v216
    %v218 = vpop.xlane.xlu0 %217
    %v219 = vadd.f32 %v58, %v59
    %220 = vadd.xlane.f32.xlu0 %v219
    %v221 = vpop.xlane.xlu0 %220
    %v222 = vadd.f32 %v60, %v61
    %223 = vadd.xlane.f32.xlu0 %v222
    %v224 = vpop.xlane.xlu0 %223
    %v225 = vadd.f32 %v62, %v63
    %226 = vadd.xlane.f32.xlu0 %v225
    %v227 = vpop.xlane.xlu0 %226
    %v228 = vadd.f32 %v64, %v65
    %229 = vadd.xlane.f32.xlu0 %v228
    %v230 = vpop.xlane.xlu0 %229
    %v231 = vadd.f32 %v66, %v67
    %232 = vadd.xlane.f32.xlu0 %v231
    %v233 = vpop.xlane.xlu0 %232
    %v234 = vadd.f32 %v68, %v69
    %235 = vadd.xlane.f32.xlu0 %v234
    %v236 = vpop.xlane.xlu0 %235
    %v237 = vadd.f32 %v70, %v71
    %238 = vadd.xlane.f32.xlu0 %v237
    %v239 = vpop.xlane.xlu0 %238
    %v240 = vadd.f32 %v72, %v73
    %241 = vadd.xlane.f32.xlu0 %v240
    %v242 = vpop.xlane.xlu0 %241
    %v243 = vadd.f32 %v74, %v75
    %244 = vadd.xlane.f32.xlu0 %v243
    %v245 = vpop.xlane.xlu0 %244
    %v246 = vadd.f32 %v76, %v77
    %247 = vadd.xlane.f32.xlu0 %v246
    %v248 = vpop.xlane.xlu0 %247
    %v249 = vadd.f32 %v78, %v79
    %250 = vadd.xlane.f32.xlu0 %v249
    %v251 = vpop.xlane.xlu0 %250
    %v252 = vadd.f32 %v80, %v81
    %253 = vadd.xlane.f32.xlu0 %v252
    %v254 = vpop.xlane.xlu0 %253
    %v255 = vadd.f32 %v82, %v83
    %256 = vadd.xlane.f32.xlu0 %v255
    %v257 = vpop.xlane.xlu0 %256
    %v258 = vadd.f32 %v84, %v85
    %259 = vadd.xlane.f32.xlu0 %v258
    %v260 = vpop.xlane.xlu0 %259
    %v261 = vadd.f32 %v86, %v87
    %262 = vadd.xlane.f32.xlu0 %v261
    %v263 = vpop.xlane.xlu0 %262
    %v264 = vadd.f32 %v88, %v89
    %265 = vadd.xlane.f32.xlu0 %v264
    %v266 = vpop.xlane.xlu0 %265
    %v267 = vadd.f32 %v90, %v91
    %268 = vadd.xlane.f32.xlu0 %v267
    %v269 = vpop.xlane.xlu0 %268
    %v270 = vadd.f32 %v92, %v93
    %271 = vadd.xlane.f32.xlu0 %v270
    %v272 = vpop.xlane.xlu0 %271
    %v273 = vadd.f32 %v94, %v95
    %274 = vadd.xlane.f32.xlu0 %v273
    %v275 = vpop.xlane.xlu0 %274
    %v276 = vadd.f32 %v96, %v97
    %277 = vadd.xlane.f32.xlu0 %v276
    %v278 = vpop.xlane.xlu0 %277
    %v279 = vadd.f32 %v98, %v99
    %280 = vadd.xlane.f32.xlu0 %v279
    %v281 = vpop.xlane.xlu0 %280
    %v282 = vadd.f32 %v100, %v101
    %283 = vadd.xlane.f32.xlu0 %v282
    %v284 = vpop.xlane.xlu0 %283
    %v285 = vadd.f32 %v102, %v103
    %286 = vadd.xlane.f32.xlu0 %v285
    %v287 = vpop.xlane.xlu0 %286
    %v288 = vadd.f32 %v104, %v105
    %289 = vadd.xlane.f32.xlu0 %v288
    %v290 = vpop.xlane.xlu0 %289
    %v291 = vadd.f32 %v106, %v107
    %292 = vadd.xlane.f32.xlu0 %v291
    %v293 = vpop.xlane.xlu0 %292
    %v294 = vadd.f32 %v108, %v109
    %295 = vadd.xlane.f32.xlu0 %v294
    %v296 = vpop.xlane.xlu0 %295
    %v297 = vadd.f32 %v110, %v111
    %298 = vadd.xlane.f32.xlu0 %v297
    %v299 = vpop.xlane.xlu0 %298
    %v300 = vadd.f32 %v112, %v113
    %301 = vadd.xlane.f32.xlu0 %v300
    %v302 = vpop.xlane.xlu0 %301
    %v303 = vadd.f32 %v114, %v115
    %304 = vadd.xlane.f32.xlu0 %v303
    %v305 = vpop.xlane.xlu0 %304
    %v306 = vadd.f32 %v116, %v117
    %307 = vadd.xlane.f32.xlu0 %v306
    %v308 = vpop.xlane.xlu0 %307
    %v309 = vadd.f32 %v118, %v119
    %310 = vadd.xlane.f32.xlu0 %v309
    %v311 = vpop.xlane.xlu0 %310
    %v312 = vmul.f32 %v218, 0.00390625
    %v313 = vmul.f32 %v221, 0.00390625
    %v314 = vmul.f32 %v224, 0.00390625
    %v315 = vmul.f32 %v227, 0.00390625
    %v316 = vmul.f32 %v230, 0.00390625
    %v317 = vmul.f32 %v233, 0.00390625
    %v318 = vmul.f32 %v236, 0.00390625
    %v319 = vmul.f32 %v239, 0.00390625
    %v320 = vmul.f32 %v242, 0.00390625
    %v321 = vmul.f32 %v245, 0.00390625
    %v322 = vmul.f32 %v248, 0.00390625
    %v323 = vmul.f32 %v251, 0.00390625
    %v324 = vmul.f32 %v254, 0.00390625
    %v325 = vmul.f32 %v257, 0.00390625
    %v326 = vmul.f32 %v260, 0.00390625
    %v327 = vmul.f32 %v263, 0.00390625
    %v328 = vmul.f32 %v266, 0.00390625
    %v329 = vmul.f32 %v269, 0.00390625
    %v330 = vmul.f32 %v272, 0.00390625
    %v331 = vmul.f32 %v275, 0.00390625
    %v332 = vmul.f32 %v278, 0.00390625
    %v333 = vmul.f32 %v281, 0.00390625
    %v334 = vmul.f32 %v284, 0.00390625
    %v335 = vmul.f32 %v287, 0.00390625
    %v336 = vmul.f32 %v290, 0.00390625
    %v337 = vmul.f32 %v293, 0.00390625
    %v338 = vmul.f32 %v296, 0.00390625
    %v339 = vmul.f32 %v299, 0.00390625
    %v340 = vmul.f32 %v302, 0.00390625
    %v341 = vmul.f32 %v305, 0.00390625
    %v342 = vmul.f32 %v308, 0.00390625
    %v343 = vmul.f32 %v311, 0.00390625
    %v376 = vlaneseq
    %v377 = vand.u32 %v376, 127
    %v378 = vlaneseq
    %v379 = vshrl.u32 %v378, 7
    %v380 = vsub.s32 %v377, %v379
    %v381 = vrot.slane %v122, %v380
    %v382 = vadd.s32 %v377, 4294967288
    %v383 = vlaneseq
    %v384 = vshrl.u32 %v383, 7
    %v385 = vsub.s32 %v382, %v384
    %v386 = vrot.slane %v125, %v385
    %vm387 = vcmask 130112
    %v388 = vsel %vm387, %v386, %v381
    %v389 = vadd.s32 %v377, 4294967280
    %v390 = vlaneseq
    %v391 = vshrl.u32 %v390, 7
    %v392 = vsub.s32 %v389, %v391
    %v393 = vrot.slane %v128, %v392
    %vm394 = vcmask 195712
    %v395 = vsel %vm394, %v393, %v388
    %v396 = vadd.s32 %v377, 4294967272
    %v397 = vlaneseq
    %v398 = vshrl.u32 %v397, 7
    %v399 = vsub.s32 %v396, %v398
    %v400 = vrot.slane %v131, %v399
    %vm401 = vcmask 261312
    %v402 = vsel %vm401, %v400, %v395
    %v403 = vlaneseq
    %v404 = vshrl.u32 %v403, 7
    %v405 = vsub.s32 %v377, %v404
    %v406 = vrot.slane %v134, %v405
    %v407 = vlaneseq
    %v408 = vshrl.u32 %v407, 7
    %v409 = vsub.s32 %v382, %v408
    %v410 = vrot.slane %v137, %v409
    %v411 = vsel %vm387, %v410, %v406
    %v412 = vlaneseq
    %v413 = vshrl.u32 %v412, 7
    %v414 = vsub.s32 %v389, %v413
    %v415 = vrot.slane %v140, %v414
    %v416 = vsel %vm394, %v415, %v411
    %v417 = vlaneseq
    %v418 = vshrl.u32 %v417, 7
    %v419 = vsub.s32 %v396, %v418
    %v420 = vrot.slane %v143, %v419
    %v421 = vsel %vm401, %v420, %v416
    %v422 = vlaneseq
    %v423 = vshrl.u32 %v422, 7
    %v424 = vsub.s32 %v377, %v423
    %v425 = vrot.slane %v146, %v424
    %v426 = vlaneseq
    %v427 = vshrl.u32 %v426, 7
    %v428 = vsub.s32 %v382, %v427
    %v429 = vrot.slane %v149, %v428
    %v430 = vsel %vm387, %v429, %v425
    %v431 = vlaneseq
    %v432 = vshrl.u32 %v431, 7
    %v433 = vsub.s32 %v389, %v432
    %v434 = vrot.slane %v152, %v433
    %v435 = vsel %vm394, %v434, %v430
    %v436 = vlaneseq
    %v437 = vshrl.u32 %v436, 7
    %v438 = vsub.s32 %v396, %v437
    %v439 = vrot.slane %v155, %v438
    %v440 = vsel %vm401, %v439, %v435
    %v441 = vlaneseq
    %v442 = vshrl.u32 %v441, 7
    %v443 = vsub.s32 %v377, %v442
    %v444 = vrot.slane %v158, %v443
    %v445 = vlaneseq
    %v446 = vshrl.u32 %v445, 7
    %v447 = vsub.s32 %v382, %v446
    %v448 = vrot.slane %v161, %v447
    %v449 = vsel %vm387, %v448, %v444
    %v450 = vlaneseq
    %v451 = vshrl.u32 %v450, 7
    %v452 = vsub.s32 %v389, %v451
    %v453 = vrot.slane %v164, %v452
    %v454 = vsel %vm394, %v453, %v449
    %v455 = vlaneseq
    %v456 = vshrl.u32 %v455, 7
    %v457 = vsub.s32 %v396, %v456
    %v458 = vrot.slane %v167, %v457
    %v459 = vsel %vm401, %v458, %v454
    %v460 = vlaneseq
    %v461 = vshrl.u32 %v460, 7
    %v462 = vsub.s32 %v377, %v461
    %v463 = vrot.slane %v170, %v462
    %v464 = vlaneseq
    %v465 = vshrl.u32 %v464, 7
    %v466 = vsub.s32 %v382, %v465
    %v467 = vrot.slane %v173, %v466
    %v468 = vsel %vm387, %v467, %v463
    %v469 = vlaneseq
    %v470 = vshrl.u32 %v469, 7
    %v471 = vsub.s32 %v389, %v470
    %v472 = vrot.slane %v176, %v471
    %v473 = vsel %vm394, %v472, %v468
    %v474 = vlaneseq
    %v475 = vshrl.u32 %v474, 7
    %v476 = vsub.s32 %v396, %v475
    %v477 = vrot.slane %v179, %v476
    %v478 = vsel %vm401, %v477, %v473
    %v479 = vlaneseq
    %v480 = vshrl.u32 %v479, 7
    %v481 = vsub.s32 %v377, %v480
    %v482 = vrot.slane %v182, %v481
    %v483 = vlaneseq
    %v484 = vshrl.u32 %v483, 7
    %v485 = vsub.s32 %v382, %v484
    %v486 = vrot.slane %v185, %v485
    %v487 = vsel %vm387, %v486, %v482
    %v488 = vlaneseq
    %v489 = vshrl.u32 %v488, 7
    %v490 = vsub.s32 %v389, %v489
    %v491 = vrot.slane %v188, %v490
    %v492 = vsel %vm394, %v491, %v487
    %v493 = vlaneseq
    %v494 = vshrl.u32 %v493, 7
    %v495 = vsub.s32 %v396, %v494
    %v496 = vrot.slane %v191, %v495
    %v497 = vsel %vm401, %v496, %v492
    %v498 = vlaneseq
    %v499 = vshrl.u32 %v498, 7
    %v500 = vsub.s32 %v377, %v499
    %v501 = vrot.slane %v194, %v500
    %v502 = vlaneseq
    %v503 = vshrl.u32 %v502, 7
    %v504 = vsub.s32 %v382, %v503
    %v505 = vrot.slane %v197, %v504
    %v506 = vsel %vm387, %v505, %v501
    %v507 = vlaneseq
    %v508 = vshrl.u32 %v507, 7
    %v509 = vsub.s32 %v389, %v508
    %v510 = vrot.slane %v200, %v509
    %v511 = vsel %vm394, %v510, %v506
    %v512 = vlaneseq
    %v513 = vshrl.u32 %v512, 7
    %v514 = vsub.s32 %v396, %v513
    %v515 = vrot.slane %v203, %v514
    %v516 = vsel %vm401, %v515, %v511
    %v517 = vlaneseq
    %v518 = vshrl.u32 %v517, 7
    %v519 = vsub.s32 %v377, %v518
    %v520 = vrot.slane %v206, %v519
    %v521 = vlaneseq
    %v522 = vshrl.u32 %v521, 7
    %v523 = vsub.s32 %v382, %v522
    %v524 = vrot.slane %v209, %v523
    %v525 = vsel %vm387, %v524, %v520
    %v526 = vlaneseq
    %v527 = vshrl.u32 %v526, 7
    %v528 = vsub.s32 %v389, %v527
    %v529 = vrot.slane %v212, %v528
    %v530 = vsel %vm394, %v529, %v525
    %v531 = vlaneseq
    %v532 = vshrl.u32 %v531, 7
    %v533 = vsub.s32 %v396, %v532
    %v534 = vrot.slane %v215, %v533
    %v535 = vsel %vm401, %v534, %v530
    %vm536 = vcmask 1041409
    %v537 = vsel %vm536, %v421, %v402
    %vm538 = vcmask 1042434
    %v539 = vsel %vm538, %v440, %v537
    %vm540 = vcmask 1043459
    %v541 = vsel %vm540, %v459, %v539
    %vm542 = vcmask 1044484
    %v543 = vsel %vm542, %v478, %v541
    %vm544 = vcmask 1045509
    %v545 = vsel %vm544, %v497, %v543
    %vm546 = vcmask 1046534
    %v547 = vsel %vm546, %v516, %v545
    %vm548 = vcmask 1047559
    %v549 = vsel %vm548, %v535, %v547
    %v582 = vlaneseq
    %v583 = vshrl.u32 %v582, 7
    %v584 = vsub.s32 %v377, %v583
    %v585 = vrot.slane %v312, %v584
    %v586 = vlaneseq
    %v587 = vshrl.u32 %v586, 7
    %v588 = vsub.s32 %v382, %v587
    %v589 = vrot.slane %v313, %v588
    %v590 = vsel %vm387, %v589, %v585
    %v591 = vlaneseq
    %v592 = vshrl.u32 %v591, 7
    %v593 = vsub.s32 %v389, %v592
    %v594 = vrot.slane %v314, %v593
    %v595 = vsel %vm394, %v594, %v590
    %v596 = vlaneseq
    %v597 = vshrl.u32 %v596, 7
    %v598 = vsub.s32 %v396, %v597
    %v599 = vrot.slane %v315, %v598
    %v600 = vsel %vm401, %v599, %v595
    %v601 = vlaneseq
    %v602 = vshrl.u32 %v601, 7
    %v603 = vsub.s32 %v377, %v602
    %v604 = vrot.slane %v316, %v603
    %v605 = vlaneseq
    %v606 = vshrl.u32 %v605, 7
    %v607 = vsub.s32 %v382, %v606
    %v608 = vrot.slane %v317, %v607
    %v609 = vsel %vm387, %v608, %v604
    %v610 = vlaneseq
    %v611 = vshrl.u32 %v610, 7
    %v612 = vsub.s32 %v389, %v611
    %v613 = vrot.slane %v318, %v612
    %v614 = vsel %vm394, %v613, %v609
    %v615 = vlaneseq
    %v616 = vshrl.u32 %v615, 7
    %v617 = vsub.s32 %v396, %v616
    %v618 = vrot.slane %v319, %v617
    %v619 = vsel %vm401, %v618, %v614
    %v620 = vlaneseq
    %v621 = vshrl.u32 %v620, 7
    %v622 = vsub.s32 %v377, %v621
    %v623 = vrot.slane %v320, %v622
    %v624 = vlaneseq
    %v625 = vshrl.u32 %v624, 7
    %v626 = vsub.s32 %v382, %v625
    %v627 = vrot.slane %v321, %v626
    %v628 = vsel %vm387, %v627, %v623
    %v629 = vlaneseq
    %v630 = vshrl.u32 %v629, 7
    %v631 = vsub.s32 %v389, %v630
    %v632 = vrot.slane %v322, %v631
    %v633 = vsel %vm394, %v632, %v628
    %v634 = vlaneseq
    %v635 = vshrl.u32 %v634, 7
    %v636 = vsub.s32 %v396, %v635
    %v637 = vrot.slane %v323, %v636
    %v638 = vsel %vm401, %v637, %v633
    %v639 = vlaneseq
    %v640 = vshrl.u32 %v639, 7
    %v641 = vsub.s32 %v377, %v640
    %v642 = vrot.slane %v324, %v641
    %v643 = vlaneseq
    %v644 = vshrl.u32 %v643, 7
    %v645 = vsub.s32 %v382, %v644
    %v646 = vrot.slane %v325, %v645
    %v647 = vsel %vm387, %v646, %v642
    %v648 = vlaneseq
    %v649 = vshrl.u32 %v648, 7
    %v650 = vsub.s32 %v389, %v649
    %v651 = vrot.slane %v326, %v650
    %v652 = vsel %vm394, %v651, %v647
    %v653 = vlaneseq
    %v654 = vshrl.u32 %v653, 7
    %v655 = vsub.s32 %v396, %v654
    %v656 = vrot.slane %v327, %v655
    %v657 = vsel %vm401, %v656, %v652
    %v658 = vlaneseq
    %v659 = vshrl.u32 %v658, 7
    %v660 = vsub.s32 %v377, %v659
    %v661 = vrot.slane %v328, %v660
    %v662 = vlaneseq
    %v663 = vshrl.u32 %v662, 7
    %v664 = vsub.s32 %v382, %v663
    %v665 = vrot.slane %v329, %v664
    %v666 = vsel %vm387, %v665, %v661
    %v667 = vlaneseq
    %v668 = vshrl.u32 %v667, 7
    %v669 = vsub.s32 %v389, %v668
    %v670 = vrot.slane %v330, %v669
    %v671 = vsel %vm394, %v670, %v666
    %v672 = vlaneseq
    %v673 = vshrl.u32 %v672, 7
    %v674 = vsub.s32 %v396, %v673
    %v675 = vrot.slane %v331, %v674
    %v676 = vsel %vm401, %v675, %v671
    %v677 = vlaneseq
    %v678 = vshrl.u32 %v677, 7
    %v679 = vsub.s32 %v377, %v678
    %v680 = vrot.slane %v332, %v679
    %v681 = vlaneseq
    %v682 = vshrl.u32 %v681, 7
    %v683 = vsub.s32 %v382, %v682
    %v684 = vrot.slane %v333, %v683
    %v685 = vsel %vm387, %v684, %v680
    %v686 = vlaneseq
    %v687 = vshrl.u32 %v686, 7
    %v688 = vsub.s32 %v389, %v687
    %v689 = vrot.slane %v334, %v688
    %v690 = vsel %vm394, %v689, %v685
    %v691 = vlaneseq
    %v692 = vshrl.u32 %v691, 7
    %v693 = vsub.s32 %v396, %v692
    %v694 = vrot.slane %v335, %v693
    %v695 = vsel %vm401, %v694, %v690
    %v696 = vlaneseq
    %v697 = vshrl.u32 %v696, 7
    %v698 = vsub.s32 %v377, %v697
    %v699 = vrot.slane %v336, %v698
    %v700 = vlaneseq
    %v701 = vshrl.u32 %v700, 7
    %v702 = vsub.s32 %v382, %v701
    %v703 = vrot.slane %v337, %v702
    %v704 = vsel %vm387, %v703, %v699
    %v705 = vlaneseq
    %v706 = vshrl.u32 %v705, 7
    %v707 = vsub.s32 %v389, %v706
    %v708 = vrot.slane %v338, %v707
    %v709 = vsel %vm394, %v708, %v704
    %v710 = vlaneseq
    %v711 = vshrl.u32 %v710, 7
    %v712 = vsub.s32 %v396, %v711
    %v713 = vrot.slane %v339, %v712
    %v714 = vsel %vm401, %v713, %v709
    %v715 = vlaneseq
    %v716 = vshrl.u32 %v715, 7
    %v717 = vsub.s32 %v377, %v716
    %v718 = vrot.slane %v340, %v717
    %v719 = vlaneseq
    %v720 = vshrl.u32 %v719, 7
    %v721 = vsub.s32 %v382, %v720
    %v722 = vrot.slane %v341, %v721
    %v723 = vsel %vm387, %v722, %v718
    %v724 = vlaneseq
    %v725 = vshrl.u32 %v724, 7
    %v726 = vsub.s32 %v389, %v725
    %v727 = vrot.slane %v342, %v726
    %v728 = vsel %vm394, %v727, %v723
    %v729 = vlaneseq
    %v730 = vshrl.u32 %v729, 7
    %v731 = vsub.s32 %v396, %v730
    %v732 = vrot.slane %v343, %v731
    %v733 = vsel %vm401, %v732, %v728
    %v734 = vsel %vm536, %v619, %v600
    %v735 = vsel %vm538, %v638, %v734
    %v736 = vsel %vm540, %v657, %v735
    %v737 = vsel %vm542, %v676, %v736
    %v738 = vsel %vm544, %v695, %v737
    %v739 = vsel %vm546, %v714, %v738
    %v740 = vsel %vm548, %v733, %v739
    %v741 = vld [vmem:[%s1] sm:$0xff]
    %v742 = vld [vmem:[%s1 + $0x8] sm:$0xff]
    %v743 = vld [vmem:[%s1 + $0x10] sm:$0xff]
    %v744 = vld [vmem:[%s1 + $0x18] sm:$0xff]
    %v745 = vld [vmem:[%s2] sm:$0x1]
    %v747 = vlaneseq
    %v748 = vshrl.u32 %v747, 7
    %v749 = vsub.s32 0, %v748
    %v750 = vrot.slane %v745, %v749
    %vm752 = vcmask 261120
    %v753 = vsel %vm752, %v549, 0
    %v755 = vsel %vm752, %v740, 0
    %757 = vmatprep.subr.mxu0 0.0
    %v758 = vand.u32 %v741, 4294901760
    %759 = vmatpush1.msra.mxu0 %v758
    %760 = vmatprep.subr.mxu0 0.0
    %v761 = vand.u32 %v742, 4294901760
    %762 = vmatpush1.msra.mxu0 %v761
    %763 = vmatprep.subr.mxu0 0.0
    %v764 = vand.u32 %v743, 4294901760
    %765 = vmatpush1.msra.mxu0 %v764
    %766 = vmatprep.subr.mxu0 0.0
    %v767 = vand.u32 %v744, 4294901760
    %768 = vmatpush1.msra.mxu0 %v767
    %769 = vmatprep.subr.mxu0 0.0
    %770 = vmatpush1.msra.mxu0 0.0
    %771 = vmatprep.subr.mxu0 0.0
    %772 = vmatpush1.msra.mxu0 0.0
    %773 = vmatprep.subr.mxu0 0.0
    %774 = vmatpush1.msra.mxu0 0.0
    %775 = vmatprep.subr.mxu0 0.0
    %776 = vmatpush1.msra.mxu0 0.0
    %777 = vmatprep.subr.mxu0 0.0
    %778 = vmatpush1.msra.mxu0 0.0
    %779 = vmatprep.subr.mxu0 0.0
    %780 = vmatpush1.msra.mxu0 0.0
    %781 = vmatprep.subr.mxu0 0.0
    %782 = vmatpush1.msra.mxu0 0.0
    %783 = vmatprep.subr.mxu0 0.0
    %784 = vmatpush1.msra.mxu0 0.0
    %785 = vmatprep.subr.mxu0 0.0
    %786 = vmatpush1.msra.mxu0 0.0
    %787 = vmatprep.subr.mxu0 0.0
    %788 = vmatpush1.msra.mxu0 0.0
    %789 = vmatprep.subr.mxu0 0.0
    %790 = vmatpush1.msra.mxu0 0.0
    %791 = vmatprep.subr.mxu0 0.0
    %792 = vmatpush1.msra.mxu0 0.0
    %793 = vmatprep.subr.mxu0 0.0
    %794 = vmatpush1.msra.mxu0 0.0
    %795 = vmatprep.subr.mxu0 0.0
    %796 = vmatpush1.msra.mxu0 0.0
    %797 = vmatprep.subr.mxu0 0.0
    %798 = vmatpush1.msra.mxu0 0.0
    %799 = vmatprep.subr.mxu0 0.0
    %800 = vmatpush1.msra.mxu0 0.0
    %801 = vmatprep.subr.mxu0 0.0
    %802 = vmatpush1.msra.mxu0 0.0
    %803 = vmatprep.subr.mxu0 0.0
    %804 = vmatpush1.msra.mxu0 0.0
    %805 = vmatprep.subr.mxu0 0.0
    %806 = vmatpush1.msra.mxu0 0.0
    %807 = vmatprep.subr.mxu0 0.0
    %808 = vmatpush1.msra.mxu0 0.0
    %809 = vmatprep.subr.mxu0 0.0
    %810 = vmatpush1.msra.mxu0 0.0
    %811 = vmatprep.subr.mxu0 0.0
    %812 = vmatpush1.msra.mxu0 0.0
    %813 = vmatprep.subr.mxu0 0.0
    %814 = vmatpush1.msra.mxu0 0.0
    %815 = vmatprep.subr.mxu0 0.0
    %816 = vmatpush1.msra.mxu0 0.0
    %817 = vmatprep.subr.mxu0 0.0
    %818 = vmatpush1.msra.mxu0 0.0
    %819 = vmatprep.subr.mxu0 0.0
    %820 = vmatpush1.msra.mxu0 0.0
    %821 = vmatprep.subr.mxu0 0.0
    %822 = vmatpush1.msra.mxu0 0.0
    %823 = vmatprep.subr.mxu0 0.0
    %824 = vmatpush1.msra.mxu0 0.0
    %825 = vmatprep.mubr.f32.mxu0 0.0
    %v826 = vand.u32 %v753, 4294901760
    %v827 = vsub.f32 %v753, %v826
    %v828 = vand.u32 %v827, 4294901760
    %v829 = vsub.f32 %v827, %v828
    %v830 = vand.u32 %v829, 4294901760
    %831 = vmatmul.mubr.f32.gmra.mrb[0].mxu0 %v830
    %v832 = vpop.f32.mrb[0].mxu0
    %v833 = vadd.f32 %v750, %v832
    %v834 = vpop.f32.mrb[0].mxu0
    %835 = vmatprep.mubr.f32.mxu0 0.0
    %v836 = vand.u32 %v755, 4294901760
    %v837 = vsub.f32 %v755, %v836
    %v838 = vand.u32 %v837, 4294901760
    %v839 = vsub.f32 %v837, %v838
    %v840 = vand.u32 %v839, 4294901760
    %841 = vmatmul.mubr.f32.gmra.mrb[0].mxu0 %v840
    %v842 = vpop.f32.mrb[0].mxu0
    %v843 = vadd.f32 %v750, %v842
    %v844 = vpop.f32.mrb[0].mxu0
    %845 = vdwg.mxu0
    %846 = vmatprep.subr.mxu0 0.0
    %v847 = vand.u32 %v741, 4294901760
    %v848 = vsub.f32 %v741, %v847
    %v849 = vand.u32 %v848, 4294901760
    %v850 = vsub.f32 %v848, %v849
    %v851 = vand.u32 %v850, 4294901760
    %852 = vmatpush1.msra.mxu0 %v851
    %853 = vmatprep.subr.mxu0 0.0
    %v854 = vand.u32 %v742, 4294901760
    %v855 = vsub.f32 %v742, %v854
    %v856 = vand.u32 %v855, 4294901760
    %v857 = vsub.f32 %v855, %v856
    %v858 = vand.u32 %v857, 4294901760
    %859 = vmatpush1.msra.mxu0 %v858
    %860 = vmatprep.subr.mxu0 0.0
    %v861 = vand.u32 %v743, 4294901760
    %v862 = vsub.f32 %v743, %v861
    %v863 = vand.u32 %v862, 4294901760
    %v864 = vsub.f32 %v862, %v863
    %v865 = vand.u32 %v864, 4294901760
    %866 = vmatpush1.msra.mxu0 %v865
    %867 = vmatprep.subr.mxu0 0.0
    %v868 = vand.u32 %v744, 4294901760
    %v869 = vsub.f32 %v744, %v868
    %v870 = vand.u32 %v869, 4294901760
    %v871 = vsub.f32 %v869, %v870
    %v872 = vand.u32 %v871, 4294901760
    %873 = vmatpush1.msra.mxu0 %v872
    %874 = vmatprep.subr.mxu0 0.0
    %875 = vmatpush1.msra.mxu0 0.0
    %876 = vmatprep.subr.mxu0 0.0
    %877 = vmatpush1.msra.mxu0 0.0
    %878 = vmatprep.subr.mxu0 0.0
    %879 = vmatpush1.msra.mxu0 0.0
    %880 = vmatprep.subr.mxu0 0.0
    %881 = vmatpush1.msra.mxu0 0.0
    %882 = vmatprep.subr.mxu0 0.0
    %883 = vmatpush1.msra.mxu0 0.0
    %884 = vmatprep.subr.mxu0 0.0
    %885 = vmatpush1.msra.mxu0 0.0
    %886 = vmatprep.subr.mxu0 0.0
    %887 = vmatpush1.msra.mxu0 0.0
    %888 = vmatprep.subr.mxu0 0.0
    %889 = vmatpush1.msra.mxu0 0.0
    %890 = vmatprep.subr.mxu0 0.0
    %891 = vmatpush1.msra.mxu0 0.0
    %892 = vmatprep.subr.mxu0 0.0
    %893 = vmatpush1.msra.mxu0 0.0
    %894 = vmatprep.subr.mxu0 0.0
    %895 = vmatpush1.msra.mxu0 0.0
    %896 = vmatprep.subr.mxu0 0.0
    %897 = vmatpush1.msra.mxu0 0.0
    %898 = vmatprep.subr.mxu0 0.0
    %899 = vmatpush1.msra.mxu0 0.0
    %900 = vmatprep.subr.mxu0 0.0
    %901 = vmatpush1.msra.mxu0 0.0
    %902 = vmatprep.subr.mxu0 0.0
    %903 = vmatpush1.msra.mxu0 0.0
    %904 = vmatprep.subr.mxu0 0.0
    %905 = vmatpush1.msra.mxu0 0.0
    %906 = vmatprep.subr.mxu0 0.0
    %907 = vmatpush1.msra.mxu0 0.0
    %908 = vmatprep.subr.mxu0 0.0
    %909 = vmatpush1.msra.mxu0 0.0
    %910 = vmatprep.subr.mxu0 0.0
    %911 = vmatpush1.msra.mxu0 0.0
    %912 = vmatprep.subr.mxu0 0.0
    %913 = vmatpush1.msra.mxu0 0.0
    %914 = vmatprep.subr.mxu0 0.0
    %915 = vmatpush1.msra.mxu0 0.0
    %916 = vmatprep.subr.mxu0 0.0
    %917 = vmatpush1.msra.mxu0 0.0
    %918 = vmatprep.subr.mxu0 0.0
    %919 = vmatpush1.msra.mxu0 0.0
    %920 = vmatprep.subr.mxu0 0.0
    %921 = vmatpush1.msra.mxu0 0.0
    %922 = vmatprep.subr.mxu0 0.0
    %923 = vmatpush1.msra.mxu0 0.0
    %924 = vmatprep.subr.mxu0 0.0
    %925 = vmatpush1.msra.mxu0 0.0
    %926 = vmatprep.subr.mxu0 0.0
    %927 = vmatpush1.msra.mxu0 0.0
    %928 = vmatprep.subr.mxu0 0.0
    %929 = vmatpush1.msra.mxu0 0.0
    %930 = vmatprep.mubr.f32.mxu0 0.0
    %v931 = vand.u32 %v753, 4294901760
    %932 = vmatmul.mubr.f32.gmra.mrb[0].mxu0 %v931
    %v933 = vpop.f32.mrb[0].mxu0
    %v934 = vadd.f32 %v833, %v933
    %v935 = vpop.f32.mrb[0].mxu0
    %936 = vmatprep.mubr.f32.mxu0 0.0
    %v937 = vand.u32 %v755, 4294901760
    %938 = vmatmul.mubr.f32.gmra.mrb[0].mxu0 %v937
    %v939 = vpop.f32.mrb[0].mxu0
    %v940 = vadd.f32 %v843, %v939
    %v941 = vpop.f32.mrb[0].mxu0
    %942 = vdwg.mxu0
    %943 = vmatprep.subr.mxu0 0.0
    %v944 = vand.u32 %v741, 4294901760
    %v945 = vsub.f32 %v741, %v944
    %946 = vmatpush1.msra.mxu0 %v945
    %947 = vmatprep.subr.mxu0 0.0
    %v948 = vand.u32 %v742, 4294901760
    %v949 = vsub.f32 %v742, %v948
    %950 = vmatpush1.msra.mxu0 %v949
    %951 = vmatprep.subr.mxu0 0.0
    %v952 = vand.u32 %v743, 4294901760
    %v953 = vsub.f32 %v743, %v952
    %954 = vmatpush1.msra.mxu0 %v953
    %955 = vmatprep.subr.mxu0 0.0
    %v956 = vand.u32 %v744, 4294901760
    %v957 = vsub.f32 %v744, %v956
    %958 = vmatpush1.msra.mxu0 %v957
    %959 = vmatprep.subr.mxu0 0.0
    %960 = vmatpush1.msra.mxu0 0.0
    %961 = vmatprep.subr.mxu0 0.0
    %962 = vmatpush1.msra.mxu0 0.0
    %963 = vmatprep.subr.mxu0 0.0
    %964 = vmatpush1.msra.mxu0 0.0
    %965 = vmatprep.subr.mxu0 0.0
    %966 = vmatpush1.msra.mxu0 0.0
    %967 = vmatprep.subr.mxu0 0.0
    %968 = vmatpush1.msra.mxu0 0.0
    %969 = vmatprep.subr.mxu0 0.0
    %970 = vmatpush1.msra.mxu0 0.0
    %971 = vmatprep.subr.mxu0 0.0
    %972 = vmatpush1.msra.mxu0 0.0
    %973 = vmatprep.subr.mxu0 0.0
    %974 = vmatpush1.msra.mxu0 0.0
    %975 = vmatprep.subr.mxu0 0.0
    %976 = vmatpush1.msra.mxu0 0.0
    %977 = vmatprep.subr.mxu0 0.0
    %978 = vmatpush1.msra.mxu0 0.0
    %979 = vmatprep.subr.mxu0 0.0
    %980 = vmatpush1.msra.mxu0 0.0
    %981 = vmatprep.subr.mxu0 0.0
    %982 = vmatpush1.msra.mxu0 0.0
    %983 = vmatprep.subr.mxu0 0.0
    %984 = vmatpush1.msra.mxu0 0.0
    %985 = vmatprep.subr.mxu0 0.0
    %986 = vmatpush1.msra.mxu0 0.0
    %987 = vmatprep.subr.mxu0 0.0
    %988 = vmatpush1.msra.mxu0 0.0
    %989 = vmatprep.subr.mxu0 0.0
    %990 = vmatpush1.msra.mxu0 0.0
    %991 = vmatprep.subr.mxu0 0.0
    %992 = vmatpush1.msra.mxu0 0.0
    %993 = vmatprep.subr.mxu0 0.0
    %994 = vmatpush1.msra.mxu0 0.0
    %995 = vmatprep.subr.mxu0 0.0
    %996 = vmatpush1.msra.mxu0 0.0
    %997 = vmatprep.subr.mxu0 0.0
    %998 = vmatpush1.msra.mxu0 0.0
    %999 = vmatprep.subr.mxu0 0.0
    %1000 = vmatpush1.msra.mxu0 0.0
    %1001 = vmatprep.subr.mxu0 0.0
    %1002 = vmatpush1.msra.mxu0 0.0
    %1003 = vmatprep.subr.mxu0 0.0
    %1004 = vmatpush1.msra.mxu0 0.0
    %1005 = vmatprep.subr.mxu0 0.0
    %1006 = vmatpush1.msra.mxu0 0.0
    %1007 = vmatprep.subr.mxu0 0.0
    %1008 = vmatpush1.msra.mxu0 0.0
    %1009 = vmatprep.subr.mxu0 0.0
    %1010 = vmatpush1.msra.mxu0 0.0
    %1011 = vmatprep.subr.mxu0 0.0
    %1012 = vmatpush1.msra.mxu0 0.0
    %1013 = vmatprep.subr.mxu0 0.0
    %1014 = vmatpush1.msra.mxu0 0.0
    %1015 = vmatprep.mubr.f32.mxu0 0.0
    %v1016 = vand.u32 %v753, 4294901760
    %v1017 = vsub.f32 %v753, %v1016
    %1018 = vmatmul.mubr.f32.gmra.mrb[0].mxu0 %v1017
    %v1019 = vpop.f32.mrb[0].mxu0
    %v1020 = vadd.f32 %v934, %v1019
    %v1021 = vpop.f32.mrb[0].mxu0
    %1022 = vmatprep.mubr.f32.mxu0 0.0
    %v1023 = vand.u32 %v755, 4294901760
    %v1024 = vsub.f32 %v755, %v1023
    %1025 = vmatmul.mubr.f32.gmra.mrb[0].mxu0 %v1024
    %v1026 = vpop.f32.mrb[0].mxu0
    %v1027 = vadd.f32 %v940, %v1026
    %v1028 = vpop.f32.mrb[0].mxu0
    %1029 = vdwg.mxu0
    %1030 = vmatprep.subr.mxu0 0.0
    %v1031 = vand.u32 %v741, 4294901760
    %1032 = vmatpush1.msra.mxu0 %v1031
    %1033 = vmatprep.subr.mxu0 0.0
    %v1034 = vand.u32 %v742, 4294901760
    %1035 = vmatpush1.msra.mxu0 %v1034
    %1036 = vmatprep.subr.mxu0 0.0
    %v1037 = vand.u32 %v743, 4294901760
    %1038 = vmatpush1.msra.mxu0 %v1037
    %1039 = vmatprep.subr.mxu0 0.0
    %v1040 = vand.u32 %v744, 4294901760
    %1041 = vmatpush1.msra.mxu0 %v1040
    %1042 = vmatprep.subr.mxu0 0.0
    %1043 = vmatpush1.msra.mxu0 0.0
    %1044 = vmatprep.subr.mxu0 0.0
    %1045 = vmatpush1.msra.mxu0 0.0
    %1046 = vmatprep.subr.mxu0 0.0
    %1047 = vmatpush1.msra.mxu0 0.0
    %1048 = vmatprep.subr.mxu0 0.0
    %1049 = vmatpush1.msra.mxu0 0.0
    %1050 = vmatprep.subr.mxu0 0.0
    %1051 = vmatpush1.msra.mxu0 0.0
    %1052 = vmatprep.subr.mxu0 0.0
    %1053 = vmatpush1.msra.mxu0 0.0
    %1054 = vmatprep.subr.mxu0 0.0
    %1055 = vmatpush1.msra.mxu0 0.0
    %1056 = vmatprep.subr.mxu0 0.0
    %1057 = vmatpush1.msra.mxu0 0.0
    %1058 = vmatprep.subr.mxu0 0.0
    %1059 = vmatpush1.msra.mxu0 0.0
    %1060 = vmatprep.subr.mxu0 0.0
    %1061 = vmatpush1.msra.mxu0 0.0
    %1062 = vmatprep.subr.mxu0 0.0
    %1063 = vmatpush1.msra.mxu0 0.0
    %1064 = vmatprep.subr.mxu0 0.0
    %1065 = vmatpush1.msra.mxu0 0.0
    %1066 = vmatprep.subr.mxu0 0.0
    %1067 = vmatpush1.msra.mxu0 0.0
    %1068 = vmatprep.subr.mxu0 0.0
    %1069 = vmatpush1.msra.mxu0 0.0
    %1070 = vmatprep.subr.mxu0 0.0
    %1071 = vmatpush1.msra.mxu0 0.0
    %1072 = vmatprep.subr.mxu0 0.0
    %1073 = vmatpush1.msra.mxu0 0.0
    %1074 = vmatprep.subr.mxu0 0.0
    %1075 = vmatpush1.msra.mxu0 0.0
    %1076 = vmatprep.subr.mxu0 0.0
    %1077 = vmatpush1.msra.mxu0 0.0
    %1078 = vmatprep.subr.mxu0 0.0
    %1079 = vmatpush1.msra.mxu0 0.0
    %1080 = vmatprep.subr.mxu0 0.0
    %1081 = vmatpush1.msra.mxu0 0.0
    %1082 = vmatprep.subr.mxu0 0.0
    %1083 = vmatpush1.msra.mxu0 0.0
    %1084 = vmatprep.subr.mxu0 0.0
    %1085 = vmatpush1.msra.mxu0 0.0
    %1086 = vmatprep.subr.mxu0 0.0
    %1087 = vmatpush1.msra.mxu0 0.0
    %1088 = vmatprep.subr.mxu0 0.0
    %1089 = vmatpush1.msra.mxu0 0.0
    %1090 = vmatprep.subr.mxu0 0.0
    %1091 = vmatpush1.msra.mxu0 0.0
    %1092 = vmatprep.subr.mxu0 0.0
    %1093 = vmatpush1.msra.mxu0 0.0
    %1094 = vmatprep.subr.mxu0 0.0
    %1095 = vmatpush1.msra.mxu0 0.0
    %1096 = vmatprep.subr.mxu0 0.0
    %1097 = vmatpush1.msra.mxu0 0.0
    %1098 = vmatprep.mubr.f32.mxu0 0.0
    %v1099 = vand.u32 %v753, 4294901760
    %v1100 = vsub.f32 %v753, %v1099
    %v1101 = vand.u32 %v1100, 4294901760
    %1102 = vmatmul.mubr.f32.gmra.mrb[0].mxu0 %v1101
    %v1103 = vpop.f32.mrb[0].mxu0
    %v1104 = vadd.f32 %v1020, %v1103
    %v1105 = vpop.f32.mrb[0].mxu0
    %1106 = vmatprep.mubr.f32.mxu0 0.0
    %v1107 = vand.u32 %v755, 4294901760
    %v1108 = vsub.f32 %v755, %v1107
    %v1109 = vand.u32 %v1108, 4294901760
    %1110 = vmatmul.mubr.f32.gmra.mrb[0].mxu0 %v1109
    %v1111 = vpop.f32.mrb[0].mxu0
    %v1112 = vadd.f32 %v1027, %v1111
    %v1113 = vpop.f32.mrb[0].mxu0
    %1114 = vdwg.mxu0
    %1115 = vmatprep.subr.mxu0 0.0
    %v1116 = vand.u32 %v741, 4294901760
    %v1117 = vsub.f32 %v741, %v1116
    %v1118 = vand.u32 %v1117, 4294901760
    %1119 = vmatpush1.msra.mxu0 %v1118
    %1120 = vmatprep.subr.mxu0 0.0
    %v1121 = vand.u32 %v742, 4294901760
    %v1122 = vsub.f32 %v742, %v1121
    %v1123 = vand.u32 %v1122, 4294901760
    %1124 = vmatpush1.msra.mxu0 %v1123
    %1125 = vmatprep.subr.mxu0 0.0
    %v1126 = vand.u32 %v743, 4294901760
    %v1127 = vsub.f32 %v743, %v1126
    %v1128 = vand.u32 %v1127, 4294901760
    %1129 = vmatpush1.msra.mxu0 %v1128
    %1130 = vmatprep.subr.mxu0 0.0
    %v1131 = vand.u32 %v744, 4294901760
    %v1132 = vsub.f32 %v744, %v1131
    %v1133 = vand.u32 %v1132, 4294901760
    %1134 = vmatpush1.msra.mxu0 %v1133
    %1135 = vmatprep.subr.mxu0 0.0
    %1136 = vmatpush1.msra.mxu0 0.0
    %1137 = vmatprep.subr.mxu0 0.0
    %1138 = vmatpush1.msra.mxu0 0.0
    %1139 = vmatprep.subr.mxu0 0.0
    %1140 = vmatpush1.msra.mxu0 0.0
    %1141 = vmatprep.subr.mxu0 0.0
    %1142 = vmatpush1.msra.mxu0 0.0
    %1143 = vmatprep.subr.mxu0 0.0
    %1144 = vmatpush1.msra.mxu0 0.0
    %1145 = vmatprep.subr.mxu0 0.0
    %1146 = vmatpush1.msra.mxu0 0.0
    %1147 = vmatprep.subr.mxu0 0.0
    %1148 = vmatpush1.msra.mxu0 0.0
    %1149 = vmatprep.subr.mxu0 0.0
    %1150 = vmatpush1.msra.mxu0 0.0
    %1151 = vmatprep.subr.mxu0 0.0
    %1152 = vmatpush1.msra.mxu0 0.0
    %1153 = vmatprep.subr.mxu0 0.0
    %1154 = vmatpush1.msra.mxu0 0.0
    %1155 = vmatprep.subr.mxu0 0.0
    %1156 = vmatpush1.msra.mxu0 0.0
    %1157 = vmatprep.subr.mxu0 0.0
    %1158 = vmatpush1.msra.mxu0 0.0
    %1159 = vmatprep.subr.mxu0 0.0
    %1160 = vmatpush1.msra.mxu0 0.0
    %1161 = vmatprep.subr.mxu0 0.0
    %1162 = vmatpush1.msra.mxu0 0.0
    %1163 = vmatprep.subr.mxu0 0.0
    %1164 = vmatpush1.msra.mxu0 0.0
    %1165 = vmatprep.subr.mxu0 0.0
    %1166 = vmatpush1.msra.mxu0 0.0
    %1167 = vmatprep.subr.mxu0 0.0
    %1168 = vmatpush1.msra.mxu0 0.0
    %1169 = vmatprep.subr.mxu0 0.0
    %1170 = vmatpush1.msra.mxu0 0.0
    %1171 = vmatprep.subr.mxu0 0.0
    %1172 = vmatpush1.msra.mxu0 0.0
    %1173 = vmatprep.subr.mxu0 0.0
    %1174 = vmatpush1.msra.mxu0 0.0
    %1175 = vmatprep.subr.mxu0 0.0
    %1176 = vmatpush1.msra.mxu0 0.0
    %1177 = vmatprep.subr.mxu0 0.0
    %1178 = vmatpush1.msra.mxu0 0.0
    %1179 = vmatprep.subr.mxu0 0.0
    %1180 = vmatpush1.msra.mxu0 0.0
    %1181 = vmatprep.subr.mxu0 0.0
    %1182 = vmatpush1.msra.mxu0 0.0
    %1183 = vmatprep.subr.mxu0 0.0
    %1184 = vmatpush1.msra.mxu0 0.0
    %1185 = vmatprep.subr.mxu0 0.0
    %1186 = vmatpush1.msra.mxu0 0.0
    %1187 = vmatprep.subr.mxu0 0.0
    %1188 = vmatpush1.msra.mxu0 0.0
    %1189 = vmatprep.subr.mxu0 0.0
    %1190 = vmatpush1.msra.mxu0 0.0
    %1191 = vmatprep.mubr.f32.mxu0 0.0
    %v1192 = vand.u32 %v753, 4294901760
    %1193 = vmatmul.mubr.f32.gmra.mrb[0].mxu0 %v1192
    %v1194 = vpop.f32.mrb[0].mxu0
    %v1195 = vadd.f32 %v1104, %v1194
    %v1196 = vpop.f32.mrb[0].mxu0
    %1197 = vmatprep.mubr.f32.mxu0 0.0
    %v1198 = vand.u32 %v755, 4294901760
    %1199 = vmatmul.mubr.f32.gmra.mrb[0].mxu0 %v1198
    %v1200 = vpop.f32.mrb[0].mxu0
    %v1201 = vadd.f32 %v1112, %v1200
    %v1202 = vpop.f32.mrb[0].mxu0
    %1203 = vdwg.mxu0
    %1204 = vmatprep.subr.mxu0 0.0
    %v1205 = vand.u32 %v741, 4294901760
    %1206 = vmatpush1.msra.mxu0 %v1205
    %1207 = vmatprep.subr.mxu0 0.0
    %v1208 = vand.u32 %v742, 4294901760
    %1209 = vmatpush1.msra.mxu0 %v1208
    %1210 = vmatprep.subr.mxu0 0.0
    %v1211 = vand.u32 %v743, 4294901760
    %1212 = vmatpush1.msra.mxu0 %v1211
    %1213 = vmatprep.subr.mxu0 0.0
    %v1214 = vand.u32 %v744, 4294901760
    %1215 = vmatpush1.msra.mxu0 %v1214
    %1216 = vmatprep.subr.mxu0 0.0
    %1217 = vmatpush1.msra.mxu0 0.0
    %1218 = vmatprep.subr.mxu0 0.0
    %1219 = vmatpush1.msra.mxu0 0.0
    %1220 = vmatprep.subr.mxu0 0.0
    %1221 = vmatpush1.msra.mxu0 0.0
    %1222 = vmatprep.subr.mxu0 0.0
    %1223 = vmatpush1.msra.mxu0 0.0
    %1224 = vmatprep.subr.mxu0 0.0
    %1225 = vmatpush1.msra.mxu0 0.0
    %1226 = vmatprep.subr.mxu0 0.0
    %1227 = vmatpush1.msra.mxu0 0.0
    %1228 = vmatprep.subr.mxu0 0.0
    %1229 = vmatpush1.msra.mxu0 0.0
    %1230 = vmatprep.subr.mxu0 0.0
    %1231 = vmatpush1.msra.mxu0 0.0
    %1232 = vmatprep.subr.mxu0 0.0
    %1233 = vmatpush1.msra.mxu0 0.0
    %1234 = vmatprep.subr.mxu0 0.0
    %1235 = vmatpush1.msra.mxu0 0.0
    %1236 = vmatprep.subr.mxu0 0.0
    %1237 = vmatpush1.msra.mxu0 0.0
    %1238 = vmatprep.subr.mxu0 0.0
    %1239 = vmatpush1.msra.mxu0 0.0
    %1240 = vmatprep.subr.mxu0 0.0
    %1241 = vmatpush1.msra.mxu0 0.0
    %1242 = vmatprep.subr.mxu0 0.0
    %1243 = vmatpush1.msra.mxu0 0.0
    %1244 = vmatprep.subr.mxu0 0.0
    %1245 = vmatpush1.msra.mxu0 0.0
    %1246 = vmatprep.subr.mxu0 0.0
    %1247 = vmatpush1.msra.mxu0 0.0
    %1248 = vmatprep.subr.mxu0 0.0
    %1249 = vmatpush1.msra.mxu0 0.0
    %1250 = vmatprep.subr.mxu0 0.0
    %1251 = vmatpush1.msra.mxu0 0.0
    %1252 = vmatprep.subr.mxu0 0.0
    %1253 = vmatpush1.msra.mxu0 0.0
    %1254 = vmatprep.subr.mxu0 0.0
    %1255 = vmatpush1.msra.mxu0 0.0
    %1256 = vmatprep.subr.mxu0 0.0
    %1257 = vmatpush1.msra.mxu0 0.0
    %1258 = vmatprep.subr.mxu0 0.0
    %1259 = vmatpush1.msra.mxu0 0.0
    %1260 = vmatprep.subr.mxu0 0.0
    %1261 = vmatpush1.msra.mxu0 0.0
    %1262 = vmatprep.subr.mxu0 0.0
    %1263 = vmatpush1.msra.mxu0 0.0
    %1264 = vmatprep.subr.mxu0 0.0
    %1265 = vmatpush1.msra.mxu0 0.0
    %1266 = vmatprep.subr.mxu0 0.0
    %1267 = vmatpush1.msra.mxu0 0.0
    %1268 = vmatprep.subr.mxu0 0.0
    %1269 = vmatpush1.msra.mxu0 0.0
    %1270 = vmatprep.subr.mxu0 0.0
    %1271 = vmatpush1.msra.mxu0 0.0
    %1272 = vmatprep.mubr.f32.mxu0 0.0
    %v1273 = vand.u32 %v753, 4294901760
    %1274 = vmatmul.mubr.f32.gmra.mrb[0].mxu0 %v1273
    %v1275 = vpop.f32.mrb[0].mxu0
    %v1276 = vadd.f32 %v1195, %v1275
    %v1277 = vpop.f32.mrb[0].mxu0
    %1278 = vmatprep.mubr.f32.mxu0 0.0
    %v1279 = vand.u32 %v755, 4294901760
    %1280 = vmatmul.mubr.f32.gmra.mrb[0].mxu0 %v1279
    %v1281 = vpop.f32.mrb[0].mxu0
    %v1282 = vadd.f32 %v1201, %v1281
    %v1283 = vpop.f32.mrb[0].mxu0
    %1284 = vdwg.mxu0
    %v1285 = vmax.f32 %v1276, 0.0
    %v1286 = vmax.f32 %v1282, 0.0
    %v1287 = vld [vmem:[%s3] sm:$0xff]
    %v1288 = vld [vmem:[%s4] sm:$0x1]
    %v1290 = vlaneseq
    %v1291 = vshrl.u32 %v1290, 7
    %v1292 = vsub.s32 0, %v1291
    %v1293 = vrot.slane %v1288, %v1292
    %vm1295 = vcmask 64512
    %v1297 = vsel %vm1295, %v1285, 0
    %v1300 = vsel %vm1295, %v1286, 0
    %1302 = vmatprep.subr.mxu0 0.0
    %v1303 = vand.u32 %v1287, 4294901760
    %1304 = vmatpush1.msra.mxu0 %v1303
    %1305 = vmatprep.subr.mxu0 0.0
    %1306 = vmatpush1.msra.mxu0 0.0
    %1307 = vmatprep.subr.mxu0 0.0
    %1308 = vmatpush1.msra.mxu0 0.0
    %1309 = vmatprep.subr.mxu0 0.0
    %1310 = vmatpush1.msra.mxu0 0.0
    %1311 = vmatprep.subr.mxu0 0.0
    %1312 = vmatpush1.msra.mxu0 0.0
    %1313 = vmatprep.subr.mxu0 0.0
    %1314 = vmatpush1.msra.mxu0 0.0
    %1315 = vmatprep.subr.mxu0 0.0
    %1316 = vmatpush1.msra.mxu0 0.0
    %1317 = vmatprep.subr.mxu0 0.0
    %1318 = vmatpush1.msra.mxu0 0.0
    %1319 = vmatprep.subr.mxu0 0.0
    %1320 = vmatpush1.msra.mxu0 0.0
    %1321 = vmatprep.subr.mxu0 0.0
    %1322 = vmatpush1.msra.mxu0 0.0
    %1323 = vmatprep.subr.mxu0 0.0
    %1324 = vmatpush1.msra.mxu0 0.0
    %1325 = vmatprep.subr.mxu0 0.0
    %1326 = vmatpush1.msra.mxu0 0.0
    %1327 = vmatprep.subr.mxu0 0.0
    %1328 = vmatpush1.msra.mxu0 0.0
    %1329 = vmatprep.subr.mxu0 0.0
    %1330 = vmatpush1.msra.mxu0 0.0
    %1331 = vmatprep.subr.mxu0 0.0
    %1332 = vmatpush1.msra.mxu0 0.0
    %1333 = vmatprep.subr.mxu0 0.0
    %1334 = vmatpush1.msra.mxu0 0.0
    %1335 = vmatprep.subr.mxu0 0.0
    %1336 = vmatpush1.msra.mxu0 0.0
    %1337 = vmatprep.subr.mxu0 0.0
    %1338 = vmatpush1.msra.mxu0 0.0
    %1339 = vmatprep.subr.mxu0 0.0
    %1340 = vmatpush1.msra.mxu0 0.0
    %1341 = vmatprep.subr.mxu0 0.0
    %1342 = vmatpush1.msra.mxu0 0.0
    %1343 = vmatprep.subr.mxu0 0.0
    %1344 = vmatpush1.msra.mxu0 0.0
    %1345 = vmatprep.subr.mxu0 0.0
    %1346 = vmatpush1.msra.mxu0 0.0
    %1347 = vmatprep.subr.mxu0 0.0
    %1348 = vmatpush1.msra.mxu0 0.0
    %1349 = vmatprep.subr.mxu0 0.0
    %1350 = vmatpush1.msra.mxu0 0.0
    %1351 = vmatprep.subr.mxu0 0.0
    %1352 = vmatpush1.msra.mxu0 0.0
    %1353 = vmatprep.subr.mxu0 0.0
    %1354 = vmatpush1.msra.mxu0 0.0
    %1355 = vmatprep.subr.mxu0 0.0
    %1356 = vmatpush1.msra.mxu0 0.0
    %1357 = vmatprep.subr.mxu0 0.0
    %1358 = vmatpush1.msra.mxu0 0.0
    %1359 = vmatprep.subr.mxu0 0.0
    %1360 = vmatpush1.msra.mxu0 0.0
    %1361 = vmatprep.subr.mxu0 0.0
    %1362 = vmatpush1.msra.mxu0 0.0
    %1363 = vmatprep.subr.mxu0 0.0
    %1364 = vmatpush1.msra.mxu0 0.0
    %1365 = vmatprep.subr.mxu0 0.0
    %1366 = vmatpush1.msra.mxu0 0.0
    %1367 = vmatprep.mubr.f32.mxu0 0.0
    %v1368 = vand.u32 %v1297, 4294901760
    %v1369 = vsub.f32 %v1297, %v1368
    %v1370 = vand.u32 %v1369, 4294901760
    %v1371 = vsub.f32 %v1369, %v1370
    %v1372 = vand.u32 %v1371, 4294901760
    %1373 = vmatmul.mubr.f32.gmra.mrb[0].mxu0 %v1372
    %v1374 = vpop.f32.mrb[0].mxu0
    %v1375 = vadd.f32 %v1293, %v1374
    %v1376 = vpop.f32.mrb[0].mxu0
    %1377 = vmatprep.mubr.f32.mxu0 0.0
    %v1378 = vand.u32 %v1300, 4294901760
    %v1379 = vsub.f32 %v1300, %v1378
    %v1380 = vand.u32 %v1379, 4294901760
    %v1381 = vsub.f32 %v1379, %v1380
    %v1382 = vand.u32 %v1381, 4294901760
    %1383 = vmatmul.mubr.f32.gmra.mrb[0].mxu0 %v1382
    %v1384 = vpop.f32.mrb[0].mxu0
    %v1385 = vadd.f32 %v1293, %v1384
    %v1386 = vpop.f32.mrb[0].mxu0
    %1387 = vdwg.mxu0
    %1388 = vmatprep.subr.mxu0 0.0
    %v1389 = vand.u32 %v1287, 4294901760
    %v1390 = vsub.f32 %v1287, %v1389
    %v1391 = vand.u32 %v1390, 4294901760
    %v1392 = vsub.f32 %v1390, %v1391
    %v1393 = vand.u32 %v1392, 4294901760
    %1394 = vmatpush1.msra.mxu0 %v1393
    %1395 = vmatprep.subr.mxu0 0.0
    %1396 = vmatpush1.msra.mxu0 0.0
    %1397 = vmatprep.subr.mxu0 0.0
    %1398 = vmatpush1.msra.mxu0 0.0
    %1399 = vmatprep.subr.mxu0 0.0
    %1400 = vmatpush1.msra.mxu0 0.0
    %1401 = vmatprep.subr.mxu0 0.0
    %1402 = vmatpush1.msra.mxu0 0.0
    %1403 = vmatprep.subr.mxu0 0.0
    %1404 = vmatpush1.msra.mxu0 0.0
    %1405 = vmatprep.subr.mxu0 0.0
    %1406 = vmatpush1.msra.mxu0 0.0
    %1407 = vmatprep.subr.mxu0 0.0
    %1408 = vmatpush1.msra.mxu0 0.0
    %1409 = vmatprep.subr.mxu0 0.0
    %1410 = vmatpush1.msra.mxu0 0.0
    %1411 = vmatprep.subr.mxu0 0.0
    %1412 = vmatpush1.msra.mxu0 0.0
    %1413 = vmatprep.subr.mxu0 0.0
    %1414 = vmatpush1.msra.mxu0 0.0
    %1415 = vmatprep.subr.mxu0 0.0
    %1416 = vmatpush1.msra.mxu0 0.0
    %1417 = vmatprep.subr.mxu0 0.0
    %1418 = vmatpush1.msra.mxu0 0.0
    %1419 = vmatprep.subr.mxu0 0.0
    %1420 = vmatpush1.msra.mxu0 0.0
    %1421 = vmatprep.subr.mxu0 0.0
    %1422 = vmatpush1.msra.mxu0 0.0
    %1423 = vmatprep.subr.mxu0 0.0
    %1424 = vmatpush1.msra.mxu0 0.0
    %1425 = vmatprep.subr.mxu0 0.0
    %1426 = vmatpush1.msra.mxu0 0.0
    %1427 = vmatprep.subr.mxu0 0.0
    %1428 = vmatpush1.msra.mxu0 0.0
    %1429 = vmatprep.subr.mxu0 0.0
    %1430 = vmatpush1.msra.mxu0 0.0
    %1431 = vmatprep.subr.mxu0 0.0
    %1432 = vmatpush1.msra.mxu0 0.0
    %1433 = vmatprep.subr.mxu0 0.0
    %1434 = vmatpush1.msra.mxu0 0.0
    %1435 = vmatprep.subr.mxu0 0.0
    %1436 = vmatpush1.msra.mxu0 0.0
    %1437 = vmatprep.subr.mxu0 0.0
    %1438 = vmatpush1.msra.mxu0 0.0
    %1439 = vmatprep.subr.mxu0 0.0
    %1440 = vmatpush1.msra.mxu0 0.0
    %1441 = vmatprep.subr.mxu0 0.0
    %1442 = vmatpush1.msra.mxu0 0.0
    %1443 = vmatprep.subr.mxu0 0.0
    %1444 = vmatpush1.msra.mxu0 0.0
    %1445 = vmatprep.subr.mxu0 0.0
    %1446 = vmatpush1.msra.mxu0 0.0
    %1447 = vmatprep.subr.mxu0 0.0
    %1448 = vmatpush1.msra.mxu0 0.0
    %1449 = vmatprep.subr.mxu0 0.0
    %1450 = vmatpush1.msra.mxu0 0.0
    %1451 = vmatprep.subr.mxu0 0.0
    %1452 = vmatpush1.msra.mxu0 0.0
    %1453 = vmatprep.subr.mxu0 0.0
    %1454 = vmatpush1.msra.mxu0 0.0
    %1455 = vmatprep.subr.mxu0 0.0
    %1456 = vmatpush1.msra.mxu0 0.0
    %1457 = vmatprep.mubr.f32.mxu0 0.0
    %v1458 = vand.u32 %v1297, 4294901760
    %1459 = vmatmul.mubr.f32.gmra.mrb[0].mxu0 %v1458
    %v1460 = vpop.f32.mrb[0].mxu0
    %v1461 = vadd.f32 %v1375, %v1460
    %v1462 = vpop.f32.mrb[0].mxu0
    %1463 = vmatprep.mubr.f32.mxu0 0.0
    %v1464 = vand.u32 %v1300, 4294901760
    %1465 = vmatmul.mubr.f32.gmra.mrb[0].mxu0 %v1464
    %v1466 = vpop.f32.mrb[0].mxu0
    %v1467 = vadd.f32 %v1385, %v1466
    %v1468 = vpop.f32.mrb[0].mxu0
    %1469 = vdwg.mxu0
    %1470 = vmatprep.subr.mxu0 0.0
    %v1471 = vand.u32 %v1287, 4294901760
    %v1472 = vsub.f32 %v1287, %v1471
    %1473 = vmatpush1.msra.mxu0 %v1472
    %1474 = vmatprep.subr.mxu0 0.0
    %1475 = vmatpush1.msra.mxu0 0.0
    %1476 = vmatprep.subr.mxu0 0.0
    %1477 = vmatpush1.msra.mxu0 0.0
    %1478 = vmatprep.subr.mxu0 0.0
    %1479 = vmatpush1.msra.mxu0 0.0
    %1480 = vmatprep.subr.mxu0 0.0
    %1481 = vmatpush1.msra.mxu0 0.0
    %1482 = vmatprep.subr.mxu0 0.0
    %1483 = vmatpush1.msra.mxu0 0.0
    %1484 = vmatprep.subr.mxu0 0.0
    %1485 = vmatpush1.msra.mxu0 0.0
    %1486 = vmatprep.subr.mxu0 0.0
    %1487 = vmatpush1.msra.mxu0 0.0
    %1488 = vmatprep.subr.mxu0 0.0
    %1489 = vmatpush1.msra.mxu0 0.0
    %1490 = vmatprep.subr.mxu0 0.0
    %1491 = vmatpush1.msra.mxu0 0.0
    %1492 = vmatprep.subr.mxu0 0.0
    %1493 = vmatpush1.msra.mxu0 0.0
    %1494 = vmatprep.subr.mxu0 0.0
    %1495 = vmatpush1.msra.mxu0 0.0
    %1496 = vmatprep.subr.mxu0 0.0
    %1497 = vmatpush1.msra.mxu0 0.0
    %1498 = vmatprep.subr.mxu0 0.0
    %1499 = vmatpush1.msra.mxu0 0.0
    %1500 = vmatprep.subr.mxu0 0.0
    %1501 = vmatpush1.msra.mxu0 0.0
    %1502 = vmatprep.subr.mxu0 0.0
    %1503 = vmatpush1.msra.mxu0 0.0
    %1504 = vmatprep.subr.mxu0 0.0
    %1505 = vmatpush1.msra.mxu0 0.0
    %1506 = vmatprep.subr.mxu0 0.0
    %1507 = vmatpush1.msra.mxu0 0.0
    %1508 = vmatprep.subr.mxu0 0.0
    %1509 = vmatpush1.msra.mxu0 0.0
    %1510 = vmatprep.subr.mxu0 0.0
    %1511 = vmatpush1.msra.mxu0 0.0
    %1512 = vmatprep.subr.mxu0 0.0
    %1513 = vmatpush1.msra.mxu0 0.0
    %1514 = vmatprep.subr.mxu0 0.0
    %1515 = vmatpush1.msra.mxu0 0.0
    %1516 = vmatprep.subr.mxu0 0.0
    %1517 = vmatpush1.msra.mxu0 0.0
    %1518 = vmatprep.subr.mxu0 0.0
    %1519 = vmatpush1.msra.mxu0 0.0
    %1520 = vmatprep.subr.mxu0 0.0
    %1521 = vmatpush1.msra.mxu0 0.0
    %1522 = vmatprep.subr.mxu0 0.0
    %1523 = vmatpush1.msra.mxu0 0.0
    %1524 = vmatprep.subr.mxu0 0.0
    %1525 = vmatpush1.msra.mxu0 0.0
    %1526 = vmatprep.subr.mxu0 0.0
    %1527 = vmatpush1.msra.mxu0 0.0
    %1528 = vmatprep.subr.mxu0 0.0
    %1529 = vmatpush1.msra.mxu0 0.0
    %1530 = vmatprep.subr.mxu0 0.0
    %1531 = vmatpush1.msra.mxu0 0.0
    %1532 = vmatprep.subr.mxu0 0.0
    %1533 = vmatpush1.msra.mxu0 0.0
    %1534 = vmatprep.subr.mxu0 0.0
    %1535 = vmatpush1.msra.mxu0 0.0
    %1536 = vmatprep.mubr.f32.mxu0 0.0
    %v1537 = vand.u32 %v1297, 4294901760
    %v1538 = vsub.f32 %v1297, %v1537
    %1539 = vmatmul.mubr.f32.gmra.mrb[0].mxu0 %v1538
    %v1540 = vpop.f32.mrb[0].mxu0
    %v1541 = vadd.f32 %v1461, %v1540
    %v1542 = vpop.f32.mrb[0].mxu0
    %1543 = vmatprep.mubr.f32.mxu0 0.0
    %v1544 = vand.u32 %v1300, 4294901760
    %v1545 = vsub.f32 %v1300, %v1544
    %1546 = vmatmul.mubr.f32.gmra.mrb[0].mxu0 %v1545
    %v1547 = vpop.f32.mrb[0].mxu0
    %v1548 = vadd.f32 %v1467, %v1547
    %v1549 = vpop.f32.mrb[0].mxu0
    %1550 = vdwg.mxu0
    %1551 = vmatprep.subr.mxu0 0.0
    %v1552 = vand.u32 %v1287, 4294901760
    %1553 = vmatpush1.msra.mxu0 %v1552
    %1554 = vmatprep.subr.mxu0 0.0
    %1555 = vmatpush1.msra.mxu0 0.0
    %1556 = vmatprep.subr.mxu0 0.0
    %1557 = vmatpush1.msra.mxu0 0.0
    %1558 = vmatprep.subr.mxu0 0.0
    %1559 = vmatpush1.msra.mxu0 0.0
    %1560 = vmatprep.subr.mxu0 0.0
    %1561 = vmatpush1.msra.mxu0 0.0
    %1562 = vmatprep.subr.mxu0 0.0
    %1563 = vmatpush1.msra.mxu0 0.0
    %1564 = vmatprep.subr.mxu0 0.0
    %1565 = vmatpush1.msra.mxu0 0.0
    %1566 = vmatprep.subr.mxu0 0.0
    %1567 = vmatpush1.msra.mxu0 0.0
    %1568 = vmatprep.subr.mxu0 0.0
    %1569 = vmatpush1.msra.mxu0 0.0
    %1570 = vmatprep.subr.mxu0 0.0
    %1571 = vmatpush1.msra.mxu0 0.0
    %1572 = vmatprep.subr.mxu0 0.0
    %1573 = vmatpush1.msra.mxu0 0.0
    %1574 = vmatprep.subr.mxu0 0.0
    %1575 = vmatpush1.msra.mxu0 0.0
    %1576 = vmatprep.subr.mxu0 0.0
    %1577 = vmatpush1.msra.mxu0 0.0
    %1578 = vmatprep.subr.mxu0 0.0
    %1579 = vmatpush1.msra.mxu0 0.0
    %1580 = vmatprep.subr.mxu0 0.0
    %1581 = vmatpush1.msra.mxu0 0.0
    %1582 = vmatprep.subr.mxu0 0.0
    %1583 = vmatpush1.msra.mxu0 0.0
    %1584 = vmatprep.subr.mxu0 0.0
    %1585 = vmatpush1.msra.mxu0 0.0
    %1586 = vmatprep.subr.mxu0 0.0
    %1587 = vmatpush1.msra.mxu0 0.0
    %1588 = vmatprep.subr.mxu0 0.0
    %1589 = vmatpush1.msra.mxu0 0.0
    %1590 = vmatprep.subr.mxu0 0.0
    %1591 = vmatpush1.msra.mxu0 0.0
    %1592 = vmatprep.subr.mxu0 0.0
    %1593 = vmatpush1.msra.mxu0 0.0
    %1594 = vmatprep.subr.mxu0 0.0
    %1595 = vmatpush1.msra.mxu0 0.0
    %1596 = vmatprep.subr.mxu0 0.0
    %1597 = vmatpush1.msra.mxu0 0.0
    %1598 = vmatprep.subr.mxu0 0.0
    %1599 = vmatpush1.msra.mxu0 0.0
    %1600 = vmatprep.subr.mxu0 0.0
    %1601 = vmatpush1.msra.mxu0 0.0
    %1602 = vmatprep.subr.mxu0 0.0
    %1603 = vmatpush1.msra.mxu0 0.0
    %1604 = vmatprep.subr.mxu0 0.0
    %1605 = vmatpush1.msra.mxu0 0.0
    %1606 = vmatprep.subr.mxu0 0.0
    %1607 = vmatpush1.msra.mxu0 0.0
    %1608 = vmatprep.subr.mxu0 0.0
    %1609 = vmatpush1.msra.mxu0 0.0
    %1610 = vmatprep.subr.mxu0 0.0
    %1611 = vmatpush1.msra.mxu0 0.0
    %1612 = vmatprep.subr.mxu0 0.0
    %1613 = vmatpush1.msra.mxu0 0.0
    %1614 = vmatprep.subr.mxu0 0.0
    %1615 = vmatpush1.msra.mxu0 0.0
    %1616 = vmatprep.mubr.f32.mxu0 0.0
    %v1617 = vand.u32 %v1297, 4294901760
    %v1618 = vsub.f32 %v1297, %v1617
    %v1619 = vand.u32 %v1618, 4294901760
    %1620 = vmatmul.mubr.f32.gmra.mrb[0].mxu0 %v1619
    %v1621 = vpop.f32.mrb[0].mxu0
    %v1622 = vadd.f32 %v1541, %v1621
    %v1623 = vpop.f32.mrb[0].mxu0
    %1624 = vmatprep.mubr.f32.mxu0 0.0
    %v1625 = vand.u32 %v1300, 4294901760
    %v1626 = vsub.f32 %v1300, %v1625
    %v1627 = vand.u32 %v1626, 4294901760
    %1628 = vmatmul.mubr.f32.gmra.mrb[0].mxu0 %v1627
    %v1629 = vpop.f32.mrb[0].mxu0
    %v1630 = vadd.f32 %v1548, %v1629
    %v1631 = vpop.f32.mrb[0].mxu0
    %1632 = vdwg.mxu0
    %1633 = vmatprep.subr.mxu0 0.0
    %v1634 = vand.u32 %v1287, 4294901760
    %v1635 = vsub.f32 %v1287, %v1634
    %v1636 = vand.u32 %v1635, 4294901760
    %1637 = vmatpush1.msra.mxu0 %v1636
    %1638 = vmatprep.subr.mxu0 0.0
    %1639 = vmatpush1.msra.mxu0 0.0
    %1640 = vmatprep.subr.mxu0 0.0
    %1641 = vmatpush1.msra.mxu0 0.0
    %1642 = vmatprep.subr.mxu0 0.0
    %1643 = vmatpush1.msra.mxu0 0.0
    %1644 = vmatprep.subr.mxu0 0.0
    %1645 = vmatpush1.msra.mxu0 0.0
    %1646 = vmatprep.subr.mxu0 0.0
    %1647 = vmatpush1.msra.mxu0 0.0
    %1648 = vmatprep.subr.mxu0 0.0
    %1649 = vmatpush1.msra.mxu0 0.0
    %1650 = vmatprep.subr.mxu0 0.0
    %1651 = vmatpush1.msra.mxu0 0.0
    %1652 = vmatprep.subr.mxu0 0.0
    %1653 = vmatpush1.msra.mxu0 0.0
    %1654 = vmatprep.subr.mxu0 0.0
    %1655 = vmatpush1.msra.mxu0 0.0
    %1656 = vmatprep.subr.mxu0 0.0
    %1657 = vmatpush1.msra.mxu0 0.0
    %1658 = vmatprep.subr.mxu0 0.0
    %1659 = vmatpush1.msra.mxu0 0.0
    %1660 = vmatprep.subr.mxu0 0.0
    %1661 = vmatpush1.msra.mxu0 0.0
    %1662 = vmatprep.subr.mxu0 0.0
    %1663 = vmatpush1.msra.mxu0 0.0
    %1664 = vmatprep.subr.mxu0 0.0
    %1665 = vmatpush1.msra.mxu0 0.0
    %1666 = vmatprep.subr.mxu0 0.0
    %1667 = vmatpush1.msra.mxu0 0.0
    %1668 = vmatprep.subr.mxu0 0.0
    %1669 = vmatpush1.msra.mxu0 0.0
    %1670 = vmatprep.subr.mxu0 0.0
    %1671 = vmatpush1.msra.mxu0 0.0
    %1672 = vmatprep.subr.mxu0 0.0
    %1673 = vmatpush1.msra.mxu0 0.0
    %1674 = vmatprep.subr.mxu0 0.0
    %1675 = vmatpush1.msra.mxu0 0.0
    %1676 = vmatprep.subr.mxu0 0.0
    %1677 = vmatpush1.msra.mxu0 0.0
    %1678 = vmatprep.subr.mxu0 0.0
    %1679 = vmatpush1.msra.mxu0 0.0
    %1680 = vmatprep.subr.mxu0 0.0
    %1681 = vmatpush1.msra.mxu0 0.0
    %1682 = vmatprep.subr.mxu0 0.0
    %1683 = vmatpush1.msra.mxu0 0.0
    %1684 = vmatprep.subr.mxu0 0.0
    %1685 = vmatpush1.msra.mxu0 0.0
    %1686 = vmatprep.subr.mxu0 0.0
    %1687 = vmatpush1.msra.mxu0 0.0
    %1688 = vmatprep.subr.mxu0 0.0
    %1689 = vmatpush1.msra.mxu0 0.0
    %1690 = vmatprep.subr.mxu0 0.0
    %1691 = vmatpush1.msra.mxu0 0.0
    %1692 = vmatprep.subr.mxu0 0.0
    %1693 = vmatpush1.msra.mxu0 0.0
    %1694 = vmatprep.subr.mxu0 0.0
    %1695 = vmatpush1.msra.mxu0 0.0
    %1696 = vmatprep.subr.mxu0 0.0
    %1697 = vmatpush1.msra.mxu0 0.0
    %1698 = vmatprep.subr.mxu0 0.0
    %1699 = vmatpush1.msra.mxu0 0.0
    %1700 = vmatprep.mubr.f32.mxu0 0.0
    %v1701 = vand.u32 %v1297, 4294901760
    %1702 = vmatmul.mubr.f32.gmra.mrb[0].mxu0 %v1701
    %v1703 = vpop.f32.mrb[0].mxu0
    %v1704 = vadd.f32 %v1622, %v1703
    %v1705 = vpop.f32.mrb[0].mxu0
    %1706 = vmatprep.mubr.f32.mxu0 0.0
    %v1707 = vand.u32 %v1300, 4294901760
    %1708 = vmatmul.mubr.f32.gmra.mrb[0].mxu0 %v1707
    %v1709 = vpop.f32.mrb[0].mxu0
    %v1710 = vadd.f32 %v1630, %v1709
    %v1711 = vpop.f32.mrb[0].mxu0
    %1712 = vdwg.mxu0
    %1713 = vmatprep.subr.mxu0 0.0
    %v1714 = vand.u32 %v1287, 4294901760
    %1715 = vmatpush1.msra.mxu0 %v1714
    %1716 = vmatprep.subr.mxu0 0.0
    %1717 = vmatpush1.msra.mxu0 0.0
    %1718 = vmatprep.subr.mxu0 0.0
    %1719 = vmatpush1.msra.mxu0 0.0
    %1720 = vmatprep.subr.mxu0 0.0
    %1721 = vmatpush1.msra.mxu0 0.0
    %1722 = vmatprep.subr.mxu0 0.0
    %1723 = vmatpush1.msra.mxu0 0.0
    %1724 = vmatprep.subr.mxu0 0.0
    %1725 = vmatpush1.msra.mxu0 0.0
    %1726 = vmatprep.subr.mxu0 0.0
    %1727 = vmatpush1.msra.mxu0 0.0
    %1728 = vmatprep.subr.mxu0 0.0
    %1729 = vmatpush1.msra.mxu0 0.0
    %1730 = vmatprep.subr.mxu0 0.0
    %1731 = vmatpush1.msra.mxu0 0.0
    %1732 = vmatprep.subr.mxu0 0.0
    %1733 = vmatpush1.msra.mxu0 0.0
    %1734 = vmatprep.subr.mxu0 0.0
    %1735 = vmatpush1.msra.mxu0 0.0
    %1736 = vmatprep.subr.mxu0 0.0
    %1737 = vmatpush1.msra.mxu0 0.0
    %1738 = vmatprep.subr.mxu0 0.0
    %1739 = vmatpush1.msra.mxu0 0.0
    %1740 = vmatprep.subr.mxu0 0.0
    %1741 = vmatpush1.msra.mxu0 0.0
    %1742 = vmatprep.subr.mxu0 0.0
    %1743 = vmatpush1.msra.mxu0 0.0
    %1744 = vmatprep.subr.mxu0 0.0
    %1745 = vmatpush1.msra.mxu0 0.0
    %1746 = vmatprep.subr.mxu0 0.0
    %1747 = vmatpush1.msra.mxu0 0.0
    %1748 = vmatprep.subr.mxu0 0.0
    %1749 = vmatpush1.msra.mxu0 0.0
    %1750 = vmatprep.subr.mxu0 0.0
    %1751 = vmatpush1.msra.mxu0 0.0
    %1752 = vmatprep.subr.mxu0 0.0
    %1753 = vmatpush1.msra.mxu0 0.0
    %1754 = vmatprep.subr.mxu0 0.0
    %1755 = vmatpush1.msra.mxu0 0.0
    %1756 = vmatprep.subr.mxu0 0.0
    %1757 = vmatpush1.msra.mxu0 0.0
    %1758 = vmatprep.subr.mxu0 0.0
    %1759 = vmatpush1.msra.mxu0 0.0
    %1760 = vmatprep.subr.mxu0 0.0
    %1761 = vmatpush1.msra.mxu0 0.0
    %1762 = vmatprep.subr.mxu0 0.0
    %1763 = vmatpush1.msra.mxu0 0.0
    %1764 = vmatprep.subr.mxu0 0.0
    %1765 = vmatpush1.msra.mxu0 0.0
    %1766 = vmatprep.subr.mxu0 0.0
    %1767 = vmatpush1.msra.mxu0 0.0
    %1768 = vmatprep.subr.mxu0 0.0
    %1769 = vmatpush1.msra.mxu0 0.0
    %1770 = vmatprep.subr.mxu0 0.0
    %1771 = vmatpush1.msra.mxu0 0.0
    %1772 = vmatprep.subr.mxu0 0.0
    %1773 = vmatpush1.msra.mxu0 0.0
    %1774 = vmatprep.subr.mxu0 0.0
    %1775 = vmatpush1.msra.mxu0 0.0
    %1776 = vmatprep.subr.mxu0 0.0
    %1777 = vmatpush1.msra.mxu0 0.0
    %1778 = vmatprep.mubr.f32.mxu0 0.0
    %v1779 = vand.u32 %v1297, 4294901760
    %1780 = vmatmul.mubr.f32.gmra.mrb[0].mxu0 %v1779
    %v1781 = vpop.f32.mrb[0].mxu0
    %v1782 = vadd.f32 %v1704, %v1781
    %v1783 = vpop.f32.mrb[0].mxu0
    %1784 = vmatprep.mubr.f32.mxu0 0.0
    %v1785 = vand.u32 %v1300, 4294901760
    %1786 = vmatmul.mubr.f32.gmra.mrb[0].mxu0 %v1785
    %v1787 = vpop.f32.mrb[0].mxu0
    %v1788 = vadd.f32 %v1710, %v1787
    %v1789 = vpop.f32.mrb[0].mxu0
    %1790 = vdwg.mxu0
    %v1791 = vadd.f32 %v1782, %v1788
    %v1792 = vxor.u32 %v1791, 2147483648
    %v1793 = vmul.f32 %v1792, 1.442695
    %v1794 = vpow.pop %v1793
    %v1795 = vadd.f32 %v1794, 1.0
    %v1796 = vrcp.pop %v1795
    %v1797 = vmul.f32 1.0, %v1796
    %v1798 = vlaneseq
    %v1799 = vshrl.u32 %v1798, 7
    %v1800 = vsub.s32 0, %v1799
    %v1801 = vrot.slane %v1797, %v1800
    %1803 = vbcast.lane.b32.xlu0 %v1801, 256
    %v1804 = vpop.permute.xlu0 %1803
    %s1806 = sor.u32 256, 8
    %1807 = vbcast.lane.b32.xlu0 %v1801, %s1806
    %v1808 = vpop.permute.xlu0 %1807
    %s1810 = sor.u32 256, 16
    %1811 = vbcast.lane.b32.xlu0 %v1801, %s1810
    %v1812 = vpop.permute.xlu0 %1811
    %s1814 = sor.u32 256, 24
    %1815 = vbcast.lane.b32.xlu0 %v1801, %s1814
    %v1816 = vpop.permute.xlu0 %1815
    %v1817 = vlaneseq
    %v1818 = vshrl.u32 %v1817, 7
    %v1819 = vsub.s32 1, %v1818
    %v1820 = vrot.slane %v1797, %v1819
    %1822 = vbcast.lane.b32.xlu0 %v1820, 256
    %v1823 = vpop.permute.xlu0 %1822
    %s1825 = sor.u32 256, 8
    %1826 = vbcast.lane.b32.xlu0 %v1820, %s1825
    %v1827 = vpop.permute.xlu0 %1826
    %s1829 = sor.u32 256, 16
    %1830 = vbcast.lane.b32.xlu0 %v1820, %s1829
    %v1831 = vpop.permute.xlu0 %1830
    %s1833 = sor.u32 256, 24
    %1834 = vbcast.lane.b32.xlu0 %v1820, %s1833
    %v1835 = vpop.permute.xlu0 %1834
    %v1836 = vlaneseq
    %v1837 = vshrl.u32 %v1836, 7
    %v1838 = vsub.s32 2, %v1837
    %v1839 = vrot.slane %v1797, %v1838
    %1841 = vbcast.lane.b32.xlu0 %v1839, 256
    %v1842 = vpop.permute.xlu0 %1841
    %s1844 = sor.u32 256, 8
    %1845 = vbcast.lane.b32.xlu0 %v1839, %s1844
    %v1846 = vpop.permute.xlu0 %1845
    %s1848 = sor.u32 256, 16
    %1849 = vbcast.lane.b32.xlu0 %v1839, %s1848
    %v1850 = vpop.permute.xlu0 %1849
    %s1852 = sor.u32 256, 24
    %1853 = vbcast.lane.b32.xlu0 %v1839, %s1852
    %v1854 = vpop.permute.xlu0 %1853
    %v1855 = vlaneseq
    %v1856 = vshrl.u32 %v1855, 7
    %v1857 = vsub.s32 3, %v1856
    %v1858 = vrot.slane %v1797, %v1857
    %1860 = vbcast.lane.b32.xlu0 %v1858, 256
    %v1861 = vpop.permute.xlu0 %1860
    %s1863 = sor.u32 256, 8
    %1864 = vbcast.lane.b32.xlu0 %v1858, %s1863
    %v1865 = vpop.permute.xlu0 %1864
    %s1867 = sor.u32 256, 16
    %1868 = vbcast.lane.b32.xlu0 %v1858, %s1867
    %v1869 = vpop.permute.xlu0 %1868
    %s1871 = sor.u32 256, 24
    %1872 = vbcast.lane.b32.xlu0 %v1858, %s1871
    %v1873 = vpop.permute.xlu0 %1872
    %v1874 = vlaneseq
    %v1875 = vshrl.u32 %v1874, 7
    %v1876 = vsub.s32 4, %v1875
    %v1877 = vrot.slane %v1797, %v1876
    %1879 = vbcast.lane.b32.xlu0 %v1877, 256
    %v1880 = vpop.permute.xlu0 %1879
    %s1882 = sor.u32 256, 8
    %1883 = vbcast.lane.b32.xlu0 %v1877, %s1882
    %v1884 = vpop.permute.xlu0 %1883
    %s1886 = sor.u32 256, 16
    %1887 = vbcast.lane.b32.xlu0 %v1877, %s1886
    %v1888 = vpop.permute.xlu0 %1887
    %s1890 = sor.u32 256, 24
    %1891 = vbcast.lane.b32.xlu0 %v1877, %s1890
    %v1892 = vpop.permute.xlu0 %1891
    %v1893 = vlaneseq
    %v1894 = vshrl.u32 %v1893, 7
    %v1895 = vsub.s32 5, %v1894
    %v1896 = vrot.slane %v1797, %v1895
    %1898 = vbcast.lane.b32.xlu0 %v1896, 256
    %v1899 = vpop.permute.xlu0 %1898
    %s1901 = sor.u32 256, 8
    %1902 = vbcast.lane.b32.xlu0 %v1896, %s1901
    %v1903 = vpop.permute.xlu0 %1902
    %s1905 = sor.u32 256, 16
    %1906 = vbcast.lane.b32.xlu0 %v1896, %s1905
    %v1907 = vpop.permute.xlu0 %1906
    %s1909 = sor.u32 256, 24
    %1910 = vbcast.lane.b32.xlu0 %v1896, %s1909
    %v1911 = vpop.permute.xlu0 %1910
    %v1912 = vlaneseq
    %v1913 = vshrl.u32 %v1912, 7
    %v1914 = vsub.s32 6, %v1913
    %v1915 = vrot.slane %v1797, %v1914
    %1917 = vbcast.lane.b32.xlu0 %v1915, 256
    %v1918 = vpop.permute.xlu0 %1917
    %s1920 = sor.u32 256, 8
    %1921 = vbcast.lane.b32.xlu0 %v1915, %s1920
    %v1922 = vpop.permute.xlu0 %1921
    %s1924 = sor.u32 256, 16
    %1925 = vbcast.lane.b32.xlu0 %v1915, %s1924
    %v1926 = vpop.permute.xlu0 %1925
    %s1928 = sor.u32 256, 24
    %1929 = vbcast.lane.b32.xlu0 %v1915, %s1928
    %v1930 = vpop.permute.xlu0 %1929
    %v1931 = vlaneseq
    %v1932 = vshrl.u32 %v1931, 7
    %v1933 = vsub.s32 7, %v1932
    %v1934 = vrot.slane %v1797, %v1933
    %1936 = vbcast.lane.b32.xlu0 %v1934, 256
    %v1937 = vpop.permute.xlu0 %1936
    %s1939 = sor.u32 256, 8
    %1940 = vbcast.lane.b32.xlu0 %v1934, %s1939
    %v1941 = vpop.permute.xlu0 %1940
    %s1943 = sor.u32 256, 16
    %1944 = vbcast.lane.b32.xlu0 %v1934, %s1943
    %v1945 = vpop.permute.xlu0 %1944
    %s1947 = sor.u32 256, 24
    %1948 = vbcast.lane.b32.xlu0 %v1934, %s1947
    %v1949 = vpop.permute.xlu0 %1948
    %v1950 = vmul.f32 %v56, %v1804
    %v1951 = vmul.f32 %v57, %v1804
    %v1952 = vmul.f32 %v58, %v1808
    %v1953 = vmul.f32 %v59, %v1808
    %v1954 = vmul.f32 %v60, %v1812
    %v1955 = vmul.f32 %v61, %v1812
    %v1956 = vmul.f32 %v62, %v1816
    %v1957 = vmul.f32 %v63, %v1816
    %v1958 = vmul.f32 %v64, %v1823
    %v1959 = vmul.f32 %v65, %v1823
    %v1960 = vmul.f32 %v66, %v1827
    %v1961 = vmul.f32 %v67, %v1827
    %v1962 = vmul.f32 %v68, %v1831
    %v1963 = vmul.f32 %v69, %v1831
    %v1964 = vmul.f32 %v70, %v1835
    %v1965 = vmul.f32 %v71, %v1835
    %v1966 = vmul.f32 %v72, %v1842
    %v1967 = vmul.f32 %v73, %v1842
    %v1968 = vmul.f32 %v74, %v1846
    %v1969 = vmul.f32 %v75, %v1846
    %v1970 = vmul.f32 %v76, %v1850
    %v1971 = vmul.f32 %v77, %v1850
    %v1972 = vmul.f32 %v78, %v1854
    %v1973 = vmul.f32 %v79, %v1854
    %v1974 = vmul.f32 %v80, %v1861
    %v1975 = vmul.f32 %v81, %v1861
    %v1976 = vmul.f32 %v82, %v1865
    %v1977 = vmul.f32 %v83, %v1865
    %v1978 = vmul.f32 %v84, %v1869
    %v1979 = vmul.f32 %v85, %v1869
    %v1980 = vmul.f32 %v86, %v1873
    %v1981 = vmul.f32 %v87, %v1873
    %v1982 = vmul.f32 %v88, %v1880
    %v1983 = vmul.f32 %v89, %v1880
    %v1984 = vmul.f32 %v90, %v1884
    %v1985 = vmul.f32 %v91, %v1884
    %v1986 = vmul.f32 %v92, %v1888
    %v1987 = vmul.f32 %v93, %v1888
    %v1988 = vmul.f32 %v94, %v1892
    %v1989 = vmul.f32 %v95, %v1892
    %v1990 = vmul.f32 %v96, %v1899
    %v1991 = vmul.f32 %v97, %v1899
    %v1992 = vmul.f32 %v98, %v1903
    %v1993 = vmul.f32 %v99, %v1903
    %v1994 = vmul.f32 %v100, %v1907
    %v1995 = vmul.f32 %v101, %v1907
    %v1996 = vmul.f32 %v102, %v1911
    %v1997 = vmul.f32 %v103, %v1911
    %v1998 = vmul.f32 %v104, %v1918
    %v1999 = vmul.f32 %v105, %v1918
    %v2000 = vmul.f32 %v106, %v1922
    %v2001 = vmul.f32 %v107, %v1922
    %v2002 = vmul.f32 %v108, %v1926
    %v2003 = vmul.f32 %v109, %v1926
    %v2004 = vmul.f32 %v110, %v1930
    %v2005 = vmul.f32 %v111, %v1930
    %v2006 = vmul.f32 %v112, %v1937
    %v2007 = vmul.f32 %v113, %v1937
    %v2008 = vmul.f32 %v114, %v1941
    %v2009 = vmul.f32 %v115, %v1941
    %v2010 = vmul.f32 %v116, %v1945
    %v2011 = vmul.f32 %v117, %v1945
    %v2012 = vmul.f32 %v118, %v1949
    %v2013 = vmul.f32 %v119, %v1949
    %v2014 = vmax.f32 %v1950, %v1952
    %v2015 = vmax.f32 %v2014, %v1954
    %v2016 = vmax.f32 %v2015, %v1956
    %v2017 = vrot.slane %v2016, 4
    %v2018 = vmax.f32 %v2016, %v2017
    %v2019 = vrot.slane %v2018, 2
    %v2020 = vmax.f32 %v2018, %v2019
    %v2021 = vrot.slane %v2020, 1
    %v2022 = vmax.f32 %v2020, %v2021
    %v2023 = vmax.f32 %v1951, %v1953
    %v2024 = vmax.f32 %v2023, %v1955
    %v2025 = vmax.f32 %v2024, %v1957
    %v2026 = vrot.slane %v2025, 4
    %v2027 = vmax.f32 %v2025, %v2026
    %v2028 = vrot.slane %v2027, 2
    %v2029 = vmax.f32 %v2027, %v2028
    %v2030 = vrot.slane %v2029, 1
    %v2031 = vmax.f32 %v2029, %v2030
    %v2032 = vmax.f32 %v1958, %v1960
    %v2033 = vmax.f32 %v2032, %v1962
    %v2034 = vmax.f32 %v2033, %v1964
    %v2035 = vrot.slane %v2034, 4
    %v2036 = vmax.f32 %v2034, %v2035
    %v2037 = vrot.slane %v2036, 2
    %v2038 = vmax.f32 %v2036, %v2037
    %v2039 = vrot.slane %v2038, 1
    %v2040 = vmax.f32 %v2038, %v2039
    %v2041 = vmax.f32 %v1959, %v1961
    %v2042 = vmax.f32 %v2041, %v1963
    %v2043 = vmax.f32 %v2042, %v1965
    %v2044 = vrot.slane %v2043, 4
    %v2045 = vmax.f32 %v2043, %v2044
    %v2046 = vrot.slane %v2045, 2
    %v2047 = vmax.f32 %v2045, %v2046
    %v2048 = vrot.slane %v2047, 1
    %v2049 = vmax.f32 %v2047, %v2048
    %v2050 = vmax.f32 %v1966, %v1968
    %v2051 = vmax.f32 %v2050, %v1970
    %v2052 = vmax.f32 %v2051, %v1972
    %v2053 = vrot.slane %v2052, 4
    %v2054 = vmax.f32 %v2052, %v2053
    %v2055 = vrot.slane %v2054, 2
    %v2056 = vmax.f32 %v2054, %v2055
    %v2057 = vrot.slane %v2056, 1
    %v2058 = vmax.f32 %v2056, %v2057
    %v2059 = vmax.f32 %v1967, %v1969
    %v2060 = vmax.f32 %v2059, %v1971
    %v2061 = vmax.f32 %v2060, %v1973
    %v2062 = vrot.slane %v2061, 4
    %v2063 = vmax.f32 %v2061, %v2062
    %v2064 = vrot.slane %v2063, 2
    %v2065 = vmax.f32 %v2063, %v2064
    %v2066 = vrot.slane %v2065, 1
    %v2067 = vmax.f32 %v2065, %v2066
    %v2068 = vmax.f32 %v1974, %v1976
    %v2069 = vmax.f32 %v2068, %v1978
    %v2070 = vmax.f32 %v2069, %v1980
    %v2071 = vrot.slane %v2070, 4
    %v2072 = vmax.f32 %v2070, %v2071
    %v2073 = vrot.slane %v2072, 2
    %v2074 = vmax.f32 %v2072, %v2073
    %v2075 = vrot.slane %v2074, 1
    %v2076 = vmax.f32 %v2074, %v2075
    %v2077 = vmax.f32 %v1975, %v1977
    %v2078 = vmax.f32 %v2077, %v1979
    %v2079 = vmax.f32 %v2078, %v1981
    %v2080 = vrot.slane %v2079, 4
    %v2081 = vmax.f32 %v2079, %v2080
    %v2082 = vrot.slane %v2081, 2
    %v2083 = vmax.f32 %v2081, %v2082
    %v2084 = vrot.slane %v2083, 1
    %v2085 = vmax.f32 %v2083, %v2084
    %v2086 = vmax.f32 %v1982, %v1984
    %v2087 = vmax.f32 %v2086, %v1986
    %v2088 = vmax.f32 %v2087, %v1988
    %v2089 = vrot.slane %v2088, 4
    %v2090 = vmax.f32 %v2088, %v2089
    %v2091 = vrot.slane %v2090, 2
    %v2092 = vmax.f32 %v2090, %v2091
    %v2093 = vrot.slane %v2092, 1
    %v2094 = vmax.f32 %v2092, %v2093
    %v2095 = vmax.f32 %v1983, %v1985
    %v2096 = vmax.f32 %v2095, %v1987
    %v2097 = vmax.f32 %v2096, %v1989
    %v2098 = vrot.slane %v2097, 4
    %v2099 = vmax.f32 %v2097, %v2098
    %v2100 = vrot.slane %v2099, 2
    %v2101 = vmax.f32 %v2099, %v2100
    %v2102 = vrot.slane %v2101, 1
    %v2103 = vmax.f32 %v2101, %v2102
    %v2104 = vmax.f32 %v1990, %v1992
    %v2105 = vmax.f32 %v2104, %v1994
    %v2106 = vmax.f32 %v2105, %v1996
    %v2107 = vrot.slane %v2106, 4
    %v2108 = vmax.f32 %v2106, %v2107
    %v2109 = vrot.slane %v2108, 2
    %v2110 = vmax.f32 %v2108, %v2109
    %v2111 = vrot.slane %v2110, 1
    %v2112 = vmax.f32 %v2110, %v2111
    %v2113 = vmax.f32 %v1991, %v1993
    %v2114 = vmax.f32 %v2113, %v1995
    %v2115 = vmax.f32 %v2114, %v1997
    %v2116 = vrot.slane %v2115, 4
    %v2117 = vmax.f32 %v2115, %v2116
    %v2118 = vrot.slane %v2117, 2
    %v2119 = vmax.f32 %v2117, %v2118
    %v2120 = vrot.slane %v2119, 1
    %v2121 = vmax.f32 %v2119, %v2120
    %v2122 = vmax.f32 %v1998, %v2000
    %v2123 = vmax.f32 %v2122, %v2002
    %v2124 = vmax.f32 %v2123, %v2004
    %v2125 = vrot.slane %v2124, 4
    %v2126 = vmax.f32 %v2124, %v2125
    %v2127 = vrot.slane %v2126, 2
    %v2128 = vmax.f32 %v2126, %v2127
    %v2129 = vrot.slane %v2128, 1
    %v2130 = vmax.f32 %v2128, %v2129
    %v2131 = vmax.f32 %v1999, %v2001
    %v2132 = vmax.f32 %v2131, %v2003
    %v2133 = vmax.f32 %v2132, %v2005
    %v2134 = vrot.slane %v2133, 4
    %v2135 = vmax.f32 %v2133, %v2134
    %v2136 = vrot.slane %v2135, 2
    %v2137 = vmax.f32 %v2135, %v2136
    %v2138 = vrot.slane %v2137, 1
    %v2139 = vmax.f32 %v2137, %v2138
    %v2140 = vmax.f32 %v2006, %v2008
    %v2141 = vmax.f32 %v2140, %v2010
    %v2142 = vmax.f32 %v2141, %v2012
    %v2143 = vrot.slane %v2142, 4
    %v2144 = vmax.f32 %v2142, %v2143
    %v2145 = vrot.slane %v2144, 2
    %v2146 = vmax.f32 %v2144, %v2145
    %v2147 = vrot.slane %v2146, 1
    %v2148 = vmax.f32 %v2146, %v2147
    %v2149 = vmax.f32 %v2007, %v2009
    %v2150 = vmax.f32 %v2149, %v2011
    %v2151 = vmax.f32 %v2150, %v2013
    %v2152 = vrot.slane %v2151, 4
    %v2153 = vmax.f32 %v2151, %v2152
    %v2154 = vrot.slane %v2153, 2
    %v2155 = vmax.f32 %v2153, %v2154
    %v2156 = vrot.slane %v2155, 1
    %v2157 = vmax.f32 %v2155, %v2156
    %v2158 = vadd.f32 %v1950, %v1952
    %v2159 = vadd.f32 %v2158, %v1954
    %v2160 = vadd.f32 %v2159, %v1956
    %v2161 = vrot.slane %v2160, 4
    %v2162 = vadd.f32 %v2160, %v2161
    %v2163 = vrot.slane %v2162, 2
    %v2164 = vadd.f32 %v2162, %v2163
    %v2165 = vrot.slane %v2164, 1
    %v2166 = vadd.f32 %v2164, %v2165
    %v2167 = vadd.f32 %v1951, %v1953
    %v2168 = vadd.f32 %v2167, %v1955
    %v2169 = vadd.f32 %v2168, %v1957
    %v2170 = vrot.slane %v2169, 4
    %v2171 = vadd.f32 %v2169, %v2170
    %v2172 = vrot.slane %v2171, 2
    %v2173 = vadd.f32 %v2171, %v2172
    %v2174 = vrot.slane %v2173, 1
    %v2175 = vadd.f32 %v2173, %v2174
    %v2176 = vadd.f32 %v1958, %v1960
    %v2177 = vadd.f32 %v2176, %v1962
    %v2178 = vadd.f32 %v2177, %v1964
    %v2179 = vrot.slane %v2178, 4
    %v2180 = vadd.f32 %v2178, %v2179
    %v2181 = vrot.slane %v2180, 2
    %v2182 = vadd.f32 %v2180, %v2181
    %v2183 = vrot.slane %v2182, 1
    %v2184 = vadd.f32 %v2182, %v2183
    %v2185 = vadd.f32 %v1959, %v1961
    %v2186 = vadd.f32 %v2185, %v1963
    %v2187 = vadd.f32 %v2186, %v1965
    %v2188 = vrot.slane %v2187, 4
    %v2189 = vadd.f32 %v2187, %v2188
    %v2190 = vrot.slane %v2189, 2
    %v2191 = vadd.f32 %v2189, %v2190
    %v2192 = vrot.slane %v2191, 1
    %v2193 = vadd.f32 %v2191, %v2192
    %v2194 = vadd.f32 %v1966, %v1968
    %v2195 = vadd.f32 %v2194, %v1970
    %v2196 = vadd.f32 %v2195, %v1972
    %v2197 = vrot.slane %v2196, 4
    %v2198 = vadd.f32 %v2196, %v2197
    %v2199 = vrot.slane %v2198, 2
    %v2200 = vadd.f32 %v2198, %v2199
    %v2201 = vrot.slane %v2200, 1
    %v2202 = vadd.f32 %v2200, %v2201
    %v2203 = vadd.f32 %v1967, %v1969
    %v2204 = vadd.f32 %v2203, %v1971
    %v2205 = vadd.f32 %v2204, %v1973
    %v2206 = vrot.slane %v2205, 4
    %v2207 = vadd.f32 %v2205, %v2206
    %v2208 = vrot.slane %v2207, 2
    %v2209 = vadd.f32 %v2207, %v2208
    %v2210 = vrot.slane %v2209, 1
    %v2211 = vadd.f32 %v2209, %v2210
    %v2212 = vadd.f32 %v1974, %v1976
    %v2213 = vadd.f32 %v2212, %v1978
    %v2214 = vadd.f32 %v2213, %v1980
    %v2215 = vrot.slane %v2214, 4
    %v2216 = vadd.f32 %v2214, %v2215
    %v2217 = vrot.slane %v2216, 2
    %v2218 = vadd.f32 %v2216, %v2217
    %v2219 = vrot.slane %v2218, 1
    %v2220 = vadd.f32 %v2218, %v2219
    %v2221 = vadd.f32 %v1975, %v1977
    %v2222 = vadd.f32 %v2221, %v1979
    %v2223 = vadd.f32 %v2222, %v1981
    %v2224 = vrot.slane %v2223, 4
    %v2225 = vadd.f32 %v2223, %v2224
    %v2226 = vrot.slane %v2225, 2
    %v2227 = vadd.f32 %v2225, %v2226
    %v2228 = vrot.slane %v2227, 1
    %v2229 = vadd.f32 %v2227, %v2228
    %v2230 = vadd.f32 %v1982, %v1984
    %v2231 = vadd.f32 %v2230, %v1986
    %v2232 = vadd.f32 %v2231, %v1988
    %v2233 = vrot.slane %v2232, 4
    %v2234 = vadd.f32 %v2232, %v2233
    %v2235 = vrot.slane %v2234, 2
    %v2236 = vadd.f32 %v2234, %v2235
    %v2237 = vrot.slane %v2236, 1
    %v2238 = vadd.f32 %v2236, %v2237
    %v2239 = vadd.f32 %v1983, %v1985
    %v2240 = vadd.f32 %v2239, %v1987
    %v2241 = vadd.f32 %v2240, %v1989
    %v2242 = vrot.slane %v2241, 4
    %v2243 = vadd.f32 %v2241, %v2242
    %v2244 = vrot.slane %v2243, 2
    %v2245 = vadd.f32 %v2243, %v2244
    %v2246 = vrot.slane %v2245, 1
    %v2247 = vadd.f32 %v2245, %v2246
    %v2248 = vadd.f32 %v1990, %v1992
    %v2249 = vadd.f32 %v2248, %v1994
    %v2250 = vadd.f32 %v2249, %v1996
    %v2251 = vrot.slane %v2250, 4
    %v2252 = vadd.f32 %v2250, %v2251
    %v2253 = vrot.slane %v2252, 2
    %v2254 = vadd.f32 %v2252, %v2253
    %v2255 = vrot.slane %v2254, 1
    %v2256 = vadd.f32 %v2254, %v2255
    %v2257 = vadd.f32 %v1991, %v1993
    %v2258 = vadd.f32 %v2257, %v1995
    %v2259 = vadd.f32 %v2258, %v1997
    %v2260 = vrot.slane %v2259, 4
    %v2261 = vadd.f32 %v2259, %v2260
    %v2262 = vrot.slane %v2261, 2
    %v2263 = vadd.f32 %v2261, %v2262
    %v2264 = vrot.slane %v2263, 1
    %v2265 = vadd.f32 %v2263, %v2264
    %v2266 = vadd.f32 %v1998, %v2000
    %v2267 = vadd.f32 %v2266, %v2002
    %v2268 = vadd.f32 %v2267, %v2004
    %v2269 = vrot.slane %v2268, 4
    %v2270 = vadd.f32 %v2268, %v2269
    %v2271 = vrot.slane %v2270, 2
    %v2272 = vadd.f32 %v2270, %v2271
    %v2273 = vrot.slane %v2272, 1
    %v2274 = vadd.f32 %v2272, %v2273
    %v2275 = vadd.f32 %v1999, %v2001
    %v2276 = vadd.f32 %v2275, %v2003
    %v2277 = vadd.f32 %v2276, %v2005
    %v2278 = vrot.slane %v2277, 4
    %v2279 = vadd.f32 %v2277, %v2278
    %v2280 = vrot.slane %v2279, 2
    %v2281 = vadd.f32 %v2279, %v2280
    %v2282 = vrot.slane %v2281, 1
    %v2283 = vadd.f32 %v2281, %v2282
    %v2284 = vadd.f32 %v2006, %v2008
    %v2285 = vadd.f32 %v2284, %v2010
    %v2286 = vadd.f32 %v2285, %v2012
    %v2287 = vrot.slane %v2286, 4
    %v2288 = vadd.f32 %v2286, %v2287
    %v2289 = vrot.slane %v2288, 2
    %v2290 = vadd.f32 %v2288, %v2289
    %v2291 = vrot.slane %v2290, 1
    %v2292 = vadd.f32 %v2290, %v2291
    %v2293 = vadd.f32 %v2007, %v2009
    %v2294 = vadd.f32 %v2293, %v2011
    %v2295 = vadd.f32 %v2294, %v2013
    %v2296 = vrot.slane %v2295, 4
    %v2297 = vadd.f32 %v2295, %v2296
    %v2298 = vrot.slane %v2297, 2
    %v2299 = vadd.f32 %v2297, %v2298
    %v2300 = vrot.slane %v2299, 1
    %v2301 = vadd.f32 %v2299, %v2300
    %v2302 = vmul.f32 %v2166, 0.03125
    %v2303 = vmul.f32 %v2175, 0.03125
    %v2304 = vmul.f32 %v2184, 0.03125
    %v2305 = vmul.f32 %v2193, 0.03125
    %v2306 = vmul.f32 %v2202, 0.03125
    %v2307 = vmul.f32 %v2211, 0.03125
    %v2308 = vmul.f32 %v2220, 0.03125
    %v2309 = vmul.f32 %v2229, 0.03125
    %v2310 = vmul.f32 %v2238, 0.03125
    %v2311 = vmul.f32 %v2247, 0.03125
    %v2312 = vmul.f32 %v2256, 0.03125
    %v2313 = vmul.f32 %v2265, 0.03125
    %v2314 = vmul.f32 %v2274, 0.03125
    %v2315 = vmul.f32 %v2283, 0.03125
    %v2316 = vmul.f32 %v2292, 0.03125
    %v2317 = vmul.f32 %v2301, 0.03125
    %v2334 = vsel %vm536, %v2040, %v2022
    %v2335 = vsel %vm538, %v2058, %v2334
    %v2336 = vsel %vm540, %v2076, %v2335
    %v2337 = vsel %vm542, %v2094, %v2336
    %v2338 = vsel %vm544, %v2112, %v2337
    %v2339 = vsel %vm546, %v2130, %v2338
    %v2340 = vsel %vm548, %v2148, %v2339
    %v2341 = vsel %vm536, %v2049, %v2031
    %v2342 = vsel %vm538, %v2067, %v2341
    %v2343 = vsel %vm540, %v2085, %v2342
    %v2344 = vsel %vm542, %v2103, %v2343
    %v2345 = vsel %vm544, %v2121, %v2344
    %v2346 = vsel %vm546, %v2139, %v2345
    %v2347 = vsel %vm548, %v2157, %v2346
    %v2366 = vsel %vm536, %v2304, %v2302
    %v2367 = vsel %vm538, %v2306, %v2366
    %v2368 = vsel %vm540, %v2308, %v2367
    %v2369 = vsel %vm542, %v2310, %v2368
    %v2370 = vsel %vm544, %v2312, %v2369
    %v2371 = vsel %vm546, %v2314, %v2370
    %v2372 = vsel %vm548, %v2316, %v2371
    %v2373 = vsel %vm536, %v2305, %v2303
    %v2374 = vsel %vm538, %v2307, %v2373
    %v2375 = vsel %vm540, %v2309, %v2374
    %v2376 = vsel %vm542, %v2311, %v2375
    %v2377 = vsel %vm544, %v2313, %v2376
    %v2378 = vsel %vm546, %v2315, %v2377
    %v2379 = vsel %vm548, %v2317, %v2378
    %v2382 = vld [vmem:[#allocation6] sm:$0xff]
    %v2383 = vld [vmem:[#allocation6 + $0x8] sm:$0xff]
    %v2384 = vld [vmem:[#allocation6 + $0x10] sm:$0xff]
    %v2385 = vld [vmem:[#allocation6 + $0x18] sm:$0xff]
    %v2386 = vld [vmem:[#allocation6 + $0x20] sm:$0xff]
    %v2387 = vld [vmem:[#allocation6 + $0x28] sm:$0xff]
    %v2388 = vld [vmem:[#allocation6 + $0x30] sm:$0xff]
    %v2389 = vld [vmem:[#allocation6 + $0x38] sm:$0xff]
    %v2390 = vld [vmem:[#allocation6 + $0x40] sm:$0xff]
    %v2391 = vld [vmem:[#allocation6 + $0x48] sm:$0xff]
    %v2392 = vld [vmem:[#allocation6 + $0x50] sm:$0xff]
    %v2393 = vld [vmem:[#allocation6 + $0x58] sm:$0xff]
    %v2394 = vld [vmem:[#allocation6 + $0x60] sm:$0xff]
    %v2395 = vld [vmem:[#allocation6 + $0x68] sm:$0xff]
    %v2396 = vld [vmem:[#allocation6 + $0x70] sm:$0xff]
    %v2397 = vld [vmem:[#allocation6 + $0x78] sm:$0xff]
    %v2398 = vld [vmem:[#allocation6 + $0x80] sm:$0xff]
    %v2399 = vld [vmem:[#allocation6 + $0x88] sm:$0xff]
    %v2400 = vld [vmem:[#allocation6 + $0x90] sm:$0xff]
    %v2401 = vld [vmem:[#allocation6 + $0x98] sm:$0xff]
    %v2402 = vld [vmem:[#allocation6 + $0xa0] sm:$0xff]
    %v2403 = vld [vmem:[#allocation6 + $0xa8] sm:$0xff]
    %v2404 = vld [vmem:[#allocation6 + $0xb0] sm:$0xff]
    %v2405 = vld [vmem:[#allocation6 + $0xb8] sm:$0xff]
    %v2406 = vld [vmem:[#allocation6 + $0xc0] sm:$0xff]
    %v2407 = vld [vmem:[#allocation6 + $0xc8] sm:$0xff]
    %v2408 = vld [vmem:[#allocation6 + $0xd0] sm:$0xff]
    %v2409 = vld [vmem:[#allocation6 + $0xd8] sm:$0xff]
    %v2410 = vld [vmem:[#allocation6 + $0xe0] sm:$0xff]
    %v2411 = vld [vmem:[#allocation6 + $0xe8] sm:$0xff]
    %v2412 = vld [vmem:[#allocation6 + $0xf0] sm:$0xff]
    %v2413 = vld [vmem:[#allocation6 + $0xf8] sm:$0xff]
    %v2414 = vld [vmem:[#allocation6 + $0x100] sm:$0xff]
    %v2415 = vld [vmem:[#allocation6 + $0x108] sm:$0xff]
    %v2416 = vld [vmem:[#allocation6 + $0x110] sm:$0xff]
    %v2417 = vld [vmem:[#allocation6 + $0x118] sm:$0xff]
    %v2418 = vld [vmem:[#allocation6 + $0x120] sm:$0xff]
    %v2419 = vld [vmem:[#allocation6 + $0x128] sm:$0xff]
    %v2420 = vld [vmem:[#allocation6 + $0x130] sm:$0xff]
    %v2421 = vld [vmem:[#allocation6 + $0x138] sm:$0xff]
    %v2422 = vld [vmem:[#allocation6 + $0x140] sm:$0xff]
    %v2423 = vld [vmem:[#allocation6 + $0x148] sm:$0xff]
    %v2424 = vld [vmem:[#allocation6 + $0x150] sm:$0xff]
    %v2425 = vld [vmem:[#allocation6 + $0x158] sm:$0xff]
    %v2426 = vld [vmem:[#allocation6 + $0x160] sm:$0xff]
    %v2427 = vld [vmem:[#allocation6 + $0x168] sm:$0xff]
    %v2428 = vld [vmem:[#allocation6 + $0x170] sm:$0xff]
    %v2429 = vld [vmem:[#allocation6 + $0x178] sm:$0xff]
    %v2430 = vld [vmem:[#allocation6 + $0x180] sm:$0xff]
    %v2431 = vld [vmem:[#allocation6 + $0x188] sm:$0xff]
    %v2432 = vld [vmem:[#allocation6 + $0x190] sm:$0xff]
    %v2433 = vld [vmem:[#allocation6 + $0x198] sm:$0xff]
    %v2434 = vld [vmem:[#allocation6 + $0x1a0] sm:$0xff]
    %v2435 = vld [vmem:[#allocation6 + $0x1a8] sm:$0xff]
    %v2436 = vld [vmem:[#allocation6 + $0x1b0] sm:$0xff]
    %v2437 = vld [vmem:[#allocation6 + $0x1b8] sm:$0xff]
    %v2438 = vld [vmem:[#allocation6 + $0x1c0] sm:$0xff]
    %v2439 = vld [vmem:[#allocation6 + $0x1c8] sm:$0xff]
    %v2440 = vld [vmem:[#allocation6 + $0x1d0] sm:$0xff]
    %v2441 = vld [vmem:[#allocation6 + $0x1d8] sm:$0xff]
    %v2442 = vld [vmem:[#allocation6 + $0x1e0] sm:$0xff]
    %v2443 = vld [vmem:[#allocation6 + $0x1e8] sm:$0xff]
    %v2444 = vld [vmem:[#allocation6 + $0x1f0] sm:$0xff]
    %v2445 = vld [vmem:[#allocation6 + $0x1f8] sm:$0xff]
    %v2446 = vld [vmem:[#allocation6 + $0x200] sm:$0xff]
    %v2447 = vld [vmem:[#allocation6 + $0x208] sm:$0xff]
    %v2448 = vld [vmem:[#allocation6 + $0x210] sm:$0xff]
    %v2449 = vld [vmem:[#allocation6 + $0x218] sm:$0xff]
    %v2450 = vld [vmem:[#allocation6 + $0x220] sm:$0xff]
    %v2451 = vld [vmem:[#allocation6 + $0x228] sm:$0xff]
    %v2452 = vld [vmem:[#allocation6 + $0x230] sm:$0xff]
    %v2453 = vld [vmem:[#allocation6 + $0x238] sm:$0xff]
    %v2454 = vld [vmem:[#allocation6 + $0x240] sm:$0xff]
    %v2455 = vld [vmem:[#allocation6 + $0x248] sm:$0xff]
    %v2456 = vld [vmem:[#allocation6 + $0x250] sm:$0xff]
    %v2457 = vld [vmem:[#allocation6 + $0x258] sm:$0xff]
    %v2458 = vld [vmem:[#allocation6 + $0x260] sm:$0xff]
    %v2459 = vld [vmem:[#allocation6 + $0x268] sm:$0xff]
    %v2460 = vld [vmem:[#allocation6 + $0x270] sm:$0xff]
    %v2461 = vld [vmem:[#allocation6 + $0x278] sm:$0xff]
    %v2462 = vld [vmem:[#allocation6 + $0x280] sm:$0xff]
    %v2463 = vld [vmem:[#allocation6 + $0x288] sm:$0xff]
    %v2464 = vld [vmem:[#allocation6 + $0x290] sm:$0xff]
    %v2465 = vld [vmem:[#allocation6 + $0x298] sm:$0xff]
    %v2466 = vld [vmem:[#allocation6 + $0x2a0] sm:$0xff]
    %v2467 = vld [vmem:[#allocation6 + $0x2a8] sm:$0xff]
    %v2468 = vld [vmem:[#allocation6 + $0x2b0] sm:$0xff]
    %v2469 = vld [vmem:[#allocation6 + $0x2b8] sm:$0xff]
    %v2470 = vld [vmem:[#allocation6 + $0x2c0] sm:$0xff]
    %v2471 = vld [vmem:[#allocation6 + $0x2c8] sm:$0xff]
    %v2472 = vld [vmem:[#allocation6 + $0x2d0] sm:$0xff]
    %v2473 = vld [vmem:[#allocation6 + $0x2d8] sm:$0xff]
    %v2474 = vld [vmem:[#allocation6 + $0x2e0] sm:$0xff]
    %v2475 = vld [vmem:[#allocation6 + $0x2e8] sm:$0xff]
    %v2476 = vld [vmem:[#allocation6 + $0x2f0] sm:$0xff]
    %v2477 = vld [vmem:[#allocation6 + $0x2f8] sm:$0xff]
    %v2478 = vld [vmem:[#allocation6 + $0x300] sm:$0xff]
    %v2479 = vld [vmem:[#allocation6 + $0x308] sm:$0xff]
    %v2480 = vld [vmem:[#allocation6 + $0x310] sm:$0xff]
    %v2481 = vld [vmem:[#allocation6 + $0x318] sm:$0xff]
    %v2482 = vld [vmem:[#allocation6 + $0x320] sm:$0xff]
    %v2483 = vld [vmem:[#allocation6 + $0x328] sm:$0xff]
    %v2484 = vld [vmem:[#allocation6 + $0x330] sm:$0xff]
    %v2485 = vld [vmem:[#allocation6 + $0x338] sm:$0xff]
    %v2486 = vld [vmem:[#allocation6 + $0x340] sm:$0xff]
    %v2487 = vld [vmem:[#allocation6 + $0x348] sm:$0xff]
    %v2488 = vld [vmem:[#allocation6 + $0x350] sm:$0xff]
    %v2489 = vld [vmem:[#allocation6 + $0x358] sm:$0xff]
    %v2490 = vld [vmem:[#allocation6 + $0x360] sm:$0xff]
    %v2491 = vld [vmem:[#allocation6 + $0x368] sm:$0xff]
    %v2492 = vld [vmem:[#allocation6 + $0x370] sm:$0xff]
    %v2493 = vld [vmem:[#allocation6 + $0x378] sm:$0xff]
    %v2494 = vld [vmem:[#allocation6 + $0x380] sm:$0xff]
    %v2495 = vld [vmem:[#allocation6 + $0x388] sm:$0xff]
    %v2496 = vld [vmem:[#allocation6 + $0x390] sm:$0xff]
    %v2497 = vld [vmem:[#allocation6 + $0x398] sm:$0xff]
    %v2498 = vld [vmem:[#allocation6 + $0x3a0] sm:$0xff]
    %v2499 = vld [vmem:[#allocation6 + $0x3a8] sm:$0xff]
    %v2500 = vld [vmem:[#allocation6 + $0x3b0] sm:$0xff]
    %v2501 = vld [vmem:[#allocation6 + $0x3b8] sm:$0xff]
    %v2502 = vld [vmem:[#allocation6 + $0x3c0] sm:$0xff]
    %v2503 = vld [vmem:[#allocation6 + $0x3c8] sm:$0xff]
    %v2504 = vld [vmem:[#allocation6 + $0x3d0] sm:$0xff]
    %v2505 = vld [vmem:[#allocation6 + $0x3d8] sm:$0xff]
    %v2506 = vld [vmem:[#allocation6 + $0x3e0] sm:$0xff]
    %v2507 = vld [vmem:[#allocation6 + $0x3e8] sm:$0xff]
    %v2508 = vld [vmem:[#allocation6 + $0x3f0] sm:$0xff]
    %v2509 = vld [vmem:[#allocation6 + $0x3f8] sm:$0xff]
    %s2510 = sld [smem:[#allocation2]]
    %v2511 = vstv %s2510
    %v2512 = vand.u32 %v2383, 4294901760
    %2513 = vmatprep.subr.mxu0 %v2512
    %v2514 = vand.u32 %v2382, 4294901760
    %2515 = vmatpush1.msra.mxu0 %v2514
    %v2516 = vand.u32 %v2385, 4294901760
    %2517 = vmatprep.subr.mxu0 %v2516
    %v2518 = vand.u32 %v2384, 4294901760
    %2519 = vmatpush1.msra.mxu0 %v2518
    %v2520 = vand.u32 %v2387, 4294901760
    %2521 = vmatprep.subr.mxu0 %v2520
    %v2522 = vand.u32 %v2386, 4294901760
    %2523 = vmatpush1.msra.mxu0 %v2522
    %v2524 = vand.u32 %v2389, 4294901760
    %2525 = vmatprep.subr.mxu0 %v2524
    %v2526 = vand.u32 %v2388, 4294901760
    %2527 = vmatpush1.msra.mxu0 %v2526
    %v2528 = vand.u32 %v2391, 4294901760
    %2529 = vmatprep.subr.mxu0 %v2528
    %v2530 = vand.u32 %v2390, 4294901760
    %2531 = vmatpush1.msra.mxu0 %v2530
    %v2532 = vand.u32 %v2393, 4294901760
    %2533 = vmatprep.subr.mxu0 %v2532
    %v2534 = vand.u32 %v2392, 4294901760
    %2535 = vmatpush1.msra.mxu0 %v2534
    %v2536 = vand.u32 %v2395, 4294901760
    %2537 = vmatprep.subr.mxu0 %v2536
    %v2538 = vand.u32 %v2394, 4294901760
    %2539 = vmatpush1.msra.mxu0 %v2538
    %v2540 = vand.u32 %v2397, 4294901760
    %2541 = vmatprep.subr.mxu0 %v2540
    %v2542 = vand.u32 %v2396, 4294901760
    %2543 = vmatpush1.msra.mxu0 %v2542
    %v2544 = vand.u32 %v2399, 4294901760
    %2545 = vmatprep.subr.mxu0 %v2544
    %v2546 = vand.u32 %v2398, 4294901760
    %2547 = vmatpush1.msra.mxu0 %v2546
    %v2548 = vand.u32 %v2401, 4294901760
    %2549 = vmatprep.subr.mxu0 %v2548
    %v2550 = vand.u32 %v2400, 4294901760
    %2551 = vmatpush1.msra.mxu0 %v2550
    %v2552 = vand.u32 %v2403, 4294901760
    %2553 = vmatprep.subr.mxu0 %v2552
    %v2554 = vand.u32 %v2402, 4294901760
    %2555 = vmatpush1.msra.mxu0 %v2554
    %v2556 = vand.u32 %v2405, 4294901760
    %2557 = vmatprep.subr.mxu0 %v2556
    %v2558 = vand.u32 %v2404, 4294901760
    %2559 = vmatpush1.msra.mxu0 %v2558
    %v2560 = vand.u32 %v2407, 4294901760
    %2561 = vmatprep.subr.mxu0 %v2560
    %v2562 = vand.u32 %v2406, 4294901760
    %2563 = vmatpush1.msra.mxu0 %v2562
    %v2564 = vand.u32 %v2409, 4294901760
    %2565 = vmatprep.subr.mxu0 %v2564
    %v2566 = vand.u32 %v2408, 4294901760
    %2567 = vmatpush1.msra.mxu0 %v2566
    %v2568 = vand.u32 %v2411, 4294901760
    %2569 = vmatprep.subr.mxu0 %v2568
    %v2570 = vand.u32 %v2410, 4294901760
    %2571 = vmatpush1.msra.mxu0 %v2570
    %v2572 = vand.u32 %v2413, 4294901760
    %2573 = vmatprep.subr.mxu0 %v2572
    %v2574 = vand.u32 %v2412, 4294901760
    %2575 = vmatpush1.msra.mxu0 %v2574
    %v2576 = vand.u32 %v2415, 4294901760
    %2577 = vmatprep.subr.mxu0 %v2576
    %v2578 = vand.u32 %v2414, 4294901760
    %2579 = vmatpush1.msra.mxu0 %v2578
    %v2580 = vand.u32 %v2417, 4294901760
    %2581 = vmatprep.subr.mxu0 %v2580
    %v2582 = vand.u32 %v2416, 4294901760
    %2583 = vmatpush1.msra.mxu0 %v2582
    %v2584 = vand.u32 %v2419, 4294901760
    %2585 = vmatprep.subr.mxu0 %v2584
    %v2586 = vand.u32 %v2418, 4294901760
    %2587 = vmatpush1.msra.mxu0 %v2586
    %v2588 = vand.u32 %v2421, 4294901760
    %2589 = vmatprep.subr.mxu0 %v2588
    %v2590 = vand.u32 %v2420, 4294901760
    %2591 = vmatpush1.msra.mxu0 %v2590
    %v2592 = vand.u32 %v2423, 4294901760
    %2593 = vmatprep.subr.mxu0 %v2592
    %v2594 = vand.u32 %v2422, 4294901760
    %2595 = vmatpush1.msra.mxu0 %v2594
    %v2596 = vand.u32 %v2425, 4294901760
    %2597 = vmatprep.subr.mxu0 %v2596
    %v2598 = vand.u32 %v2424, 4294901760
    %2599 = vmatpush1.msra.mxu0 %v2598
    %v2600 = vand.u32 %v2427, 4294901760
    %2601 = vmatprep.subr.mxu0 %v2600
    %v2602 = vand.u32 %v2426, 4294901760
    %2603 = vmatpush1.msra.mxu0 %v2602
    %v2604 = vand.u32 %v2429, 4294901760
    %2605 = vmatprep.subr.mxu0 %v2604
    %v2606 = vand.u32 %v2428, 4294901760
    %2607 = vmatpush1.msra.mxu0 %v2606
    %v2608 = vand.u32 %v2431, 4294901760
    %2609 = vmatprep.subr.mxu0 %v2608
    %v2610 = vand.u32 %v2430, 4294901760
    %2611 = vmatpush1.msra.mxu0 %v2610
    %v2612 = vand.u32 %v2433, 4294901760
    %2613 = vmatprep.subr.mxu0 %v2612
    %v2614 = vand.u32 %v2432, 4294901760
    %2615 = vmatpush1.msra.mxu0 %v2614
    %v2616 = vand.u32 %v2435, 4294901760
    %2617 = vmatprep.subr.mxu0 %v2616
    %v2618 = vand.u32 %v2434, 4294901760
    %2619 = vmatpush1.msra.mxu0 %v2618
    %v2620 = vand.u32 %v2437, 4294901760
    %2621 = vmatprep.subr.mxu0 %v2620
    %v2622 = vand.u32 %v2436, 4294901760
    %2623 = vmatpush1.msra.mxu0 %v2622
    %v2624 = vand.u32 %v2439, 4294901760
    %2625 = vmatprep.subr.mxu0 %v2624
    %v2626 = vand.u32 %v2438, 4294901760
    %2627 = vmatpush1.msra.mxu0 %v2626
    %v2628 = vand.u32 %v2441, 4294901760
    %2629 = vmatprep.subr.mxu0 %v2628
    %v2630 = vand.u32 %v2440, 4294901760
    %2631 = vmatpush1.msra.mxu0 %v2630
    %v2632 = vand.u32 %v2443, 4294901760
    %2633 = vmatprep.subr.mxu0 %v2632
    %v2634 = vand.u32 %v2442, 4294901760
    %2635 = vmatpush1.msra.mxu0 %v2634
    %v2636 = vand.u32 %v2445, 4294901760
    %2637 = vmatprep.subr.mxu0 %v2636
    %v2638 = vand.u32 %v2444, 4294901760
    %2639 = vmatpush1.msra.mxu0 %v2638
    %v2640 = vand.u32 %v2347, 4294901760
    %v2641 = vsub.f32 %v2347, %v2640
    %v2642 = vand.u32 %v2641, 4294901760
    %v2643 = vsub.f32 %v2641, %v2642
    %v2644 = vand.u32 %v2643, 4294901760
    %2645 = vmatprep.mubr.f32.mxu0 %v2644
    %v2646 = vand.u32 %v2340, 4294901760
    %v2647 = vsub.f32 %v2340, %v2646
    %v2648 = vand.u32 %v2647, 4294901760
    %v2649 = vsub.f32 %v2647, %v2648
    %v2650 = vand.u32 %v2649, 4294901760
    %2651 = vmatmul.mubr.f32.gmra.mrb[0].mxu0 %v2650
    %v2652 = vpop.f32.mrb[0].mxu0
    %v2653 = vadd.f32 %v2511, %v2652
    %v2654 = vpop.f32.mrb[0].mxu0
    %v2655 = vadd.f32 %v2511, %v2654
    %2656 = vdwg.mxu0
    %v2657 = vand.u32 %v2383, 4294901760
    %v2658 = vsub.f32 %v2383, %v2657
    %v2659 = vand.u32 %v2658, 4294901760
    %v2660 = vsub.f32 %v2658, %v2659
    %v2661 = vand.u32 %v2660, 4294901760
    %2662 = vmatprep.subr.mxu0 %v2661
    %v2663 = vand.u32 %v2382, 4294901760
    %v2664 = vsub.f32 %v2382, %v2663
    %v2665 = vand.u32 %v2664, 4294901760
    %v2666 = vsub.f32 %v2664, %v2665
    %v2667 = vand.u32 %v2666, 4294901760
    %2668 = vmatpush1.msra.mxu0 %v2667
    %v2669 = vand.u32 %v2385, 4294901760
    %v2670 = vsub.f32 %v2385, %v2669
    %v2671 = vand.u32 %v2670, 4294901760
    %v2672 = vsub.f32 %v2670, %v2671
    %v2673 = vand.u32 %v2672, 4294901760
    %2674 = vmatprep.subr.mxu0 %v2673
    %v2675 = vand.u32 %v2384, 4294901760
    %v2676 = vsub.f32 %v2384, %v2675
    %v2677 = vand.u32 %v2676, 4294901760
    %v2678 = vsub.f32 %v2676, %v2677
    %v2679 = vand.u32 %v2678, 4294901760
    %2680 = vmatpush1.msra.mxu0 %v2679
    %v2681 = vand.u32 %v2387, 4294901760
    %v2682 = vsub.f32 %v2387, %v2681
    %v2683 = vand.u32 %v2682, 4294901760
    %v2684 = vsub.f32 %v2682, %v2683
    %v2685 = vand.u32 %v2684, 4294901760
    %2686 = vmatprep.subr.mxu0 %v2685
    %v2687 = vand.u32 %v2386, 4294901760
    %v2688 = vsub.f32 %v2386, %v2687
    %v2689 = vand.u32 %v2688, 4294901760
    %v2690 = vsub.f32 %v2688, %v2689
    %v2691 = vand.u32 %v2690, 4294901760
    %2692 = vmatpush1.msra.mxu0 %v2691
    %v2693 = vand.u32 %v2389, 4294901760
    %v2694 = vsub.f32 %v2389, %v2693
    %v2695 = vand.u32 %v2694, 4294901760
    %v2696 = vsub.f32 %v2694, %v2695
    %v2697 = vand.u32 %v2696, 4294901760
    %2698 = vmatprep.subr.mxu0 %v2697
    %v2699 = vand.u32 %v2388, 4294901760
    %v2700 = vsub.f32 %v2388, %v2699
    %v2701 = vand.u32 %v2700, 4294901760
    %v2702 = vsub.f32 %v2700, %v2701
    %v2703 = vand.u32 %v2702, 4294901760
    %2704 = vmatpush1.msra.mxu0 %v2703
    %v2705 = vand.u32 %v2391, 4294901760
    %v2706 = vsub.f32 %v2391, %v2705
    %v2707 = vand.u32 %v2706, 4294901760
    %v2708 = vsub.f32 %v2706, %v2707
    %v2709 = vand.u32 %v2708, 4294901760
    %2710 = vmatprep.subr.mxu0 %v2709
    %v2711 = vand.u32 %v2390, 4294901760
    %v2712 = vsub.f32 %v2390, %v2711
    %v2713 = vand.u32 %v2712, 4294901760
    %v2714 = vsub.f32 %v2712, %v2713
    %v2715 = vand.u32 %v2714, 4294901760
    %2716 = vmatpush1.msra.mxu0 %v2715
    %v2717 = vand.u32 %v2393, 4294901760
    %v2718 = vsub.f32 %v2393, %v2717
    %v2719 = vand.u32 %v2718, 4294901760
    %v2720 = vsub.f32 %v2718, %v2719
    %v2721 = vand.u32 %v2720, 4294901760
    %2722 = vmatprep.subr.mxu0 %v2721
    %v2723 = vand.u32 %v2392, 4294901760
    %v2724 = vsub.f32 %v2392, %v2723
    %v2725 = vand.u32 %v2724, 4294901760
    %v2726 = vsub.f32 %v2724, %v2725
    %v2727 = vand.u32 %v2726, 4294901760
    %2728 = vmatpush1.msra.mxu0 %v2727
    %v2729 = vand.u32 %v2395, 4294901760
    %v2730 = vsub.f32 %v2395, %v2729
    %v2731 = vand.u32 %v2730, 4294901760
    %v2732 = vsub.f32 %v2730, %v2731
    %v2733 = vand.u32 %v2732, 4294901760
    %2734 = vmatprep.subr.mxu0 %v2733
    %v2735 = vand.u32 %v2394, 4294901760
    %v2736 = vsub.f32 %v2394, %v2735
    %v2737 = vand.u32 %v2736, 4294901760
    %v2738 = vsub.f32 %v2736, %v2737
    %v2739 = vand.u32 %v2738, 4294901760
    %2740 = vmatpush1.msra.mxu0 %v2739
    %v2741 = vand.u32 %v2397, 4294901760
    %v2742 = vsub.f32 %v2397, %v2741
    %v2743 = vand.u32 %v2742, 4294901760
    %v2744 = vsub.f32 %v2742, %v2743
    %v2745 = vand.u32 %v2744, 4294901760
    %2746 = vmatprep.subr.mxu0 %v2745
    %v2747 = vand.u32 %v2396, 4294901760
    %v2748 = vsub.f32 %v2396, %v2747
    %v2749 = vand.u32 %v2748, 4294901760
    %v2750 = vsub.f32 %v2748, %v2749
    %v2751 = vand.u32 %v2750, 4294901760
    %2752 = vmatpush1.msra.mxu0 %v2751
    %v2753 = vand.u32 %v2399, 4294901760
    %v2754 = vsub.f32 %v2399, %v2753
    %v2755 = vand.u32 %v2754, 4294901760
    %v2756 = vsub.f32 %v2754, %v2755
    %v2757 = vand.u32 %v2756, 4294901760
    %2758 = vmatprep.subr.mxu0 %v2757
    %v2759 = vand.u32 %v2398, 4294901760
    %v2760 = vsub.f32 %v2398, %v2759
    %v2761 = vand.u32 %v2760, 4294901760
    %v2762 = vsub.f32 %v2760, %v2761
    %v2763 = vand.u32 %v2762, 4294901760
    %2764 = vmatpush1.msra.mxu0 %v2763
    %v2765 = vand.u32 %v2401, 4294901760
    %v2766 = vsub.f32 %v2401, %v2765
    %v2767 = vand.u32 %v2766, 4294901760
    %v2768 = vsub.f32 %v2766, %v2767
    %v2769 = vand.u32 %v2768, 4294901760
    %2770 = vmatprep.subr.mxu0 %v2769
    %v2771 = vand.u32 %v2400, 4294901760
    %v2772 = vsub.f32 %v2400, %v2771
    %v2773 = vand.u32 %v2772, 4294901760
    %v2774 = vsub.f32 %v2772, %v2773
    %v2775 = vand.u32 %v2774, 4294901760
    %2776 = vmatpush1.msra.mxu0 %v2775
    %v2777 = vand.u32 %v2403, 4294901760
    %v2778 = vsub.f32 %v2403, %v2777
    %v2779 = vand.u32 %v2778, 4294901760
    %v2780 = vsub.f32 %v2778, %v2779
    %v2781 = vand.u32 %v2780, 4294901760
    %2782 = vmatprep.subr.mxu0 %v2781
    %v2783 = vand.u32 %v2402, 4294901760
    %v2784 = vsub.f32 %v2402, %v2783
    %v2785 = vand.u32 %v2784, 4294901760
    %v2786 = vsub.f32 %v2784, %v2785
    %v2787 = vand.u32 %v2786, 4294901760
    %2788 = vmatpush1.msra.mxu0 %v2787
    %v2789 = vand.u32 %v2405, 4294901760
    %v2790 = vsub.f32 %v2405, %v2789
    %v2791 = vand.u32 %v2790, 4294901760
    %v2792 = vsub.f32 %v2790, %v2791
    %v2793 = vand.u32 %v2792, 4294901760
    %2794 = vmatprep.subr.mxu0 %v2793
    %v2795 = vand.u32 %v2404, 4294901760
    %v2796 = vsub.f32 %v2404, %v2795
    %v2797 = vand.u32 %v2796, 4294901760
    %v2798 = vsub.f32 %v2796, %v2797
    %v2799 = vand.u32 %v2798, 4294901760
    %2800 = vmatpush1.msra.mxu0 %v2799
    %v2801 = vand.u32 %v2407, 4294901760
    %v2802 = vsub.f32 %v2407, %v2801
    %v2803 = vand.u32 %v2802, 4294901760
    %v2804 = vsub.f32 %v2802, %v2803
    %v2805 = vand.u32 %v2804, 4294901760
    %2806 = vmatprep.subr.mxu0 %v2805
    %v2807 = vand.u32 %v2406, 4294901760
    %v2808 = vsub.f32 %v2406, %v2807
    %v2809 = vand.u32 %v2808, 4294901760
    %v2810 = vsub.f32 %v2808, %v2809
    %v2811 = vand.u32 %v2810, 4294901760
    %2812 = vmatpush1.msra.mxu0 %v2811
    %v2813 = vand.u32 %v2409, 4294901760
    %v2814 = vsub.f32 %v2409, %v2813
    %v2815 = vand.u32 %v2814, 4294901760
    %v2816 = vsub.f32 %v2814, %v2815
    %v2817 = vand.u32 %v2816, 4294901760
    %2818 = vmatprep.subr.mxu0 %v2817
    %v2819 = vand.u32 %v2408, 4294901760
    %v2820 = vsub.f32 %v2408, %v2819
    %v2821 = vand.u32 %v2820, 4294901760
    %v2822 = vsub.f32 %v2820, %v2821
    %v2823 = vand.u32 %v2822, 4294901760
    %2824 = vmatpush1.msra.mxu0 %v2823
    %v2825 = vand.u32 %v2411, 4294901760
    %v2826 = vsub.f32 %v2411, %v2825
    %v2827 = vand.u32 %v2826, 4294901760
    %v2828 = vsub.f32 %v2826, %v2827
    %v2829 = vand.u32 %v2828, 4294901760
    %2830 = vmatprep.subr.mxu0 %v2829
    %v2831 = vand.u32 %v2410, 4294901760
    %v2832 = vsub.f32 %v2410, %v2831
    %v2833 = vand.u32 %v2832, 4294901760
    %v2834 = vsub.f32 %v2832, %v2833
    %v2835 = vand.u32 %v2834, 4294901760
    %2836 = vmatpush1.msra.mxu0 %v2835
    %v2837 = vand.u32 %v2413, 4294901760
    %v2838 = vsub.f32 %v2413, %v2837
    %v2839 = vand.u32 %v2838, 4294901760
    %v2840 = vsub.f32 %v2838, %v2839
    %v2841 = vand.u32 %v2840, 4294901760
    %2842 = vmatprep.subr.mxu0 %v2841
    %v2843 = vand.u32 %v2412, 4294901760
    %v2844 = vsub.f32 %v2412, %v2843
    %v2845 = vand.u32 %v2844, 4294901760
    %v2846 = vsub.f32 %v2844, %v2845
    %v2847 = vand.u32 %v2846, 4294901760
    %2848 = vmatpush1.msra.mxu0 %v2847
    %v2849 = vand.u32 %v2415, 4294901760
    %v2850 = vsub.f32 %v2415, %v2849
    %v2851 = vand.u32 %v2850, 4294901760
    %v2852 = vsub.f32 %v2850, %v2851
    %v2853 = vand.u32 %v2852, 4294901760
    %2854 = vmatprep.subr.mxu0 %v2853
    %v2855 = vand.u32 %v2414, 4294901760
    %v2856 = vsub.f32 %v2414, %v2855
    %v2857 = vand.u32 %v2856, 4294901760
    %v2858 = vsub.f32 %v2856, %v2857
    %v2859 = vand.u32 %v2858, 4294901760
    %2860 = vmatpush1.msra.mxu0 %v2859
    %v2861 = vand.u32 %v2417, 4294901760
    %v2862 = vsub.f32 %v2417, %v2861
    %v2863 = vand.u32 %v2862, 4294901760
    %v2864 = vsub.f32 %v2862, %v2863
    %v2865 = vand.u32 %v2864, 4294901760
    %2866 = vmatprep.subr.mxu0 %v2865
    %v2867 = vand.u32 %v2416, 4294901760
    %v2868 = vsub.f32 %v2416, %v2867
    %v2869 = vand.u32 %v2868, 4294901760
    %v2870 = vsub.f32 %v2868, %v2869
    %v2871 = vand.u32 %v2870, 4294901760
    %2872 = vmatpush1.msra.mxu0 %v2871
    %v2873 = vand.u32 %v2419, 4294901760
    %v2874 = vsub.f32 %v2419, %v2873
    %v2875 = vand.u32 %v2874, 4294901760
    %v2876 = vsub.f32 %v2874, %v2875
    %v2877 = vand.u32 %v2876, 4294901760
    %2878 = vmatprep.subr.mxu0 %v2877
    %v2879 = vand.u32 %v2418, 4294901760
    %v2880 = vsub.f32 %v2418, %v2879
    %v2881 = vand.u32 %v2880, 4294901760
    %v2882 = vsub.f32 %v2880, %v2881
    %v2883 = vand.u32 %v2882, 4294901760
    %2884 = vmatpush1.msra.mxu0 %v2883
    %v2885 = vand.u32 %v2421, 4294901760
    %v2886 = vsub.f32 %v2421, %v2885
    %v2887 = vand.u32 %v2886, 4294901760
    %v2888 = vsub.f32 %v2886, %v2887
    %v2889 = vand.u32 %v2888, 4294901760
    %2890 = vmatprep.subr.mxu0 %v2889
    %v2891 = vand.u32 %v2420, 4294901760
    %v2892 = vsub.f32 %v2420, %v2891
    %v2893 = vand.u32 %v2892, 4294901760
    %v2894 = vsub.f32 %v2892, %v2893
    %v2895 = vand.u32 %v2894, 4294901760
    %2896 = vmatpush1.msra.mxu0 %v2895
    %v2897 = vand.u32 %v2423, 4294901760
    %v2898 = vsub.f32 %v2423, %v2897
    %v2899 = vand.u32 %v2898, 4294901760
    %v2900 = vsub.f32 %v2898, %v2899
    %v2901 = vand.u32 %v2900, 4294901760
    %2902 = vmatprep.subr.mxu0 %v2901
    %v2903 = vand.u32 %v2422, 4294901760
    %v2904 = vsub.f32 %v2422, %v2903
    %v2905 = vand.u32 %v2904, 4294901760
    %v2906 = vsub.f32 %v2904, %v2905
    %v2907 = vand.u32 %v2906, 4294901760
    %2908 = vmatpush1.msra.mxu0 %v2907
    %v2909 = vand.u32 %v2425, 4294901760
    %v2910 = vsub.f32 %v2425, %v2909
    %v2911 = vand.u32 %v2910, 4294901760
    %v2912 = vsub.f32 %v2910, %v2911
    %v2913 = vand.u32 %v2912, 4294901760
    %2914 = vmatprep.subr.mxu0 %v2913
    %v2915 = vand.u32 %v2424, 4294901760
    %v2916 = vsub.f32 %v2424, %v2915
    %v2917 = vand.u32 %v2916, 4294901760
    %v2918 = vsub.f32 %v2916, %v2917
    %v2919 = vand.u32 %v2918, 4294901760
    %2920 = vmatpush1.msra.mxu0 %v2919
    %v2921 = vand.u32 %v2427, 4294901760
    %v2922 = vsub.f32 %v2427, %v2921
    %v2923 = vand.u32 %v2922, 4294901760
    %v2924 = vsub.f32 %v2922, %v2923
    %v2925 = vand.u32 %v2924, 4294901760
    %2926 = vmatprep.subr.mxu0 %v2925
    %v2927 = vand.u32 %v2426, 4294901760
    %v2928 = vsub.f32 %v2426, %v2927
    %v2929 = vand.u32 %v2928, 4294901760
    %v2930 = vsub.f32 %v2928, %v2929
    %v2931 = vand.u32 %v2930, 4294901760
    %2932 = vmatpush1.msra.mxu0 %v2931
    %v2933 = vand.u32 %v2429, 4294901760
    %v2934 = vsub.f32 %v2429, %v2933
    %v2935 = vand.u32 %v2934, 4294901760
    %v2936 = vsub.f32 %v2934, %v2935
    %v2937 = vand.u32 %v2936, 4294901760
    %2938 = vmatprep.subr.mxu0 %v2937
    %v2939 = vand.u32 %v2428, 4294901760
    %v2940 = vsub.f32 %v2428, %v2939
    %v2941 = vand.u32 %v2940, 4294901760
    %v2942 = vsub.f32 %v2940, %v2941
    %v2943 = vand.u32 %v2942, 4294901760
    %2944 = vmatpush1.msra.mxu0 %v2943
    %v2945 = vand.u32 %v2431, 4294901760
    %v2946 = vsub.f32 %v2431, %v2945
    %v2947 = vand.u32 %v2946, 4294901760
    %v2948 = vsub.f32 %v2946, %v2947
    %v2949 = vand.u32 %v2948, 4294901760
    %2950 = vmatprep.subr.mxu0 %v2949
    %v2951 = vand.u32 %v2430, 4294901760
    %v2952 = vsub.f32 %v2430, %v2951
    %v2953 = vand.u32 %v2952, 4294901760
    %v2954 = vsub.f32 %v2952, %v2953
    %v2955 = vand.u32 %v2954, 4294901760
    %2956 = vmatpush1.msra.mxu0 %v2955
    %v2957 = vand.u32 %v2433, 4294901760
    %v2958 = vsub.f32 %v2433, %v2957
    %v2959 = vand.u32 %v2958, 4294901760
    %v2960 = vsub.f32 %v2958, %v2959
    %v2961 = vand.u32 %v2960, 4294901760
    %2962 = vmatprep.subr.mxu0 %v2961
    %v2963 = vand.u32 %v2432, 4294901760
    %v2964 = vsub.f32 %v2432, %v2963
    %v2965 = vand.u32 %v2964, 4294901760
    %v2966 = vsub.f32 %v2964, %v2965
    %v2967 = vand.u32 %v2966, 4294901760
    %2968 = vmatpush1.msra.mxu0 %v2967
    %v2969 = vand.u32 %v2435, 4294901760
    %v2970 = vsub.f32 %v2435, %v2969
    %v2971 = vand.u32 %v2970, 4294901760
    %v2972 = vsub.f32 %v2970, %v2971
    %v2973 = vand.u32 %v2972, 4294901760
    %2974 = vmatprep.subr.mxu0 %v2973
    %v2975 = vand.u32 %v2434, 4294901760
    %v2976 = vsub.f32 %v2434, %v2975
    %v2977 = vand.u32 %v2976, 4294901760
    %v2978 = vsub.f32 %v2976, %v2977
    %v2979 = vand.u32 %v2978, 4294901760
    %2980 = vmatpush1.msra.mxu0 %v2979
    %v2981 = vand.u32 %v2437, 4294901760
    %v2982 = vsub.f32 %v2437, %v2981
    %v2983 = vand.u32 %v2982, 4294901760
    %v2984 = vsub.f32 %v2982, %v2983
    %v2985 = vand.u32 %v2984, 4294901760
    %2986 = vmatprep.subr.mxu0 %v2985
    %v2987 = vand.u32 %v2436, 4294901760
    %v2988 = vsub.f32 %v2436, %v2987
    %v2989 = vand.u32 %v2988, 4294901760
    %v2990 = vsub.f32 %v2988, %v2989
    %v2991 = vand.u32 %v2990, 4294901760
    %2992 = vmatpush1.msra.mxu0 %v2991
    %v2993 = vand.u32 %v2439, 4294901760
    %v2994 = vsub.f32 %v2439, %v2993
    %v2995 = vand.u32 %v2994, 4294901760
    %v2996 = vsub.f32 %v2994, %v2995
    %v2997 = vand.u32 %v2996, 4294901760
    %2998 = vmatprep.subr.mxu0 %v2997
    %v2999 = vand.u32 %v2438, 4294901760
    %v3000 = vsub.f32 %v2438, %v2999
    %v3001 = vand.u32 %v3000, 4294901760
    %v3002 = vsub.f32 %v3000, %v3001
    %v3003 = vand.u32 %v3002, 4294901760
    %3004 = vmatpush1.msra.mxu0 %v3003
    %v3005 = vand.u32 %v2441, 4294901760
    %v3006 = vsub.f32 %v2441, %v3005
    %v3007 = vand.u32 %v3006, 4294901760
    %v3008 = vsub.f32 %v3006, %v3007
    %v3009 = vand.u32 %v3008, 4294901760
    %3010 = vmatprep.subr.mxu0 %v3009
    %v3011 = vand.u32 %v2440, 4294901760
    %v3012 = vsub.f32 %v2440, %v3011
    %v3013 = vand.u32 %v3012, 4294901760
    %v3014 = vsub.f32 %v3012, %v3013
    %v3015 = vand.u32 %v3014, 4294901760
    %3016 = vmatpush1.msra.mxu0 %v3015
    %v3017 = vand.u32 %v2443, 4294901760
    %v3018 = vsub.f32 %v2443, %v3017
    %v3019 = vand.u32 %v3018, 4294901760
    %v3020 = vsub.f32 %v3018, %v3019
    %v3021 = vand.u32 %v3020, 4294901760
    %3022 = vmatprep.subr.mxu0 %v3021
    %v3023 = vand.u32 %v2442, 4294901760
    %v3024 = vsub.f32 %v2442, %v3023
    %v3025 = vand.u32 %v3024, 4294901760
    %v3026 = vsub.f32 %v3024, %v3025
    %v3027 = vand.u32 %v3026, 4294901760
    %3028 = vmatpush1.msra.mxu0 %v3027
    %v3029 = vand.u32 %v2445, 4294901760
    %v3030 = vsub.f32 %v2445, %v3029
    %v3031 = vand.u32 %v3030, 4294901760
    %v3032 = vsub.f32 %v3030, %v3031
    %v3033 = vand.u32 %v3032, 4294901760
    %3034 = vmatprep.subr.mxu0 %v3033
    %v3035 = vand.u32 %v2444, 4294901760
    %v3036 = vsub.f32 %v2444, %v3035
    %v3037 = vand.u32 %v3036, 4294901760
    %v3038 = vsub.f32 %v3036, %v3037
    %v3039 = vand.u32 %v3038, 4294901760
    %3040 = vmatpush1.msra.mxu0 %v3039
    %v3041 = vand.u32 %v2347, 4294901760
    %3042 = vmatprep.mubr.f32.mxu0 %v3041
    %v3043 = vand.u32 %v2340, 4294901760
    %3044 = vmatmul.mubr.f32.gmra.mrb[0].mxu0 %v3043
    %v3045 = vpop.f32.mrb[0].mxu0
    %v3046 = vadd.f32 %v2653, %v3045
    %v3047 = vpop.f32.mrb[0].mxu0
    %v3048 = vadd.f32 %v2655, %v3047
    %3049 = vdwg.mxu0
    %v3050 = vand.u32 %v2383, 4294901760
    %v3051 = vsub.f32 %v2383, %v3050
    %3052 = vmatprep.subr.mxu0 %v3051
    %v3053 = vand.u32 %v2382, 4294901760
    %v3054 = vsub.f32 %v2382, %v3053
    %3055 = vmatpush1.msra.mxu0 %v3054
    %v3056 = vand.u32 %v2385, 4294901760
    %v3057 = vsub.f32 %v2385, %v3056
    %3058 = vmatprep.subr.mxu0 %v3057
    %v3059 = vand.u32 %v2384, 4294901760
    %v3060 = vsub.f32 %v2384, %v3059
    %3061 = vmatpush1.msra.mxu0 %v3060
    %v3062 = vand.u32 %v2387, 4294901760
    %v3063 = vsub.f32 %v2387, %v3062
    %3064 = vmatprep.subr.mxu0 %v3063
    %v3065 = vand.u32 %v2386, 4294901760
    %v3066 = vsub.f32 %v2386, %v3065
    %3067 = vmatpush1.msra.mxu0 %v3066
    %v3068 = vand.u32 %v2389, 4294901760
    %v3069 = vsub.f32 %v2389, %v3068
    %3070 = vmatprep.subr.mxu0 %v3069
    %v3071 = vand.u32 %v2388, 4294901760
    %v3072 = vsub.f32 %v2388, %v3071
    %3073 = vmatpush1.msra.mxu0 %v3072
    %v3074 = vand.u32 %v2391, 4294901760
    %v3075 = vsub.f32 %v2391, %v3074
    %3076 = vmatprep.subr.mxu0 %v3075
    %v3077 = vand.u32 %v2390, 4294901760
    %v3078 = vsub.f32 %v2390, %v3077
    %3079 = vmatpush1.msra.mxu0 %v3078
    %v3080 = vand.u32 %v2393, 4294901760
    %v3081 = vsub.f32 %v2393, %v3080
    %3082 = vmatprep.subr.mxu0 %v3081
    %v3083 = vand.u32 %v2392, 4294901760
    %v3084 = vsub.f32 %v2392, %v3083
    %3085 = vmatpush1.msra.mxu0 %v3084
    %v3086 = vand.u32 %v2395, 4294901760
    %v3087 = vsub.f32 %v2395, %v3086
    %3088 = vmatprep.subr.mxu0 %v3087
    %v3089 = vand.u32 %v2394, 4294901760
    %v3090 = vsub.f32 %v2394, %v3089
    %3091 = vmatpush1.msra.mxu0 %v3090
    %v3092 = vand.u32 %v2397, 4294901760
    %v3093 = vsub.f32 %v2397, %v3092
    %3094 = vmatprep.subr.mxu0 %v3093
    %v3095 = vand.u32 %v2396, 4294901760
    %v3096 = vsub.f32 %v2396, %v3095
    %3097 = vmatpush1.msra.mxu0 %v3096
    %v3098 = vand.u32 %v2399, 4294901760
    %v3099 = vsub.f32 %v2399, %v3098
    %3100 = vmatprep.subr.mxu0 %v3099
    %v3101 = vand.u32 %v2398, 4294901760
    %v3102 = vsub.f32 %v2398, %v3101
    %3103 = vmatpush1.msra.mxu0 %v3102
    %v3104 = vand.u32 %v2401, 4294901760
    %v3105 = vsub.f32 %v2401, %v3104
    %3106 = vmatprep.subr.mxu0 %v3105
    %v3107 = vand.u32 %v2400, 4294901760
    %v3108 = vsub.f32 %v2400, %v3107
    %3109 = vmatpush1.msra.mxu0 %v3108
    %v3110 = vand.u32 %v2403, 4294901760
    %v3111 = vsub.f32 %v2403, %v3110
    %3112 = vmatprep.subr.mxu0 %v3111
    %v3113 = vand.u32 %v2402, 4294901760
    %v3114 = vsub.f32 %v2402, %v3113
    %3115 = vmatpush1.msra.mxu0 %v3114
    %v3116 = vand.u32 %v2405, 4294901760
    %v3117 = vsub.f32 %v2405, %v3116
    %3118 = vmatprep.subr.mxu0 %v3117
    %v3119 = vand.u32 %v2404, 4294901760
    %v3120 = vsub.f32 %v2404, %v3119
    %3121 = vmatpush1.msra.mxu0 %v3120
    %v3122 = vand.u32 %v2407, 4294901760
    %v3123 = vsub.f32 %v2407, %v3122
    %3124 = vmatprep.subr.mxu0 %v3123
    %v3125 = vand.u32 %v2406, 4294901760
    %v3126 = vsub.f32 %v2406, %v3125
    %3127 = vmatpush1.msra.mxu0 %v3126
    %v3128 = vand.u32 %v2409, 4294901760
    %v3129 = vsub.f32 %v2409, %v3128
    %3130 = vmatprep.subr.mxu0 %v3129
    %v3131 = vand.u32 %v2408, 4294901760
    %v3132 = vsub.f32 %v2408, %v3131
    %3133 = vmatpush1.msra.mxu0 %v3132
    %v3134 = vand.u32 %v2411, 4294901760
    %v3135 = vsub.f32 %v2411, %v3134
    %3136 = vmatprep.subr.mxu0 %v3135
    %v3137 = vand.u32 %v2410, 4294901760
    %v3138 = vsub.f32 %v2410, %v3137
    %3139 = vmatpush1.msra.mxu0 %v3138
    %v3140 = vand.u32 %v2413, 4294901760
    %v3141 = vsub.f32 %v2413, %v3140
    %3142 = vmatprep.subr.mxu0 %v3141
    %v3143 = vand.u32 %v2412, 4294901760
    %v3144 = vsub.f32 %v2412, %v3143
    %3145 = vmatpush1.msra.mxu0 %v3144
    %v3146 = vand.u32 %v2415, 4294901760
    %v3147 = vsub.f32 %v2415, %v3146
    %3148 = vmatprep.subr.mxu0 %v3147
    %v3149 = vand.u32 %v2414, 4294901760
    %v3150 = vsub.f32 %v2414, %v3149
    %3151 = vmatpush1.msra.mxu0 %v3150
    %v3152 = vand.u32 %v2417, 4294901760
    %v3153 = vsub.f32 %v2417, %v3152
    %3154 = vmatprep.subr.mxu0 %v3153
    %v3155 = vand.u32 %v2416, 4294901760
    %v3156 = vsub.f32 %v2416, %v3155
    %3157 = vmatpush1.msra.mxu0 %v3156
    %v3158 = vand.u32 %v2419, 4294901760
    %v3159 = vsub.f32 %v2419, %v3158
    %3160 = vmatprep.subr.mxu0 %v3159
    %v3161 = vand.u32 %v2418, 4294901760
    %v3162 = vsub.f32 %v2418, %v3161
    %3163 = vmatpush1.msra.mxu0 %v3162
    %v3164 = vand.u32 %v2421, 4294901760
    %v3165 = vsub.f32 %v2421, %v3164
    %3166 = vmatprep.subr.mxu0 %v3165
    %v3167 = vand.u32 %v2420, 4294901760
    %v3168 = vsub.f32 %v2420, %v3167
    %3169 = vmatpush1.msra.mxu0 %v3168
    %v3170 = vand.u32 %v2423, 4294901760
    %v3171 = vsub.f32 %v2423, %v3170
    %3172 = vmatprep.subr.mxu0 %v3171
    %v3173 = vand.u32 %v2422, 4294901760
    %v3174 = vsub.f32 %v2422, %v3173
    %3175 = vmatpush1.msra.mxu0 %v3174
    %v3176 = vand.u32 %v2425, 4294901760
    %v3177 = vsub.f32 %v2425, %v3176
    %3178 = vmatprep.subr.mxu0 %v3177
    %v3179 = vand.u32 %v2424, 4294901760
    %v3180 = vsub.f32 %v2424, %v3179
    %3181 = vmatpush1.msra.mxu0 %v3180
    %v3182 = vand.u32 %v2427, 4294901760
    %v3183 = vsub.f32 %v2427, %v3182
    %3184 = vmatprep.subr.mxu0 %v3183
    %v3185 = vand.u32 %v2426, 4294901760
    %v3186 = vsub.f32 %v2426, %v3185
    %3187 = vmatpush1.msra.mxu0 %v3186
    %v3188 = vand.u32 %v2429, 4294901760
    %v3189 = vsub.f32 %v2429, %v3188
    %3190 = vmatprep.subr.mxu0 %v3189
    %v3191 = vand.u32 %v2428, 4294901760
    %v3192 = vsub.f32 %v2428, %v3191
    %3193 = vmatpush1.msra.mxu0 %v3192
    %v3194 = vand.u32 %v2431, 4294901760
    %v3195 = vsub.f32 %v2431, %v3194
    %3196 = vmatprep.subr.mxu0 %v3195
    %v3197 = vand.u32 %v2430, 4294901760
    %v3198 = vsub.f32 %v2430, %v3197
    %3199 = vmatpush1.msra.mxu0 %v3198
    %v3200 = vand.u32 %v2433, 4294901760
    %v3201 = vsub.f32 %v2433, %v3200
    %3202 = vmatprep.subr.mxu0 %v3201
    %v3203 = vand.u32 %v2432, 4294901760
    %v3204 = vsub.f32 %v2432, %v3203
    %3205 = vmatpush1.msra.mxu0 %v3204
    %v3206 = vand.u32 %v2435, 4294901760
    %v3207 = vsub.f32 %v2435, %v3206
    %3208 = vmatprep.subr.mxu0 %v3207
    %v3209 = vand.u32 %v2434, 4294901760
    %v3210 = vsub.f32 %v2434, %v3209
    %3211 = vmatpush1.msra.mxu0 %v3210
    %v3212 = vand.u32 %v2437, 4294901760
    %v3213 = vsub.f32 %v2437, %v3212
    %3214 = vmatprep.subr.mxu0 %v3213
    %v3215 = vand.u32 %v2436, 4294901760
    %v3216 = vsub.f32 %v2436, %v3215
    %3217 = vmatpush1.msra.mxu0 %v3216
    %v3218 = vand.u32 %v2439, 4294901760
    %v3219 = vsub.f32 %v2439, %v3218
    %3220 = vmatprep.subr.mxu0 %v3219
    %v3221 = vand.u32 %v2438, 4294901760
    %v3222 = vsub.f32 %v2438, %v3221
    %3223 = vmatpush1.msra.mxu0 %v3222
    %v3224 = vand.u32 %v2441, 4294901760
    %v3225 = vsub.f32 %v2441, %v3224
    %3226 = vmatprep.subr.mxu0 %v3225
    %v3227 = vand.u32 %v2440, 4294901760
    %v3228 = vsub.f32 %v2440, %v3227
    %3229 = vmatpush1.msra.mxu0 %v3228
    %v3230 = vand.u32 %v2443, 4294901760
    %v3231 = vsub.f32 %v2443, %v3230
    %3232 = vmatprep.subr.mxu0 %v3231
    %v3233 = vand.u32 %v2442, 4294901760
    %v3234 = vsub.f32 %v2442, %v3233
    %3235 = vmatpush1.msra.mxu0 %v3234
    %v3236 = vand.u32 %v2445, 4294901760
    %v3237 = vsub.f32 %v2445, %v3236
    %3238 = vmatprep.subr.mxu0 %v3237
    %v3239 = vand.u32 %v2444, 4294901760
    %v3240 = vsub.f32 %v2444, %v3239
    %3241 = vmatpush1.msra.mxu0 %v3240
    %v3242 = vand.u32 %v2347, 4294901760
    %v3243 = vsub.f32 %v2347, %v3242
    %3244 = vmatprep.mubr.f32.mxu0 %v3243
    %v3245 = vand.u32 %v2340, 4294901760
    %v3246 = vsub.f32 %v2340, %v3245
    %3247 = vmatmul.mubr.f32.gmra.mrb[0].mxu0 %v3246
    %v3248 = vpop.f32.mrb[0].mxu0
    %v3249 = vadd.f32 %v3046, %v3248
    %v3250 = vpop.f32.mrb[0].mxu0
    %v3251 = vadd.f32 %v3048, %v3250
    %3252 = vdwg.mxu0
    %v3253 = vand.u32 %v2383, 4294901760
    %3254 = vmatprep.subr.mxu0 %v3253
    %v3255 = vand.u32 %v2382, 4294901760
    %3256 = vmatpush1.msra.mxu0 %v3255
    %v3257 = vand.u32 %v2385, 4294901760
    %3258 = vmatprep.subr.mxu0 %v3257
    %v3259 = vand.u32 %v2384, 4294901760
    %3260 = vmatpush1.msra.mxu0 %v3259
    %v3261 = vand.u32 %v2387, 4294901760
    %3262 = vmatprep.subr.mxu0 %v3261
    %v3263 = vand.u32 %v2386, 4294901760
    %3264 = vmatpush1.msra.mxu0 %v3263
    %v3265 = vand.u32 %v2389, 4294901760
    %3266 = vmatprep.subr.mxu0 %v3265
    %v3267 = vand.u32 %v2388, 4294901760
    %3268 = vmatpush1.msra.mxu0 %v3267
    %v3269 = vand.u32 %v2391, 4294901760
    %3270 = vmatprep.subr.mxu0 %v3269
    %v3271 = vand.u32 %v2390, 4294901760
    %3272 = vmatpush1.msra.mxu0 %v3271
    %v3273 = vand.u32 %v2393, 4294901760
    %3274 = vmatprep.subr.mxu0 %v3273
    %v3275 = vand.u32 %v2392, 4294901760
    %3276 = vmatpush1.msra.mxu0 %v3275
    %v3277 = vand.u32 %v2395, 4294901760
    %3278 = vmatprep.subr.mxu0 %v3277
    %v3279 = vand.u32 %v2394, 4294901760
    %3280 = vmatpush1.msra.mxu0 %v3279
    %v3281 = vand.u32 %v2397, 4294901760
    %3282 = vmatprep.subr.mxu0 %v3281
    %v3283 = vand.u32 %v2396, 4294901760
    %3284 = vmatpush1.msra.mxu0 %v3283
    %v3285 = vand.u32 %v2399, 4294901760
    %3286 = vmatprep.subr.mxu0 %v3285
    %v3287 = vand.u32 %v2398, 4294901760
    %3288 = vmatpush1.msra.mxu0 %v3287
    %v3289 = vand.u32 %v2401, 4294901760
    %3290 = vmatprep.subr.mxu0 %v3289
    %v3291 = vand.u32 %v2400, 4294901760
    %3292 = vmatpush1.msra.mxu0 %v3291
    %v3293 = vand.u32 %v2403, 4294901760
    %3294 = vmatprep.subr.mxu0 %v3293
    %v3295 = vand.u32 %v2402, 4294901760
    %3296 = vmatpush1.msra.mxu0 %v3295
    %v3297 = vand.u32 %v2405, 4294901760
    %3298 = vmatprep.subr.mxu0 %v3297
    %v3299 = vand.u32 %v2404, 4294901760
    %3300 = vmatpush1.msra.mxu0 %v3299
    %v3301 = vand.u32 %v2407, 4294901760
    %3302 = vmatprep.subr.mxu0 %v3301
    %v3303 = vand.u32 %v2406, 4294901760
    %3304 = vmatpush1.msra.mxu0 %v3303
    %v3305 = vand.u32 %v2409, 4294901760
    %3306 = vmatprep.subr.mxu0 %v3305
    %v3307 = vand.u32 %v2408, 4294901760
    %3308 = vmatpush1.msra.mxu0 %v3307
    %v3309 = vand.u32 %v2411, 4294901760
    %3310 = vmatprep.subr.mxu0 %v3309
    %v3311 = vand.u32 %v2410, 4294901760
    %3312 = vmatpush1.msra.mxu0 %v3311
    %v3313 = vand.u32 %v2413, 4294901760
    %3314 = vmatprep.subr.mxu0 %v3313
    %v3315 = vand.u32 %v2412, 4294901760
    %3316 = vmatpush1.msra.mxu0 %v3315
    %v3317 = vand.u32 %v2415, 4294901760
    %3318 = vmatprep.subr.mxu0 %v3317
    %v3319 = vand.u32 %v2414, 4294901760
    %3320 = vmatpush1.msra.mxu0 %v3319
    %v3321 = vand.u32 %v2417, 4294901760
    %3322 = vmatprep.subr.mxu0 %v3321
    %v3323 = vand.u32 %v2416, 4294901760
    %3324 = vmatpush1.msra.mxu0 %v3323
    %v3325 = vand.u32 %v2419, 4294901760
    %3326 = vmatprep.subr.mxu0 %v3325
    %v3327 = vand.u32 %v2418, 4294901760
    %3328 = vmatpush1.msra.mxu0 %v3327
    %v3329 = vand.u32 %v2421, 4294901760
    %3330 = vmatprep.subr.mxu0 %v3329
    %v3331 = vand.u32 %v2420, 4294901760
    %3332 = vmatpush1.msra.mxu0 %v3331
    %v3333 = vand.u32 %v2423, 4294901760
    %3334 = vmatprep.subr.mxu0 %v3333
    %v3335 = vand.u32 %v2422, 4294901760
    %3336 = vmatpush1.msra.mxu0 %v3335
    %v3337 = vand.u32 %v2425, 4294901760
    %3338 = vmatprep.subr.mxu0 %v3337
    %v3339 = vand.u32 %v2424, 4294901760
    %3340 = vmatpush1.msra.mxu0 %v3339
    %v3341 = vand.u32 %v2427, 4294901760
    %3342 = vmatprep.subr.mxu0 %v3341
    %v3343 = vand.u32 %v2426, 4294901760
    %3344 = vmatpush1.msra.mxu0 %v3343
    %v3345 = vand.u32 %v2429, 4294901760
    %3346 = vmatprep.subr.mxu0 %v3345
    %v3347 = vand.u32 %v2428, 4294901760
    %3348 = vmatpush1.msra.mxu0 %v3347
    %v3349 = vand.u32 %v2431, 4294901760
    %3350 = vmatprep.subr.mxu0 %v3349
    %v3351 = vand.u32 %v2430, 4294901760
    %3352 = vmatpush1.msra.mxu0 %v3351
    %v3353 = vand.u32 %v2433, 4294901760
    %3354 = vmatprep.subr.mxu0 %v3353
    %v3355 = vand.u32 %v2432, 4294901760
    %3356 = vmatpush1.msra.mxu0 %v3355
    %v3357 = vand.u32 %v2435, 4294901760
    %3358 = vmatprep.subr.mxu0 %v3357
    %v3359 = vand.u32 %v2434, 4294901760
    %3360 = vmatpush1.msra.mxu0 %v3359
    %v3361 = vand.u32 %v2437, 4294901760
    %3362 = vmatprep.subr.mxu0 %v3361
    %v3363 = vand.u32 %v2436, 4294901760
    %3364 = vmatpush1.msra.mxu0 %v3363
    %v3365 = vand.u32 %v2439, 4294901760
    %3366 = vmatprep.subr.mxu0 %v3365
    %v3367 = vand.u32 %v2438, 4294901760
    %3368 = vmatpush1.msra.mxu0 %v3367
    %v3369 = vand.u32 %v2441, 4294901760
    %3370 = vmatprep.subr.mxu0 %v3369
    %v3371 = vand.u32 %v2440, 4294901760
    %3372 = vmatpush1.msra.mxu0 %v3371
    %v3373 = vand.u32 %v2443, 4294901760
    %3374 = vmatprep.subr.mxu0 %v3373
    %v3375 = vand.u32 %v2442, 4294901760
    %3376 = vmatpush1.msra.mxu0 %v3375
    %v3377 = vand.u32 %v2445, 4294901760
    %3378 = vmatprep.subr.mxu0 %v3377
    %v3379 = vand.u32 %v2444, 4294901760
    %3380 = vmatpush1.msra.mxu0 %v3379
    %v3381 = vand.u32 %v2347, 4294901760
    %v3382 = vsub.f32 %v2347, %v3381
    %v3383 = vand.u32 %v3382, 4294901760
    %3384 = vmatprep.mubr.f32.mxu0 %v3383
    %v3385 = vand.u32 %v2340, 4294901760
    %v3386 = vsub.f32 %v2340, %v3385
    %v3387 = vand.u32 %v3386, 4294901760
    %3388 = vmatmul.mubr.f32.gmra.mrb[0].mxu0 %v3387
    %v3389 = vpop.f32.mrb[0].mxu0
    %v3390 = vadd.f32 %v3249, %v3389
    %v3391 = vpop.f32.mrb[0].mxu0
    %v3392 = vadd.f32 %v3251, %v3391
    %3393 = vdwg.mxu0
    %v3394 = vand.u32 %v2383, 4294901760
    %v3395 = vsub.f32 %v2383, %v3394
    %v3396 = vand.u32 %v3395, 4294901760
    %3397 = vmatprep.subr.mxu0 %v3396
    %v3398 = vand.u32 %v2382, 4294901760
    %v3399 = vsub.f32 %v2382, %v3398
    %v3400 = vand.u32 %v3399, 4294901760
    %3401 = vmatpush1.msra.mxu0 %v3400
    %v3402 = vand.u32 %v2385, 4294901760
    %v3403 = vsub.f32 %v2385, %v3402
    %v3404 = vand.u32 %v3403, 4294901760
    %3405 = vmatprep.subr.mxu0 %v3404
    %v3406 = vand.u32 %v2384, 4294901760
    %v3407 = vsub.f32 %v2384, %v3406
    %v3408 = vand.u32 %v3407, 4294901760
    %3409 = vmatpush1.msra.mxu0 %v3408
    %v3410 = vand.u32 %v2387, 4294901760
    %v3411 = vsub.f32 %v2387, %v3410
    %v3412 = vand.u32 %v3411, 4294901760
    %3413 = vmatprep.subr.mxu0 %v3412
    %v3414 = vand.u32 %v2386, 4294901760
    %v3415 = vsub.f32 %v2386, %v3414
    %v3416 = vand.u32 %v3415, 4294901760
    %3417 = vmatpush1.msra.mxu0 %v3416
    %v3418 = vand.u32 %v2389, 4294901760
    %v3419 = vsub.f32 %v2389, %v3418
    %v3420 = vand.u32 %v3419, 4294901760
    %3421 = vmatprep.subr.mxu0 %v3420
    %v3422 = vand.u32 %v2388, 4294901760
    %v3423 = vsub.f32 %v2388, %v3422
    %v3424 = vand.u32 %v3423, 4294901760
    %3425 = vmatpush1.msra.mxu0 %v3424
    %v3426 = vand.u32 %v2391, 4294901760
    %v3427 = vsub.f32 %v2391, %v3426
    %v3428 = vand.u32 %v3427, 4294901760
    %3429 = vmatprep.subr.mxu0 %v3428
    %v3430 = vand.u32 %v2390, 4294901760
    %v3431 = vsub.f32 %v2390, %v3430
    %v3432 = vand.u32 %v3431, 4294901760
    %3433 = vmatpush1.msra.mxu0 %v3432
    %v3434 = vand.u32 %v2393, 4294901760
    %v3435 = vsub.f32 %v2393, %v3434
    %v3436 = vand.u32 %v3435, 4294901760
    %3437 = vmatprep.subr.mxu0 %v3436
    %v3438 = vand.u32 %v2392, 4294901760
    %v3439 = vsub.f32 %v2392, %v3438
    %v3440 = vand.u32 %v3439, 4294901760
    %3441 = vmatpush1.msra.mxu0 %v3440
    %v3442 = vand.u32 %v2395, 4294901760
    %v3443 = vsub.f32 %v2395, %v3442
    %v3444 = vand.u32 %v3443, 4294901760
    %3445 = vmatprep.subr.mxu0 %v3444
    %v3446 = vand.u32 %v2394, 4294901760
    %v3447 = vsub.f32 %v2394, %v3446
    %v3448 = vand.u32 %v3447, 4294901760
    %3449 = vmatpush1.msra.mxu0 %v3448
    %v3450 = vand.u32 %v2397, 4294901760
    %v3451 = vsub.f32 %v2397, %v3450
    %v3452 = vand.u32 %v3451, 4294901760
    %3453 = vmatprep.subr.mxu0 %v3452
    %v3454 = vand.u32 %v2396, 4294901760
    %v3455 = vsub.f32 %v2396, %v3454
    %v3456 = vand.u32 %v3455, 4294901760
    %3457 = vmatpush1.msra.mxu0 %v3456
    %v3458 = vand.u32 %v2399, 4294901760
    %v3459 = vsub.f32 %v2399, %v3458
    %v3460 = vand.u32 %v3459, 4294901760
    %3461 = vmatprep.subr.mxu0 %v3460
    %v3462 = vand.u32 %v2398, 4294901760
    %v3463 = vsub.f32 %v2398, %v3462
    %v3464 = vand.u32 %v3463, 4294901760
    %3465 = vmatpush1.msra.mxu0 %v3464
    %v3466 = vand.u32 %v2401, 4294901760
    %v3467 = vsub.f32 %v2401, %v3466
    %v3468 = vand.u32 %v3467, 4294901760
    %3469 = vmatprep.subr.mxu0 %v3468
    %v3470 = vand.u32 %v2400, 4294901760
    %v3471 = vsub.f32 %v2400, %v3470
    %v3472 = vand.u32 %v3471, 4294901760
    %3473 = vmatpush1.msra.mxu0 %v3472
    %v3474 = vand.u32 %v2403, 4294901760
    %v3475 = vsub.f32 %v2403, %v3474
    %v3476 = vand.u32 %v3475, 4294901760
    %3477 = vmatprep.subr.mxu0 %v3476
    %v3478 = vand.u32 %v2402, 4294901760
    %v3479 = vsub.f32 %v2402, %v3478
    %v3480 = vand.u32 %v3479, 4294901760
    %3481 = vmatpush1.msra.mxu0 %v3480
    %v3482 = vand.u32 %v2405, 4294901760
    %v3483 = vsub.f32 %v2405, %v3482
    %v3484 = vand.u32 %v3483, 4294901760
    %3485 = vmatprep.subr.mxu0 %v3484
    %v3486 = vand.u32 %v2404, 4294901760
    %v3487 = vsub.f32 %v2404, %v3486
    %v3488 = vand.u32 %v3487, 4294901760
    %3489 = vmatpush1.msra.mxu0 %v3488
    %v3490 = vand.u32 %v2407, 4294901760
    %v3491 = vsub.f32 %v2407, %v3490
    %v3492 = vand.u32 %v3491, 4294901760
    %3493 = vmatprep.subr.mxu0 %v3492
    %v3494 = vand.u32 %v2406, 4294901760
    %v3495 = vsub.f32 %v2406, %v3494
    %v3496 = vand.u32 %v3495, 4294901760
    %3497 = vmatpush1.msra.mxu0 %v3496
    %v3498 = vand.u32 %v2409, 4294901760
    %v3499 = vsub.f32 %v2409, %v3498
    %v3500 = vand.u32 %v3499, 4294901760
    %3501 = vmatprep.subr.mxu0 %v3500
    %v3502 = vand.u32 %v2408, 4294901760
    %v3503 = vsub.f32 %v2408, %v3502
    %v3504 = vand.u32 %v3503, 4294901760
    %3505 = vmatpush1.msra.mxu0 %v3504
    %v3506 = vand.u32 %v2411, 4294901760
    %v3507 = vsub.f32 %v2411, %v3506
    %v3508 = vand.u32 %v3507, 4294901760
    %3509 = vmatprep.subr.mxu0 %v3508
    %v3510 = vand.u32 %v2410, 4294901760
    %v3511 = vsub.f32 %v2410, %v3510
    %v3512 = vand.u32 %v3511, 4294901760
    %3513 = vmatpush1.msra.mxu0 %v3512
    %v3514 = vand.u32 %v2413, 4294901760
    %v3515 = vsub.f32 %v2413, %v3514
    %v3516 = vand.u32 %v3515, 4294901760
    %3517 = vmatprep.subr.mxu0 %v3516
    %v3518 = vand.u32 %v2412, 4294901760
    %v3519 = vsub.f32 %v2412, %v3518
    %v3520 = vand.u32 %v3519, 4294901760
    %3521 = vmatpush1.msra.mxu0 %v3520
    %v3522 = vand.u32 %v2415, 4294901760
    %v3523 = vsub.f32 %v2415, %v3522
    %v3524 = vand.u32 %v3523, 4294901760
    %3525 = vmatprep.subr.mxu0 %v3524
    %v3526 = vand.u32 %v2414, 4294901760
    %v3527 = vsub.f32 %v2414, %v3526
    %v3528 = vand.u32 %v3527, 4294901760
    %3529 = vmatpush1.msra.mxu0 %v3528
    %v3530 = vand.u32 %v2417, 4294901760
    %v3531 = vsub.f32 %v2417, %v3530
    %v3532 = vand.u32 %v3531, 4294901760
    %3533 = vmatprep.subr.mxu0 %v3532
    %v3534 = vand.u32 %v2416, 4294901760
    %v3535 = vsub.f32 %v2416, %v3534
    %v3536 = vand.u32 %v3535, 4294901760
    %3537 = vmatpush1.msra.mxu0 %v3536
    %v3538 = vand.u32 %v2419, 4294901760
    %v3539 = vsub.f32 %v2419, %v3538
    %v3540 = vand.u32 %v3539, 4294901760
    %3541 = vmatprep.subr.mxu0 %v3540
    %v3542 = vand.u32 %v2418, 4294901760
    %v3543 = vsub.f32 %v2418, %v3542
    %v3544 = vand.u32 %v3543, 4294901760
    %3545 = vmatpush1.msra.mxu0 %v3544
    %v3546 = vand.u32 %v2421, 4294901760
    %v3547 = vsub.f32 %v2421, %v3546
    %v3548 = vand.u32 %v3547, 4294901760
    %3549 = vmatprep.subr.mxu0 %v3548
    %v3550 = vand.u32 %v2420, 4294901760
    %v3551 = vsub.f32 %v2420, %v3550
    %v3552 = vand.u32 %v3551, 4294901760
    %3553 = vmatpush1.msra.mxu0 %v3552
    %v3554 = vand.u32 %v2423, 4294901760
    %v3555 = vsub.f32 %v2423, %v3554
    %v3556 = vand.u32 %v3555, 4294901760
    %3557 = vmatprep.subr.mxu0 %v3556
    %v3558 = vand.u32 %v2422, 4294901760
    %v3559 = vsub.f32 %v2422, %v3558
    %v3560 = vand.u32 %v3559, 4294901760
    %3561 = vmatpush1.msra.mxu0 %v3560
    %v3562 = vand.u32 %v2425, 4294901760
    %v3563 = vsub.f32 %v2425, %v3562
    %v3564 = vand.u32 %v3563, 4294901760
    %3565 = vmatprep.subr.mxu0 %v3564
    %v3566 = vand.u32 %v2424, 4294901760
    %v3567 = vsub.f32 %v2424, %v3566
    %v3568 = vand.u32 %v3567, 4294901760
    %3569 = vmatpush1.msra.mxu0 %v3568
    %v3570 = vand.u32 %v2427, 4294901760
    %v3571 = vsub.f32 %v2427, %v3570
    %v3572 = vand.u32 %v3571, 4294901760
    %3573 = vmatprep.subr.mxu0 %v3572
    %v3574 = vand.u32 %v2426, 4294901760
    %v3575 = vsub.f32 %v2426, %v3574
    %v3576 = vand.u32 %v3575, 4294901760
    %3577 = vmatpush1.msra.mxu0 %v3576
    %v3578 = vand.u32 %v2429, 4294901760
    %v3579 = vsub.f32 %v2429, %v3578
    %v3580 = vand.u32 %v3579, 4294901760
    %3581 = vmatprep.subr.mxu0 %v3580
    %v3582 = vand.u32 %v2428, 4294901760
    %v3583 = vsub.f32 %v2428, %v3582
    %v3584 = vand.u32 %v3583, 4294901760
    %3585 = vmatpush1.msra.mxu0 %v3584
    %v3586 = vand.u32 %v2431, 4294901760
    %v3587 = vsub.f32 %v2431, %v3586
    %v3588 = vand.u32 %v3587, 4294901760
    %3589 = vmatprep.subr.mxu0 %v3588
    %v3590 = vand.u32 %v2430, 4294901760
    %v3591 = vsub.f32 %v2430, %v3590
    %v3592 = vand.u32 %v3591, 4294901760
    %3593 = vmatpush1.msra.mxu0 %v3592
    %v3594 = vand.u32 %v2433, 4294901760
    %v3595 = vsub.f32 %v2433, %v3594
    %v3596 = vand.u32 %v3595, 4294901760
    %3597 = vmatprep.subr.mxu0 %v3596
    %v3598 = vand.u32 %v2432, 4294901760
    %v3599 = vsub.f32 %v2432, %v3598
    %v3600 = vand.u32 %v3599, 4294901760
    %3601 = vmatpush1.msra.mxu0 %v3600
    %v3602 = vand.u32 %v2435, 4294901760
    %v3603 = vsub.f32 %v2435, %v3602
    %v3604 = vand.u32 %v3603, 4294901760
    %3605 = vmatprep.subr.mxu0 %v3604
    %v3606 = vand.u32 %v2434, 4294901760
    %v3607 = vsub.f32 %v2434, %v3606
    %v3608 = vand.u32 %v3607, 4294901760
    %3609 = vmatpush1.msra.mxu0 %v3608
    %v3610 = vand.u32 %v2437, 4294901760
    %v3611 = vsub.f32 %v2437, %v3610
    %v3612 = vand.u32 %v3611, 4294901760
    %3613 = vmatprep.subr.mxu0 %v3612
    %v3614 = vand.u32 %v2436, 4294901760
    %v3615 = vsub.f32 %v2436, %v3614
    %v3616 = vand.u32 %v3615, 4294901760
    %3617 = vmatpush1.msra.mxu0 %v3616
    %v3618 = vand.u32 %v2439, 4294901760
    %v3619 = vsub.f32 %v2439, %v3618
    %v3620 = vand.u32 %v3619, 4294901760
    %3621 = vmatprep.subr.mxu0 %v3620
    %v3622 = vand.u32 %v2438, 4294901760
    %v3623 = vsub.f32 %v2438, %v3622
    %v3624 = vand.u32 %v3623, 4294901760
    %3625 = vmatpush1.msra.mxu0 %v3624
    %v3626 = vand.u32 %v2441, 4294901760
    %v3627 = vsub.f32 %v2441, %v3626
    %v3628 = vand.u32 %v3627, 4294901760
    %3629 = vmatprep.subr.mxu0 %v3628
    %v3630 = vand.u32 %v2440, 4294901760
    %v3631 = vsub.f32 %v2440, %v3630
    %v3632 = vand.u32 %v3631, 4294901760
    %3633 = vmatpush1.msra.mxu0 %v3632
    %v3634 = vand.u32 %v2443, 4294901760
    %v3635 = vsub.f32 %v2443, %v3634
    %v3636 = vand.u32 %v3635, 4294901760
    %3637 = vmatprep.subr.mxu0 %v3636
    %v3638 = vand.u32 %v2442, 4294901760
    %v3639 = vsub.f32 %v2442, %v3638
    %v3640 = vand.u32 %v3639, 4294901760
    %3641 = vmatpush1.msra.mxu0 %v3640
    %v3642 = vand.u32 %v2445, 4294901760
    %v3643 = vsub.f32 %v2445, %v3642
    %v3644 = vand.u32 %v3643, 4294901760
    %3645 = vmatprep.subr.mxu0 %v3644
    %v3646 = vand.u32 %v2444, 4294901760
    %v3647 = vsub.f32 %v2444, %v3646
    %v3648 = vand.u32 %v3647, 4294901760
    %3649 = vmatpush1.msra.mxu0 %v3648
    %v3650 = vand.u32 %v2347, 4294901760
    %3651 = vmatprep.mubr.f32.mxu0 %v3650
    %v3652 = vand.u32 %v2340, 4294901760
    %3653 = vmatmul.mubr.f32.gmra.mrb[0].mxu0 %v3652
    %v3654 = vpop.f32.mrb[0].mxu0
    %v3655 = vadd.f32 %v3390, %v3654
    %v3656 = vpop.f32.mrb[0].mxu0
    %v3657 = vadd.f32 %v3392, %v3656
    %3658 = vdwg.mxu0
    %v3659 = vand.u32 %v2383, 4294901760
    %3660 = vmatprep.subr.mxu0 %v3659
    %v3661 = vand.u32 %v2382, 4294901760
    %3662 = vmatpush1.msra.mxu0 %v3661
    %v3663 = vand.u32 %v2385, 4294901760
    %3664 = vmatprep.subr.mxu0 %v3663
    %v3665 = vand.u32 %v2384, 4294901760
    %3666 = vmatpush1.msra.mxu0 %v3665
    %v3667 = vand.u32 %v2387, 4294901760
    %3668 = vmatprep.subr.mxu0 %v3667
    %v3669 = vand.u32 %v2386, 4294901760
    %3670 = vmatpush1.msra.mxu0 %v3669
    %v3671 = vand.u32 %v2389, 4294901760
    %3672 = vmatprep.subr.mxu0 %v3671
    %v3673 = vand.u32 %v2388, 4294901760
    %3674 = vmatpush1.msra.mxu0 %v3673
    %v3675 = vand.u32 %v2391, 4294901760
    %3676 = vmatprep.subr.mxu0 %v3675
    %v3677 = vand.u32 %v2390, 4294901760
    %3678 = vmatpush1.msra.mxu0 %v3677
    %v3679 = vand.u32 %v2393, 4294901760
    %3680 = vmatprep.subr.mxu0 %v3679
    %v3681 = vand.u32 %v2392, 4294901760
    %3682 = vmatpush1.msra.mxu0 %v3681
    %v3683 = vand.u32 %v2395, 4294901760
    %3684 = vmatprep.subr.mxu0 %v3683
    %v3685 = vand.u32 %v2394, 4294901760
    %3686 = vmatpush1.msra.mxu0 %v3685
    %v3687 = vand.u32 %v2397, 4294901760
    %3688 = vmatprep.subr.mxu0 %v3687
    %v3689 = vand.u32 %v2396, 4294901760
    %3690 = vmatpush1.msra.mxu0 %v3689
    %v3691 = vand.u32 %v2399, 4294901760
    %3692 = vmatprep.subr.mxu0 %v3691
    %v3693 = vand.u32 %v2398, 4294901760
    %3694 = vmatpush1.msra.mxu0 %v3693
    %v3695 = vand.u32 %v2401, 4294901760
    %3696 = vmatprep.subr.mxu0 %v3695
    %v3697 = vand.u32 %v2400, 4294901760
    %3698 = vmatpush1.msra.mxu0 %v3697
    %v3699 = vand.u32 %v2403, 4294901760
    %3700 = vmatprep.subr.mxu0 %v3699
    %v3701 = vand.u32 %v2402, 4294901760
    %3702 = vmatpush1.msra.mxu0 %v3701
    %v3703 = vand.u32 %v2405, 4294901760
    %3704 = vmatprep.subr.mxu0 %v3703
    %v3705 = vand.u32 %v2404, 4294901760
    %3706 = vmatpush1.msra.mxu0 %v3705
    %v3707 = vand.u32 %v2407, 4294901760
    %3708 = vmatprep.subr.mxu0 %v3707
    %v3709 = vand.u32 %v2406, 4294901760
    %3710 = vmatpush1.msra.mxu0 %v3709
    %v3711 = vand.u32 %v2409, 4294901760
    %3712 = vmatprep.subr.mxu0 %v3711
    %v3713 = vand.u32 %v2408, 4294901760
    %3714 = vmatpush1.msra.mxu0 %v3713
    %v3715 = vand.u32 %v2411, 4294901760
    %3716 = vmatprep.subr.mxu0 %v3715
    %v3717 = vand.u32 %v2410, 4294901760
    %3718 = vmatpush1.msra.mxu0 %v3717
    %v3719 = vand.u32 %v2413, 4294901760
    %3720 = vmatprep.subr.mxu0 %v3719
    %v3721 = vand.u32 %v2412, 4294901760
    %3722 = vmatpush1.msra.mxu0 %v3721
    %v3723 = vand.u32 %v2415, 4294901760
    %3724 = vmatprep.subr.mxu0 %v3723
    %v3725 = vand.u32 %v2414, 4294901760
    %3726 = vmatpush1.msra.mxu0 %v3725
    %v3727 = vand.u32 %v2417, 4294901760
    %3728 = vmatprep.subr.mxu0 %v3727
    %v3729 = vand.u32 %v2416, 4294901760
    %3730 = vmatpush1.msra.mxu0 %v3729
    %v3731 = vand.u32 %v2419, 4294901760
    %3732 = vmatprep.subr.mxu0 %v3731
    %v3733 = vand.u32 %v2418, 4294901760
    %3734 = vmatpush1.msra.mxu0 %v3733
    %v3735 = vand.u32 %v2421, 4294901760
    %3736 = vmatprep.subr.mxu0 %v3735
    %v3737 = vand.u32 %v2420, 4294901760
    %3738 = vmatpush1.msra.mxu0 %v3737
    %v3739 = vand.u32 %v2423, 4294901760
    %3740 = vmatprep.subr.mxu0 %v3739
    %v3741 = vand.u32 %v2422, 4294901760
    %3742 = vmatpush1.msra.mxu0 %v3741
    %v3743 = vand.u32 %v2425, 4294901760
    %3744 = vmatprep.subr.mxu0 %v3743
    %v3745 = vand.u32 %v2424, 4294901760
    %3746 = vmatpush1.msra.mxu0 %v3745
    %v3747 = vand.u32 %v2427, 4294901760
    %3748 = vmatprep.subr.mxu0 %v3747
    %v3749 = vand.u32 %v2426, 4294901760
    %3750 = vmatpush1.msra.mxu0 %v3749
    %v3751 = vand.u32 %v2429, 4294901760
    %3752 = vmatprep.subr.mxu0 %v3751
    %v3753 = vand.u32 %v2428, 4294901760
    %3754 = vmatpush1.msra.mxu0 %v3753
    %v3755 = vand.u32 %v2431, 4294901760
    %3756 = vmatprep.subr.mxu0 %v3755
    %v3757 = vand.u32 %v2430, 4294901760
    %3758 = vmatpush1.msra.mxu0 %v3757
    %v3759 = vand.u32 %v2433, 4294901760
    %3760 = vmatprep.subr.mxu0 %v3759
    %v3761 = vand.u32 %v2432, 4294901760
    %3762 = vmatpush1.msra.mxu0 %v3761
    %v3763 = vand.u32 %v2435, 4294901760
    %3764 = vmatprep.subr.mxu0 %v3763
    %v3765 = vand.u32 %v2434, 4294901760
    %3766 = vmatpush1.msra.mxu0 %v3765
    %v3767 = vand.u32 %v2437, 4294901760
    %3768 = vmatprep.subr.mxu0 %v3767
    %v3769 = vand.u32 %v2436, 4294901760
    %3770 = vmatpush1.msra.mxu0 %v3769
    %v3771 = vand.u32 %v2439, 4294901760
    %3772 = vmatprep.subr.mxu0 %v3771
    %v3773 = vand.u32 %v2438, 4294901760
    %3774 = vmatpush1.msra.mxu0 %v3773
    %v3775 = vand.u32 %v2441, 4294901760
    %3776 = vmatprep.subr.mxu0 %v3775
    %v3777 = vand.u32 %v2440, 4294901760
    %3778 = vmatpush1.msra.mxu0 %v3777
    %v3779 = vand.u32 %v2443, 4294901760
    %3780 = vmatprep.subr.mxu0 %v3779
    %v3781 = vand.u32 %v2442, 4294901760
    %3782 = vmatpush1.msra.mxu0 %v3781
    %v3783 = vand.u32 %v2445, 4294901760
    %3784 = vmatprep.subr.mxu0 %v3783
    %v3785 = vand.u32 %v2444, 4294901760
    %3786 = vmatpush1.msra.mxu0 %v3785
    %v3787 = vand.u32 %v2347, 4294901760
    %3788 = vmatprep.mubr.f32.mxu0 %v3787
    %v3789 = vand.u32 %v2340, 4294901760
    %3790 = vmatmul.mubr.f32.gmra.mrb[0].mxu0 %v3789
    %v3791 = vpop.f32.mrb[0].mxu0
    %v3792 = vadd.f32 %v3655, %v3791
    %v3793 = vpop.f32.mrb[0].mxu0
    %v3794 = vadd.f32 %v3657, %v3793
    %3795 = vdwg.mxu0
    %v3796 = vand.u32 %v2447, 4294901760
    %3797 = vmatprep.subr.mxu0 %v3796
    %v3798 = vand.u32 %v2446, 4294901760
    %3799 = vmatpush1.msra.mxu0 %v3798
    %v3800 = vand.u32 %v2449, 4294901760
    %3801 = vmatprep.subr.mxu0 %v3800
    %v3802 = vand.u32 %v2448, 4294901760
    %3803 = vmatpush1.msra.mxu0 %v3802
    %v3804 = vand.u32 %v2451, 4294901760
    %3805 = vmatprep.subr.mxu0 %v3804
    %v3806 = vand.u32 %v2450, 4294901760
    %3807 = vmatpush1.msra.mxu0 %v3806
    %v3808 = vand.u32 %v2453, 4294901760
    %3809 = vmatprep.subr.mxu0 %v3808
    %v3810 = vand.u32 %v2452, 4294901760
    %3811 = vmatpush1.msra.mxu0 %v3810
    %v3812 = vand.u32 %v2455, 4294901760
    %3813 = vmatprep.subr.mxu0 %v3812
    %v3814 = vand.u32 %v2454, 4294901760
    %3815 = vmatpush1.msra.mxu0 %v3814
    %v3816 = vand.u32 %v2457, 4294901760
    %3817 = vmatprep.subr.mxu0 %v3816
    %v3818 = vand.u32 %v2456, 4294901760
    %3819 = vmatpush1.msra.mxu0 %v3818
    %v3820 = vand.u32 %v2459, 4294901760
    %3821 = vmatprep.subr.mxu0 %v3820
    %v3822 = vand.u32 %v2458, 4294901760
    %3823 = vmatpush1.msra.mxu0 %v3822
    %v3824 = vand.u32 %v2461, 4294901760
    %3825 = vmatprep.subr.mxu0 %v3824
    %v3826 = vand.u32 %v2460, 4294901760
    %3827 = vmatpush1.msra.mxu0 %v3826
    %v3828 = vand.u32 %v2463, 4294901760
    %3829 = vmatprep.subr.mxu0 %v3828
    %v3830 = vand.u32 %v2462, 4294901760
    %3831 = vmatpush1.msra.mxu0 %v3830
    %v3832 = vand.u32 %v2465, 4294901760
    %3833 = vmatprep.subr.mxu0 %v3832
    %v3834 = vand.u32 %v2464, 4294901760
    %3835 = vmatpush1.msra.mxu0 %v3834
    %v3836 = vand.u32 %v2467, 4294901760
    %3837 = vmatprep.subr.mxu0 %v3836
    %v3838 = vand.u32 %v2466, 4294901760
    %3839 = vmatpush1.msra.mxu0 %v3838
    %v3840 = vand.u32 %v2469, 4294901760
    %3841 = vmatprep.subr.mxu0 %v3840
    %v3842 = vand.u32 %v2468, 4294901760
    %3843 = vmatpush1.msra.mxu0 %v3842
    %v3844 = vand.u32 %v2471, 4294901760
    %3845 = vmatprep.subr.mxu0 %v3844
    %v3846 = vand.u32 %v2470, 4294901760
    %3847 = vmatpush1.msra.mxu0 %v3846
    %v3848 = vand.u32 %v2473, 4294901760
    %3849 = vmatprep.subr.mxu0 %v3848
    %v3850 = vand.u32 %v2472, 4294901760
    %3851 = vmatpush1.msra.mxu0 %v3850
    %v3852 = vand.u32 %v2475, 4294901760
    %3853 = vmatprep.subr.mxu0 %v3852
    %v3854 = vand.u32 %v2474, 4294901760
    %3855 = vmatpush1.msra.mxu0 %v3854
    %v3856 = vand.u32 %v2477, 4294901760
    %3857 = vmatprep.subr.mxu0 %v3856
    %v3858 = vand.u32 %v2476, 4294901760
    %3859 = vmatpush1.msra.mxu0 %v3858
    %v3860 = vand.u32 %v2479, 4294901760
    %3861 = vmatprep.subr.mxu0 %v3860
    %v3862 = vand.u32 %v2478, 4294901760
    %3863 = vmatpush1.msra.mxu0 %v3862
    %v3864 = vand.u32 %v2481, 4294901760
    %3865 = vmatprep.subr.mxu0 %v3864
    %v3866 = vand.u32 %v2480, 4294901760
    %3867 = vmatpush1.msra.mxu0 %v3866
    %v3868 = vand.u32 %v2483, 4294901760
    %3869 = vmatprep.subr.mxu0 %v3868
    %v3870 = vand.u32 %v2482, 4294901760
    %3871 = vmatpush1.msra.mxu0 %v3870
    %v3872 = vand.u32 %v2485, 4294901760
    %3873 = vmatprep.subr.mxu0 %v3872
    %v3874 = vand.u32 %v2484, 4294901760
    %3875 = vmatpush1.msra.mxu0 %v3874
    %v3876 = vand.u32 %v2487, 4294901760
    %3877 = vmatprep.subr.mxu0 %v3876
    %v3878 = vand.u32 %v2486, 4294901760
    %3879 = vmatpush1.msra.mxu0 %v3878
    %v3880 = vand.u32 %v2489, 4294901760
    %3881 = vmatprep.subr.mxu0 %v3880
    %v3882 = vand.u32 %v2488, 4294901760
    %3883 = vmatpush1.msra.mxu0 %v3882
    %v3884 = vand.u32 %v2491, 4294901760
    %3885 = vmatprep.subr.mxu0 %v3884
    %v3886 = vand.u32 %v2490, 4294901760
    %3887 = vmatpush1.msra.mxu0 %v3886
    %v3888 = vand.u32 %v2493, 4294901760
    %3889 = vmatprep.subr.mxu0 %v3888
    %v3890 = vand.u32 %v2492, 4294901760
    %3891 = vmatpush1.msra.mxu0 %v3890
    %v3892 = vand.u32 %v2495, 4294901760
    %3893 = vmatprep.subr.mxu0 %v3892
    %v3894 = vand.u32 %v2494, 4294901760
    %3895 = vmatpush1.msra.mxu0 %v3894
    %v3896 = vand.u32 %v2497, 4294901760
    %3897 = vmatprep.subr.mxu0 %v3896
    %v3898 = vand.u32 %v2496, 4294901760
    %3899 = vmatpush1.msra.mxu0 %v3898
    %v3900 = vand.u32 %v2499, 4294901760
    %3901 = vmatprep.subr.mxu0 %v3900
    %v3902 = vand.u32 %v2498, 4294901760
    %3903 = vmatpush1.msra.mxu0 %v3902
    %v3904 = vand.u32 %v2501, 4294901760
    %3905 = vmatprep.subr.mxu0 %v3904
    %v3906 = vand.u32 %v2500, 4294901760
    %3907 = vmatpush1.msra.mxu0 %v3906
    %v3908 = vand.u32 %v2503, 4294901760
    %3909 = vmatprep.subr.mxu0 %v3908
    %v3910 = vand.u32 %v2502, 4294901760
    %3911 = vmatpush1.msra.mxu0 %v3910
    %v3912 = vand.u32 %v2505, 4294901760
    %3913 = vmatprep.subr.mxu0 %v3912
    %v3914 = vand.u32 %v2504, 4294901760
    %3915 = vmatpush1.msra.mxu0 %v3914
    %v3916 = vand.u32 %v2507, 4294901760
    %3917 = vmatprep.subr.mxu0 %v3916
    %v3918 = vand.u32 %v2506, 4294901760
    %3919 = vmatpush1.msra.mxu0 %v3918
    %v3920 = vand.u32 %v2509, 4294901760
    %3921 = vmatprep.subr.mxu0 %v3920
    %v3922 = vand.u32 %v2508, 4294901760
    %3923 = vmatpush1.msra.mxu0 %v3922
    %v3924 = vand.u32 %v2379, 4294901760
    %v3925 = vsub.f32 %v2379, %v3924
    %v3926 = vand.u32 %v3925, 4294901760
    %v3927 = vsub.f32 %v3925, %v3926
    %v3928 = vand.u32 %v3927, 4294901760
    %3929 = vmatprep.mubr.f32.mxu0 %v3928
    %v3930 = vand.u32 %v2372, 4294901760
    %v3931 = vsub.f32 %v2372, %v3930
    %v3932 = vand.u32 %v3931, 4294901760
    %v3933 = vsub.f32 %v3931, %v3932
    %v3934 = vand.u32 %v3933, 4294901760
    %3935 = vmatmul.mubr.f32.gmra.mrb[0].mxu0 %v3934
    %v3936 = vpop.f32.mrb[0].mxu0
    %v3937 = vadd.f32 %v3792, %v3936
    %v3938 = vpop.f32.mrb[0].mxu0
    %v3939 = vadd.f32 %v3794, %v3938
    %3940 = vdwg.mxu0
    %v3941 = vand.u32 %v2447, 4294901760
    %v3942 = vsub.f32 %v2447, %v3941
    %v3943 = vand.u32 %v3942, 4294901760
    %v3944 = vsub.f32 %v3942, %v3943
    %v3945 = vand.u32 %v3944, 4294901760
    %3946 = vmatprep.subr.mxu0 %v3945
    %v3947 = vand.u32 %v2446, 4294901760
    %v3948 = vsub.f32 %v2446, %v3947
    %v3949 = vand.u32 %v3948, 4294901760
    %v3950 = vsub.f32 %v3948, %v3949
    %v3951 = vand.u32 %v3950, 4294901760
    %3952 = vmatpush1.msra.mxu0 %v3951
    %v3953 = vand.u32 %v2449, 4294901760
    %v3954 = vsub.f32 %v2449, %v3953
    %v3955 = vand.u32 %v3954, 4294901760
    %v3956 = vsub.f32 %v3954, %v3955
    %v3957 = vand.u32 %v3956, 4294901760
    %3958 = vmatprep.subr.mxu0 %v3957
    %v3959 = vand.u32 %v2448, 4294901760
    %v3960 = vsub.f32 %v2448, %v3959
    %v3961 = vand.u32 %v3960, 4294901760
    %v3962 = vsub.f32 %v3960, %v3961
    %v3963 = vand.u32 %v3962, 4294901760
    %3964 = vmatpush1.msra.mxu0 %v3963
    %v3965 = vand.u32 %v2451, 4294901760
    %v3966 = vsub.f32 %v2451, %v3965
    %v3967 = vand.u32 %v3966, 4294901760
    %v3968 = vsub.f32 %v3966, %v3967
    %v3969 = vand.u32 %v3968, 4294901760
    %3970 = vmatprep.subr.mxu0 %v3969
    %v3971 = vand.u32 %v2450, 4294901760
    %v3972 = vsub.f32 %v2450, %v3971
    %v3973 = vand.u32 %v3972, 4294901760
    %v3974 = vsub.f32 %v3972, %v3973
    %v3975 = vand.u32 %v3974, 4294901760
    %3976 = vmatpush1.msra.mxu0 %v3975
    %v3977 = vand.u32 %v2453, 4294901760
    %v3978 = vsub.f32 %v2453, %v3977
    %v3979 = vand.u32 %v3978, 4294901760
    %v3980 = vsub.f32 %v3978, %v3979
    %v3981 = vand.u32 %v3980, 4294901760
    %3982 = vmatprep.subr.mxu0 %v3981
    %v3983 = vand.u32 %v2452, 4294901760
    %v3984 = vsub.f32 %v2452, %v3983
    %v3985 = vand.u32 %v3984, 4294901760
    %v3986 = vsub.f32 %v3984, %v3985
    %v3987 = vand.u32 %v3986, 4294901760
    %3988 = vmatpush1.msra.mxu0 %v3987
    %v3989 = vand.u32 %v2455, 4294901760
    %v3990 = vsub.f32 %v2455, %v3989
    %v3991 = vand.u32 %v3990, 4294901760
    %v3992 = vsub.f32 %v3990, %v3991
    %v3993 = vand.u32 %v3992, 4294901760
    %3994 = vmatprep.subr.mxu0 %v3993
    %v3995 = vand.u32 %v2454, 4294901760
    %v3996 = vsub.f32 %v2454, %v3995
    %v3997 = vand.u32 %v3996, 4294901760
    %v3998 = vsub.f32 %v3996, %v3997
    %v3999 = vand.u32 %v3998, 4294901760
    %4000 = vmatpush1.msra.mxu0 %v3999
    %v4001 = vand.u32 %v2457, 4294901760
    %v4002 = vsub.f32 %v2457, %v4001
    %v4003 = vand.u32 %v4002, 4294901760
    %v4004 = vsub.f32 %v4002, %v4003
    %v4005 = vand.u32 %v4004, 4294901760
    %4006 = vmatprep.subr.mxu0 %v4005
    %v4007 = vand.u32 %v2456, 4294901760
    %v4008 = vsub.f32 %v2456, %v4007
    %v4009 = vand.u32 %v4008, 4294901760
    %v4010 = vsub.f32 %v4008, %v4009
    %v4011 = vand.u32 %v4010, 4294901760
    %4012 = vmatpush1.msra.mxu0 %v4011
    %v4013 = vand.u32 %v2459, 4294901760
    %v4014 = vsub.f32 %v2459, %v4013
    %v4015 = vand.u32 %v4014, 4294901760
    %v4016 = vsub.f32 %v4014, %v4015
    %v4017 = vand.u32 %v4016, 4294901760
    %4018 = vmatprep.subr.mxu0 %v4017
    %v4019 = vand.u32 %v2458, 4294901760
    %v4020 = vsub.f32 %v2458, %v4019
    %v4021 = vand.u32 %v4020, 4294901760
    %v4022 = vsub.f32 %v4020, %v4021
    %v4023 = vand.u32 %v4022, 4294901760
    %4024 = vmatpush1.msra.mxu0 %v4023
    %v4025 = vand.u32 %v2461, 4294901760
    %v4026 = vsub.f32 %v2461, %v4025
    %v4027 = vand.u32 %v4026, 4294901760
    %v4028 = vsub.f32 %v4026, %v4027
    %v4029 = vand.u32 %v4028, 4294901760
    %4030 = vmatprep.subr.mxu0 %v4029
    %v4031 = vand.u32 %v2460, 4294901760
    %v4032 = vsub.f32 %v2460, %v4031
    %v4033 = vand.u32 %v4032, 4294901760
    %v4034 = vsub.f32 %v4032, %v4033
    %v4035 = vand.u32 %v4034, 4294901760
    %4036 = vmatpush1.msra.mxu0 %v4035
    %v4037 = vand.u32 %v2463, 4294901760
    %v4038 = vsub.f32 %v2463, %v4037
    %v4039 = vand.u32 %v4038, 4294901760
    %v4040 = vsub.f32 %v4038, %v4039
    %v4041 = vand.u32 %v4040, 4294901760
    %4042 = vmatprep.subr.mxu0 %v4041
    %v4043 = vand.u32 %v2462, 4294901760
    %v4044 = vsub.f32 %v2462, %v4043
    %v4045 = vand.u32 %v4044, 4294901760
    %v4046 = vsub.f32 %v4044, %v4045
    %v4047 = vand.u32 %v4046, 4294901760
    %4048 = vmatpush1.msra.mxu0 %v4047
    %v4049 = vand.u32 %v2465, 4294901760
    %v4050 = vsub.f32 %v2465, %v4049
    %v4051 = vand.u32 %v4050, 4294901760
    %v4052 = vsub.f32 %v4050, %v4051
    %v4053 = vand.u32 %v4052, 4294901760
    %4054 = vmatprep.subr.mxu0 %v4053
    %v4055 = vand.u32 %v2464, 4294901760
    %v4056 = vsub.f32 %v2464, %v4055
    %v4057 = vand.u32 %v4056, 4294901760
    %v4058 = vsub.f32 %v4056, %v4057
    %v4059 = vand.u32 %v4058, 4294901760
    %4060 = vmatpush1.msra.mxu0 %v4059
    %v4061 = vand.u32 %v2467, 4294901760
    %v4062 = vsub.f32 %v2467, %v4061
    %v4063 = vand.u32 %v4062, 4294901760
    %v4064 = vsub.f32 %v4062, %v4063
    %v4065 = vand.u32 %v4064, 4294901760
    %4066 = vmatprep.subr.mxu0 %v4065
    %v4067 = vand.u32 %v2466, 4294901760
    %v4068 = vsub.f32 %v2466, %v4067
    %v4069 = vand.u32 %v4068, 4294901760
    %v4070 = vsub.f32 %v4068, %v4069
    %v4071 = vand.u32 %v4070, 4294901760
    %4072 = vmatpush1.msra.mxu0 %v4071
    %v4073 = vand.u32 %v2469, 4294901760
    %v4074 = vsub.f32 %v2469, %v4073
    %v4075 = vand.u32 %v4074, 4294901760
    %v4076 = vsub.f32 %v4074, %v4075
    %v4077 = vand.u32 %v4076, 4294901760
    %4078 = vmatprep.subr.mxu0 %v4077
    %v4079 = vand.u32 %v2468, 4294901760
    %v4080 = vsub.f32 %v2468, %v4079
    %v4081 = vand.u32 %v4080, 4294901760
    %v4082 = vsub.f32 %v4080, %v4081
    %v4083 = vand.u32 %v4082, 4294901760
    %4084 = vmatpush1.msra.mxu0 %v4083
    %v4085 = vand.u32 %v2471, 4294901760
    %v4086 = vsub.f32 %v2471, %v4085
    %v4087 = vand.u32 %v4086, 4294901760
    %v4088 = vsub.f32 %v4086, %v4087
    %v4089 = vand.u32 %v4088, 4294901760
    %4090 = vmatprep.subr.mxu0 %v4089
    %v4091 = vand.u32 %v2470, 4294901760
    %v4092 = vsub.f32 %v2470, %v4091
    %v4093 = vand.u32 %v4092, 4294901760
    %v4094 = vsub.f32 %v4092, %v4093
    %v4095 = vand.u32 %v4094, 4294901760
    %4096 = vmatpush1.msra.mxu0 %v4095
    %v4097 = vand.u32 %v2473, 4294901760
    %v4098 = vsub.f32 %v2473, %v4097
    %v4099 = vand.u32 %v4098, 4294901760
    %v4100 = vsub.f32 %v4098, %v4099
    %v4101 = vand.u32 %v4100, 4294901760
    %4102 = vmatprep.subr.mxu0 %v4101
    %v4103 = vand.u32 %v2472, 4294901760
    %v4104 = vsub.f32 %v2472, %v4103
    %v4105 = vand.u32 %v4104, 4294901760
    %v4106 = vsub.f32 %v4104, %v4105
    %v4107 = vand.u32 %v4106, 4294901760
    %4108 = vmatpush1.msra.mxu0 %v4107
    %v4109 = vand.u32 %v2475, 4294901760
    %v4110 = vsub.f32 %v2475, %v4109
    %v4111 = vand.u32 %v4110, 4294901760
    %v4112 = vsub.f32 %v4110, %v4111
    %v4113 = vand.u32 %v4112, 4294901760
    %4114 = vmatprep.subr.mxu0 %v4113
    %v4115 = vand.u32 %v2474, 4294901760
    %v4116 = vsub.f32 %v2474, %v4115
    %v4117 = vand.u32 %v4116, 4294901760
    %v4118 = vsub.f32 %v4116, %v4117
    %v4119 = vand.u32 %v4118, 4294901760
    %4120 = vmatpush1.msra.mxu0 %v4119
    %v4121 = vand.u32 %v2477, 4294901760
    %v4122 = vsub.f32 %v2477, %v4121
    %v4123 = vand.u32 %v4122, 4294901760
    %v4124 = vsub.f32 %v4122, %v4123
    %v4125 = vand.u32 %v4124, 4294901760
    %4126 = vmatprep.subr.mxu0 %v4125
    %v4127 = vand.u32 %v2476, 4294901760
    %v4128 = vsub.f32 %v2476, %v4127
    %v4129 = vand.u32 %v4128, 4294901760
    %v4130 = vsub.f32 %v4128, %v4129
    %v4131 = vand.u32 %v4130, 4294901760
    %4132 = vmatpush1.msra.mxu0 %v4131
    %v4133 = vand.u32 %v2479, 4294901760
    %v4134 = vsub.f32 %v2479, %v4133
    %v4135 = vand.u32 %v4134, 4294901760
    %v4136 = vsub.f32 %v4134, %v4135
    %v4137 = vand.u32 %v4136, 4294901760
    %4138 = vmatprep.subr.mxu0 %v4137
    %v4139 = vand.u32 %v2478, 4294901760
    %v4140 = vsub.f32 %v2478, %v4139
    %v4141 = vand.u32 %v4140, 4294901760
    %v4142 = vsub.f32 %v4140, %v4141
    %v4143 = vand.u32 %v4142, 4294901760
    %4144 = vmatpush1.msra.mxu0 %v4143
    %v4145 = vand.u32 %v2481, 4294901760
    %v4146 = vsub.f32 %v2481, %v4145
    %v4147 = vand.u32 %v4146, 4294901760
    %v4148 = vsub.f32 %v4146, %v4147
    %v4149 = vand.u32 %v4148, 4294901760
    %4150 = vmatprep.subr.mxu0 %v4149
    %v4151 = vand.u32 %v2480, 4294901760
    %v4152 = vsub.f32 %v2480, %v4151
    %v4153 = vand.u32 %v4152, 4294901760
    %v4154 = vsub.f32 %v4152, %v4153
    %v4155 = vand.u32 %v4154, 4294901760
    %4156 = vmatpush1.msra.mxu0 %v4155
    %v4157 = vand.u32 %v2483, 4294901760
    %v4158 = vsub.f32 %v2483, %v4157
    %v4159 = vand.u32 %v4158, 4294901760
    %v4160 = vsub.f32 %v4158, %v4159
    %v4161 = vand.u32 %v4160, 4294901760
    %4162 = vmatprep.subr.mxu0 %v4161
    %v4163 = vand.u32 %v2482, 4294901760
    %v4164 = vsub.f32 %v2482, %v4163
    %v4165 = vand.u32 %v4164, 4294901760
    %v4166 = vsub.f32 %v4164, %v4165
    %v4167 = vand.u32 %v4166, 4294901760
    %4168 = vmatpush1.msra.mxu0 %v4167
    %v4169 = vand.u32 %v2485, 4294901760
    %v4170 = vsub.f32 %v2485, %v4169
    %v4171 = vand.u32 %v4170, 4294901760
    %v4172 = vsub.f32 %v4170, %v4171
    %v4173 = vand.u32 %v4172, 4294901760
    %4174 = vmatprep.subr.mxu0 %v4173
    %v4175 = vand.u32 %v2484, 4294901760
    %v4176 = vsub.f32 %v2484, %v4175
    %v4177 = vand.u32 %v4176, 4294901760
    %v4178 = vsub.f32 %v4176, %v4177
    %v4179 = vand.u32 %v4178, 4294901760
    %4180 = vmatpush1.msra.mxu0 %v4179
    %v4181 = vand.u32 %v2487, 4294901760
    %v4182 = vsub.f32 %v2487, %v4181
    %v4183 = vand.u32 %v4182, 4294901760
    %v4184 = vsub.f32 %v4182, %v4183
    %v4185 = vand.u32 %v4184, 4294901760
    %4186 = vmatprep.subr.mxu0 %v4185
    %v4187 = vand.u32 %v2486, 4294901760
    %v4188 = vsub.f32 %v2486, %v4187
    %v4189 = vand.u32 %v4188, 4294901760
    %v4190 = vsub.f32 %v4188, %v4189
    %v4191 = vand.u32 %v4190, 4294901760
    %4192 = vmatpush1.msra.mxu0 %v4191
    %v4193 = vand.u32 %v2489, 4294901760
    %v4194 = vsub.f32 %v2489, %v4193
    %v4195 = vand.u32 %v4194, 4294901760
    %v4196 = vsub.f32 %v4194, %v4195
    %v4197 = vand.u32 %v4196, 4294901760
    %4198 = vmatprep.subr.mxu0 %v4197
    %v4199 = vand.u32 %v2488, 4294901760
    %v4200 = vsub.f32 %v2488, %v4199
    %v4201 = vand.u32 %v4200, 4294901760
    %v4202 = vsub.f32 %v4200, %v4201
    %v4203 = vand.u32 %v4202, 4294901760
    %4204 = vmatpush1.msra.mxu0 %v4203
    %v4205 = vand.u32 %v2491, 4294901760
    %v4206 = vsub.f32 %v2491, %v4205
    %v4207 = vand.u32 %v4206, 4294901760
    %v4208 = vsub.f32 %v4206, %v4207
    %v4209 = vand.u32 %v4208, 4294901760
    %4210 = vmatprep.subr.mxu0 %v4209
    %v4211 = vand.u32 %v2490, 4294901760
    %v4212 = vsub.f32 %v2490, %v4211
    %v4213 = vand.u32 %v4212, 4294901760
    %v4214 = vsub.f32 %v4212, %v4213
    %v4215 = vand.u32 %v4214, 4294901760
    %4216 = vmatpush1.msra.mxu0 %v4215
    %v4217 = vand.u32 %v2493, 4294901760
    %v4218 = vsub.f32 %v2493, %v4217
    %v4219 = vand.u32 %v4218, 4294901760
    %v4220 = vsub.f32 %v4218, %v4219
    %v4221 = vand.u32 %v4220, 4294901760
    %4222 = vmatprep.subr.mxu0 %v4221
    %v4223 = vand.u32 %v2492, 4294901760
    %v4224 = vsub.f32 %v2492, %v4223
    %v4225 = vand.u32 %v4224, 4294901760
    %v4226 = vsub.f32 %v4224, %v4225
    %v4227 = vand.u32 %v4226, 4294901760
    %4228 = vmatpush1.msra.mxu0 %v4227
    %v4229 = vand.u32 %v2495, 4294901760
    %v4230 = vsub.f32 %v2495, %v4229
    %v4231 = vand.u32 %v4230, 4294901760
    %v4232 = vsub.f32 %v4230, %v4231
    %v4233 = vand.u32 %v4232, 4294901760
    %4234 = vmatprep.subr.mxu0 %v4233
    %v4235 = vand.u32 %v2494, 4294901760
    %v4236 = vsub.f32 %v2494, %v4235
    %v4237 = vand.u32 %v4236, 4294901760
    %v4238 = vsub.f32 %v4236, %v4237
    %v4239 = vand.u32 %v4238, 4294901760
    %4240 = vmatpush1.msra.mxu0 %v4239
    %v4241 = vand.u32 %v2497, 4294901760
    %v4242 = vsub.f32 %v2497, %v4241
    %v4243 = vand.u32 %v4242, 4294901760
    %v4244 = vsub.f32 %v4242, %v4243
    %v4245 = vand.u32 %v4244, 4294901760
    %4246 = vmatprep.subr.mxu0 %v4245
    %v4247 = vand.u32 %v2496, 4294901760
    %v4248 = vsub.f32 %v2496, %v4247
    %v4249 = vand.u32 %v4248, 4294901760
    %v4250 = vsub.f32 %v4248, %v4249
    %v4251 = vand.u32 %v4250, 4294901760
    %4252 = vmatpush1.msra.mxu0 %v4251
    %v4253 = vand.u32 %v2499, 4294901760
    %v4254 = vsub.f32 %v2499, %v4253
    %v4255 = vand.u32 %v4254, 4294901760
    %v4256 = vsub.f32 %v4254, %v4255
    %v4257 = vand.u32 %v4256, 4294901760
    %4258 = vmatprep.subr.mxu0 %v4257
    %v4259 = vand.u32 %v2498, 4294901760
    %v4260 = vsub.f32 %v2498, %v4259
    %v4261 = vand.u32 %v4260, 4294901760
    %v4262 = vsub.f32 %v4260, %v4261
    %v4263 = vand.u32 %v4262, 4294901760
    %4264 = vmatpush1.msra.mxu0 %v4263
    %v4265 = vand.u32 %v2501, 4294901760
    %v4266 = vsub.f32 %v2501, %v4265
    %v4267 = vand.u32 %v4266, 4294901760
    %v4268 = vsub.f32 %v4266, %v4267
    %v4269 = vand.u32 %v4268, 4294901760
    %4270 = vmatprep.subr.mxu0 %v4269
    %v4271 = vand.u32 %v2500, 4294901760
    %v4272 = vsub.f32 %v2500, %v4271
    %v4273 = vand.u32 %v4272, 4294901760
    %v4274 = vsub.f32 %v4272, %v4273
    %v4275 = vand.u32 %v4274, 4294901760
    %4276 = vmatpush1.msra.mxu0 %v4275
    %v4277 = vand.u32 %v2503, 4294901760
    %v4278 = vsub.f32 %v2503, %v4277
    %v4279 = vand.u32 %v4278, 4294901760
    %v4280 = vsub.f32 %v4278, %v4279
    %v4281 = vand.u32 %v4280, 4294901760
    %4282 = vmatprep.subr.mxu0 %v4281
    %v4283 = vand.u32 %v2502, 4294901760
    %v4284 = vsub.f32 %v2502, %v4283
    %v4285 = vand.u32 %v4284, 4294901760
    %v4286 = vsub.f32 %v4284, %v4285
    %v4287 = vand.u32 %v4286, 4294901760
    %4288 = vmatpush1.msra.mxu0 %v4287
    %v4289 = vand.u32 %v2505, 4294901760
    %v4290 = vsub.f32 %v2505, %v4289
    %v4291 = vand.u32 %v4290, 4294901760
    %v4292 = vsub.f32 %v4290, %v4291
    %v4293 = vand.u32 %v4292, 4294901760
    %4294 = vmatprep.subr.mxu0 %v4293
    %v4295 = vand.u32 %v2504, 4294901760
    %v4296 = vsub.f32 %v2504, %v4295
    %v4297 = vand.u32 %v4296, 4294901760
    %v4298 = vsub.f32 %v4296, %v4297
    %v4299 = vand.u32 %v4298, 4294901760
    %4300 = vmatpush1.msra.mxu0 %v4299
    %v4301 = vand.u32 %v2507, 4294901760
    %v4302 = vsub.f32 %v2507, %v4301
    %v4303 = vand.u32 %v4302, 4294901760
    %v4304 = vsub.f32 %v4302, %v4303
    %v4305 = vand.u32 %v4304, 4294901760
    %4306 = vmatprep.subr.mxu0 %v4305
    %v4307 = vand.u32 %v2506, 4294901760
    %v4308 = vsub.f32 %v2506, %v4307
    %v4309 = vand.u32 %v4308, 4294901760
    %v4310 = vsub.f32 %v4308, %v4309
    %v4311 = vand.u32 %v4310, 4294901760
    %4312 = vmatpush1.msra.mxu0 %v4311
    %v4313 = vand.u32 %v2509, 4294901760
    %v4314 = vsub.f32 %v2509, %v4313
    %v4315 = vand.u32 %v4314, 4294901760
    %v4316 = vsub.f32 %v4314, %v4315
    %v4317 = vand.u32 %v4316, 4294901760
    %4318 = vmatprep.subr.mxu0 %v4317
    %v4319 = vand.u32 %v2508, 4294901760
    %v4320 = vsub.f32 %v2508, %v4319
    %v4321 = vand.u32 %v4320, 4294901760
    %v4322 = vsub.f32 %v4320, %v4321
    %v4323 = vand.u32 %v4322, 4294901760
    %4324 = vmatpush1.msra.mxu0 %v4323
    %v4325 = vand.u32 %v2379, 4294901760
    %4326 = vmatprep.mubr.f32.mxu0 %v4325
    %v4327 = vand.u32 %v2372, 4294901760
    %4328 = vmatmul.mubr.f32.gmra.mrb[0].mxu0 %v4327
    %v4329 = vpop.f32.mrb[0].mxu0
    %v4330 = vadd.f32 %v3937, %v4329
    %v4331 = vpop.f32.mrb[0].mxu0
    %v4332 = vadd.f32 %v3939, %v4331
    %4333 = vdwg.mxu0
    %v4334 = vand.u32 %v2447, 4294901760
    %v4335 = vsub.f32 %v2447, %v4334
    %4336 = vmatprep.subr.mxu0 %v4335
    %v4337 = vand.u32 %v2446, 4294901760
    %v4338 = vsub.f32 %v2446, %v4337
    %4339 = vmatpush1.msra.mxu0 %v4338
    %v4340 = vand.u32 %v2449, 4294901760
    %v4341 = vsub.f32 %v2449, %v4340
    %4342 = vmatprep.subr.mxu0 %v4341
    %v4343 = vand.u32 %v2448, 4294901760
    %v4344 = vsub.f32 %v2448, %v4343
    %4345 = vmatpush1.msra.mxu0 %v4344
    %v4346 = vand.u32 %v2451, 4294901760
    %v4347 = vsub.f32 %v2451, %v4346
    %4348 = vmatprep.subr.mxu0 %v4347
    %v4349 = vand.u32 %v2450, 4294901760
    %v4350 = vsub.f32 %v2450, %v4349
    %4351 = vmatpush1.msra.mxu0 %v4350
    %v4352 = vand.u32 %v2453, 4294901760
    %v4353 = vsub.f32 %v2453, %v4352
    %4354 = vmatprep.subr.mxu0 %v4353
    %v4355 = vand.u32 %v2452, 4294901760
    %v4356 = vsub.f32 %v2452, %v4355
    %4357 = vmatpush1.msra.mxu0 %v4356
    %v4358 = vand.u32 %v2455, 4294901760
    %v4359 = vsub.f32 %v2455, %v4358
    %4360 = vmatprep.subr.mxu0 %v4359
    %v4361 = vand.u32 %v2454, 4294901760
    %v4362 = vsub.f32 %v2454, %v4361
    %4363 = vmatpush1.msra.mxu0 %v4362
    %v4364 = vand.u32 %v2457, 4294901760
    %v4365 = vsub.f32 %v2457, %v4364
    %4366 = vmatprep.subr.mxu0 %v4365
    %v4367 = vand.u32 %v2456, 4294901760
    %v4368 = vsub.f32 %v2456, %v4367
    %4369 = vmatpush1.msra.mxu0 %v4368
    %v4370 = vand.u32 %v2459, 4294901760
    %v4371 = vsub.f32 %v2459, %v4370
    %4372 = vmatprep.subr.mxu0 %v4371
    %v4373 = vand.u32 %v2458, 4294901760
    %v4374 = vsub.f32 %v2458, %v4373
    %4375 = vmatpush1.msra.mxu0 %v4374
    %v4376 = vand.u32 %v2461, 4294901760
    %v4377 = vsub.f32 %v2461, %v4376
    %4378 = vmatprep.subr.mxu0 %v4377
    %v4379 = vand.u32 %v2460, 4294901760
    %v4380 = vsub.f32 %v2460, %v4379
    %4381 = vmatpush1.msra.mxu0 %v4380
    %v4382 = vand.u32 %v2463, 4294901760
    %v4383 = vsub.f32 %v2463, %v4382
    %4384 = vmatprep.subr.mxu0 %v4383
    %v4385 = vand.u32 %v2462, 4294901760
    %v4386 = vsub.f32 %v2462, %v4385
    %4387 = vmatpush1.msra.mxu0 %v4386
    %v4388 = vand.u32 %v2465, 4294901760
    %v4389 = vsub.f32 %v2465, %v4388
    %4390 = vmatprep.subr.mxu0 %v4389
    %v4391 = vand.u32 %v2464, 4294901760
    %v4392 = vsub.f32 %v2464, %v4391
    %4393 = vmatpush1.msra.mxu0 %v4392
    %v4394 = vand.u32 %v2467, 4294901760
    %v4395 = vsub.f32 %v2467, %v4394
    %4396 = vmatprep.subr.mxu0 %v4395
    %v4397 = vand.u32 %v2466, 4294901760
    %v4398 = vsub.f32 %v2466, %v4397
    %4399 = vmatpush1.msra.mxu0 %v4398
    %v4400 = vand.u32 %v2469, 4294901760
    %v4401 = vsub.f32 %v2469, %v4400
    %4402 = vmatprep.subr.mxu0 %v4401
    %v4403 = vand.u32 %v2468, 4294901760
    %v4404 = vsub.f32 %v2468, %v4403
    %4405 = vmatpush1.msra.mxu0 %v4404
    %v4406 = vand.u32 %v2471, 4294901760
    %v4407 = vsub.f32 %v2471, %v4406
    %4408 = vmatprep.subr.mxu0 %v4407
    %v4409 = vand.u32 %v2470, 4294901760
    %v4410 = vsub.f32 %v2470, %v4409
    %4411 = vmatpush1.msra.mxu0 %v4410
    %v4412 = vand.u32 %v2473, 4294901760
    %v4413 = vsub.f32 %v2473, %v4412
    %4414 = vmatprep.subr.mxu0 %v4413
    %v4415 = vand.u32 %v2472, 4294901760
    %v4416 = vsub.f32 %v2472, %v4415
    %4417 = vmatpush1.msra.mxu0 %v4416
    %v4418 = vand.u32 %v2475, 4294901760
    %v4419 = vsub.f32 %v2475, %v4418
    %4420 = vmatprep.subr.mxu0 %v4419
    %v4421 = vand.u32 %v2474, 4294901760
    %v4422 = vsub.f32 %v2474, %v4421
    %4423 = vmatpush1.msra.mxu0 %v4422
    %v4424 = vand.u32 %v2477, 4294901760
    %v4425 = vsub.f32 %v2477, %v4424
    %4426 = vmatprep.subr.mxu0 %v4425
    %v4427 = vand.u32 %v2476, 4294901760
    %v4428 = vsub.f32 %v2476, %v4427
    %4429 = vmatpush1.msra.mxu0 %v4428
    %v4430 = vand.u32 %v2479, 4294901760
    %v4431 = vsub.f32 %v2479, %v4430
    %4432 = vmatprep.subr.mxu0 %v4431
    %v4433 = vand.u32 %v2478, 4294901760
    %v4434 = vsub.f32 %v2478, %v4433
    %4435 = vmatpush1.msra.mxu0 %v4434
    %v4436 = vand.u32 %v2481, 4294901760
    %v4437 = vsub.f32 %v2481, %v4436
    %4438 = vmatprep.subr.mxu0 %v4437
    %v4439 = vand.u32 %v2480, 4294901760
    %v4440 = vsub.f32 %v2480, %v4439
    %4441 = vmatpush1.msra.mxu0 %v4440
    %v4442 = vand.u32 %v2483, 4294901760
    %v4443 = vsub.f32 %v2483, %v4442
    %4444 = vmatprep.subr.mxu0 %v4443
    %v4445 = vand.u32 %v2482, 4294901760
    %v4446 = vsub.f32 %v2482, %v4445
    %4447 = vmatpush1.msra.mxu0 %v4446
    %v4448 = vand.u32 %v2485, 4294901760
    %v4449 = vsub.f32 %v2485, %v4448
    %4450 = vmatprep.subr.mxu0 %v4449
    %v4451 = vand.u32 %v2484, 4294901760
    %v4452 = vsub.f32 %v2484, %v4451
    %4453 = vmatpush1.msra.mxu0 %v4452
    %v4454 = vand.u32 %v2487, 4294901760
    %v4455 = vsub.f32 %v2487, %v4454
    %4456 = vmatprep.subr.mxu0 %v4455
    %v4457 = vand.u32 %v2486, 4294901760
    %v4458 = vsub.f32 %v2486, %v4457
    %4459 = vmatpush1.msra.mxu0 %v4458
    %v4460 = vand.u32 %v2489, 4294901760
    %v4461 = vsub.f32 %v2489, %v4460
    %4462 = vmatprep.subr.mxu0 %v4461
    %v4463 = vand.u32 %v2488, 4294901760
    %v4464 = vsub.f32 %v2488, %v4463
    %4465 = vmatpush1.msra.mxu0 %v4464
    %v4466 = vand.u32 %v2491, 4294901760
    %v4467 = vsub.f32 %v2491, %v4466
    %4468 = vmatprep.subr.mxu0 %v4467
    %v4469 = vand.u32 %v2490, 4294901760
    %v4470 = vsub.f32 %v2490, %v4469
    %4471 = vmatpush1.msra.mxu0 %v4470
    %v4472 = vand.u32 %v2493, 4294901760
    %v4473 = vsub.f32 %v2493, %v4472
    %4474 = vmatprep.subr.mxu0 %v4473
    %v4475 = vand.u32 %v2492, 4294901760
    %v4476 = vsub.f32 %v2492, %v4475
    %4477 = vmatpush1.msra.mxu0 %v4476
    %v4478 = vand.u32 %v2495, 4294901760
    %v4479 = vsub.f32 %v2495, %v4478
    %4480 = vmatprep.subr.mxu0 %v4479
    %v4481 = vand.u32 %v2494, 4294901760
    %v4482 = vsub.f32 %v2494, %v4481
    %4483 = vmatpush1.msra.mxu0 %v4482
    %v4484 = vand.u32 %v2497, 4294901760
    %v4485 = vsub.f32 %v2497, %v4484
    %4486 = vmatprep.subr.mxu0 %v4485
    %v4487 = vand.u32 %v2496, 4294901760
    %v4488 = vsub.f32 %v2496, %v4487
    %4489 = vmatpush1.msra.mxu0 %v4488
    %v4490 = vand.u32 %v2499, 4294901760
    %v4491 = vsub.f32 %v2499, %v4490
    %4492 = vmatprep.subr.mxu0 %v4491
    %v4493 = vand.u32 %v2498, 4294901760
    %v4494 = vsub.f32 %v2498, %v4493
    %4495 = vmatpush1.msra.mxu0 %v4494
    %v4496 = vand.u32 %v2501, 4294901760
    %v4497 = vsub.f32 %v2501, %v4496
    %4498 = vmatprep.subr.mxu0 %v4497
    %v4499 = vand.u32 %v2500, 4294901760
    %v4500 = vsub.f32 %v2500, %v4499
    %4501 = vmatpush1.msra.mxu0 %v4500
    %v4502 = vand.u32 %v2503, 4294901760
    %v4503 = vsub.f32 %v2503, %v4502
    %4504 = vmatprep.subr.mxu0 %v4503
    %v4505 = vand.u32 %v2502, 4294901760
    %v4506 = vsub.f32 %v2502, %v4505
    %4507 = vmatpush1.msra.mxu0 %v4506
    %v4508 = vand.u32 %v2505, 4294901760
    %v4509 = vsub.f32 %v2505, %v4508
    %4510 = vmatprep.subr.mxu0 %v4509
    %v4511 = vand.u32 %v2504, 4294901760
    %v4512 = vsub.f32 %v2504, %v4511
    %4513 = vmatpush1.msra.mxu0 %v4512
    %v4514 = vand.u32 %v2507, 4294901760
    %v4515 = vsub.f32 %v2507, %v4514
    %4516 = vmatprep.subr.mxu0 %v4515
    %v4517 = vand.u32 %v2506, 4294901760
    %v4518 = vsub.f32 %v2506, %v4517
    %4519 = vmatpush1.msra.mxu0 %v4518
    %v4520 = vand.u32 %v2509, 4294901760
    %v4521 = vsub.f32 %v2509, %v4520
    %4522 = vmatprep.subr.mxu0 %v4521
    %v4523 = vand.u32 %v2508, 4294901760
    %v4524 = vsub.f32 %v2508, %v4523
    %4525 = vmatpush1.msra.mxu0 %v4524
    %v4526 = vand.u32 %v2379, 4294901760
    %v4527 = vsub.f32 %v2379, %v4526
    %4528 = vmatprep.mubr.f32.mxu0 %v4527
    %v4529 = vand.u32 %v2372, 4294901760
    %v4530 = vsub.f32 %v2372, %v4529
    %4531 = vmatmul.mubr.f32.gmra.mrb[0].mxu0 %v4530
    %v4532 = vpop.f32.mrb[0].mxu0
    %v4533 = vadd.f32 %v4330, %v4532
    %v4534 = vpop.f32.mrb[0].mxu0
    %v4535 = vadd.f32 %v4332, %v4534
    %4536 = vdwg.mxu0
    %v4537 = vand.u32 %v2447, 4294901760
    %4538 = vmatprep.subr.mxu0 %v4537
    %v4539 = vand.u32 %v2446, 4294901760
    %4540 = vmatpush1.msra.mxu0 %v4539
    %v4541 = vand.u32 %v2449, 4294901760
    %4542 = vmatprep.subr.mxu0 %v4541
    %v4543 = vand.u32 %v2448, 4294901760
    %4544 = vmatpush1.msra.mxu0 %v4543
    %v4545 = vand.u32 %v2451, 4294901760
    %4546 = vmatprep.subr.mxu0 %v4545
    %v4547 = vand.u32 %v2450, 4294901760
    %4548 = vmatpush1.msra.mxu0 %v4547
    %v4549 = vand.u32 %v2453, 4294901760
    %4550 = vmatprep.subr.mxu0 %v4549
    %v4551 = vand.u32 %v2452, 4294901760
    %4552 = vmatpush1.msra.mxu0 %v4551
    %v4553 = vand.u32 %v2455, 4294901760
    %4554 = vmatprep.subr.mxu0 %v4553
    %v4555 = vand.u32 %v2454, 4294901760
    %4556 = vmatpush1.msra.mxu0 %v4555
    %v4557 = vand.u32 %v2457, 4294901760
    %4558 = vmatprep.subr.mxu0 %v4557
    %v4559 = vand.u32 %v2456, 4294901760
    %4560 = vmatpush1.msra.mxu0 %v4559
    %v4561 = vand.u32 %v2459, 4294901760
    %4562 = vmatprep.subr.mxu0 %v4561
    %v4563 = vand.u32 %v2458, 4294901760
    %4564 = vmatpush1.msra.mxu0 %v4563
    %v4565 = vand.u32 %v2461, 4294901760
    %4566 = vmatprep.subr.mxu0 %v4565
    %v4567 = vand.u32 %v2460, 4294901760
    %4568 = vmatpush1.msra.mxu0 %v4567
    %v4569 = vand.u32 %v2463, 4294901760
    %4570 = vmatprep.subr.mxu0 %v4569
    %v4571 = vand.u32 %v2462, 4294901760
    %4572 = vmatpush1.msra.mxu0 %v4571
    %v4573 = vand.u32 %v2465, 4294901760
    %4574 = vmatprep.subr.mxu0 %v4573
    %v4575 = vand.u32 %v2464, 4294901760
    %4576 = vmatpush1.msra.mxu0 %v4575
    %v4577 = vand.u32 %v2467, 4294901760
    %4578 = vmatprep.subr.mxu0 %v4577
    %v4579 = vand.u32 %v2466, 4294901760
    %4580 = vmatpush1.msra.mxu0 %v4579
    %v4581 = vand.u32 %v2469, 4294901760
    %4582 = vmatprep.subr.mxu0 %v4581
    %v4583 = vand.u32 %v2468, 4294901760
    %4584 = vmatpush1.msra.mxu0 %v4583
    %v4585 = vand.u32 %v2471, 4294901760
    %4586 = vmatprep.subr.mxu0 %v4585
    %v4587 = vand.u32 %v2470, 4294901760
    %4588 = vmatpush1.msra.mxu0 %v4587
    %v4589 = vand.u32 %v2473, 4294901760
    %4590 = vmatprep.subr.mxu0 %v4589
    %v4591 = vand.u32 %v2472, 4294901760
    %4592 = vmatpush1.msra.mxu0 %v4591
    %v4593 = vand.u32 %v2475, 4294901760
    %4594 = vmatprep.subr.mxu0 %v4593
    %v4595 = vand.u32 %v2474, 4294901760
    %4596 = vmatpush1.msra.mxu0 %v4595
    %v4597 = vand.u32 %v2477, 4294901760
    %4598 = vmatprep.subr.mxu0 %v4597
    %v4599 = vand.u32 %v2476, 4294901760
    %4600 = vmatpush1.msra.mxu0 %v4599
    %v4601 = vand.u32 %v2479, 4294901760
    %4602 = vmatprep.subr.mxu0 %v4601
    %v4603 = vand.u32 %v2478, 4294901760
    %4604 = vmatpush1.msra.mxu0 %v4603
    %v4605 = vand.u32 %v2481, 4294901760
    %4606 = vmatprep.subr.mxu0 %v4605
    %v4607 = vand.u32 %v2480, 4294901760
    %4608 = vmatpush1.msra.mxu0 %v4607
    %v4609 = vand.u32 %v2483, 4294901760
    %4610 = vmatprep.subr.mxu0 %v4609
    %v4611 = vand.u32 %v2482, 4294901760
    %4612 = vmatpush1.msra.mxu0 %v4611
    %v4613 = vand.u32 %v2485, 4294901760
    %4614 = vmatprep.subr.mxu0 %v4613
    %v4615 = vand.u32 %v2484, 4294901760
    %4616 = vmatpush1.msra.mxu0 %v4615
    %v4617 = vand.u32 %v2487, 4294901760
    %4618 = vmatprep.subr.mxu0 %v4617
    %v4619 = vand.u32 %v2486, 4294901760
    %4620 = vmatpush1.msra.mxu0 %v4619
    %v4621 = vand.u32 %v2489, 4294901760
    %4622 = vmatprep.subr.mxu0 %v4621
    %v4623 = vand.u32 %v2488, 4294901760
    %4624 = vmatpush1.msra.mxu0 %v4623
    %v4625 = vand.u32 %v2491, 4294901760
    %4626 = vmatprep.subr.mxu0 %v4625
    %v4627 = vand.u32 %v2490, 4294901760
    %4628 = vmatpush1.msra.mxu0 %v4627
    %v4629 = vand.u32 %v2493, 4294901760
    %4630 = vmatprep.subr.mxu0 %v4629
    %v4631 = vand.u32 %v2492, 4294901760
    %4632 = vmatpush1.msra.mxu0 %v4631
    %v4633 = vand.u32 %v2495, 4294901760
    %4634 = vmatprep.subr.mxu0 %v4633
    %v4635 = vand.u32 %v2494, 4294901760
    %4636 = vmatpush1.msra.mxu0 %v4635
    %v4637 = vand.u32 %v2497, 4294901760
    %4638 = vmatprep.subr.mxu0 %v4637
    %v4639 = vand.u32 %v2496, 4294901760
    %4640 = vmatpush1.msra.mxu0 %v4639
    %v4641 = vand.u32 %v2499, 4294901760
    %4642 = vmatprep.subr.mxu0 %v4641
    %v4643 = vand.u32 %v2498, 4294901760
    %4644 = vmatpush1.msra.mxu0 %v4643
    %v4645 = vand.u32 %v2501, 4294901760
    %4646 = vmatprep.subr.mxu0 %v4645
    %v4647 = vand.u32 %v2500, 4294901760
    %4648 = vmatpush1.msra.mxu0 %v4647
    %v4649 = vand.u32 %v2503, 4294901760
    %4650 = vmatprep.subr.mxu0 %v4649
    %v4651 = vand.u32 %v2502, 4294901760
    %4652 = vmatpush1.msra.mxu0 %v4651
    %v4653 = vand.u32 %v2505, 4294901760
    %4654 = vmatprep.subr.mxu0 %v4653
    %v4655 = vand.u32 %v2504, 4294901760
    %4656 = vmatpush1.msra.mxu0 %v4655
    %v4657 = vand.u32 %v2507, 4294901760
    %4658 = vmatprep.subr.mxu0 %v4657
    %v4659 = vand.u32 %v2506, 4294901760
    %4660 = vmatpush1.msra.mxu0 %v4659
    %v4661 = vand.u32 %v2509, 4294901760
    %4662 = vmatprep.subr.mxu0 %v4661
    %v4663 = vand.u32 %v2508, 4294901760
    %4664 = vmatpush1.msra.mxu0 %v4663
    %v4665 = vand.u32 %v2379, 4294901760
    %v4666 = vsub.f32 %v2379, %v4665
    %v4667 = vand.u32 %v4666, 4294901760
    %4668 = vmatprep.mubr.f32.mxu0 %v4667
    %v4669 = vand.u32 %v2372, 4294901760
    %v4670 = vsub.f32 %v2372, %v4669
    %v4671 = vand.u32 %v4670, 4294901760
    %4672 = vmatmul.mubr.f32.gmra.mrb[0].mxu0 %v4671
    %v4673 = vpop.f32.mrb[0].mxu0
    %v4674 = vadd.f32 %v4533, %v4673
    %v4675 = vpop.f32.mrb[0].mxu0
    %v4676 = vadd.f32 %v4535, %v4675
    %4677 = vdwg.mxu0
    %v4678 = vand.u32 %v2447, 4294901760
    %v4679 = vsub.f32 %v2447, %v4678
    %v4680 = vand.u32 %v4679, 4294901760
    %4681 = vmatprep.subr.mxu0 %v4680
    %v4682 = vand.u32 %v2446, 4294901760
    %v4683 = vsub.f32 %v2446, %v4682
    %v4684 = vand.u32 %v4683, 4294901760
    %4685 = vmatpush1.msra.mxu0 %v4684
    %v4686 = vand.u32 %v2449, 4294901760
    %v4687 = vsub.f32 %v2449, %v4686
    %v4688 = vand.u32 %v4687, 4294901760
    %4689 = vmatprep.subr.mxu0 %v4688
    %v4690 = vand.u32 %v2448, 4294901760
    %v4691 = vsub.f32 %v2448, %v4690
    %v4692 = vand.u32 %v4691, 4294901760
    %4693 = vmatpush1.msra.mxu0 %v4692
    %v4694 = vand.u32 %v2451, 4294901760
    %v4695 = vsub.f32 %v2451, %v4694
    %v4696 = vand.u32 %v4695, 4294901760
    %4697 = vmatprep.subr.mxu0 %v4696
    %v4698 = vand.u32 %v2450, 4294901760
    %v4699 = vsub.f32 %v2450, %v4698
    %v4700 = vand.u32 %v4699, 4294901760
    %4701 = vmatpush1.msra.mxu0 %v4700
    %v4702 = vand.u32 %v2453, 4294901760
    %v4703 = vsub.f32 %v2453, %v4702
    %v4704 = vand.u32 %v4703, 4294901760
    %4705 = vmatprep.subr.mxu0 %v4704
    %v4706 = vand.u32 %v2452, 4294901760
    %v4707 = vsub.f32 %v2452, %v4706
    %v4708 = vand.u32 %v4707, 4294901760
    %4709 = vmatpush1.msra.mxu0 %v4708
    %v4710 = vand.u32 %v2455, 4294901760
    %v4711 = vsub.f32 %v2455, %v4710
    %v4712 = vand.u32 %v4711, 4294901760
    %4713 = vmatprep.subr.mxu0 %v4712
    %v4714 = vand.u32 %v2454, 4294901760
    %v4715 = vsub.f32 %v2454, %v4714
    %v4716 = vand.u32 %v4715, 4294901760
    %4717 = vmatpush1.msra.mxu0 %v4716
    %v4718 = vand.u32 %v2457, 4294901760
    %v4719 = vsub.f32 %v2457, %v4718
    %v4720 = vand.u32 %v4719, 4294901760
    %4721 = vmatprep.subr.mxu0 %v4720
    %v4722 = vand.u32 %v2456, 4294901760
    %v4723 = vsub.f32 %v2456, %v4722
    %v4724 = vand.u32 %v4723, 4294901760
    %4725 = vmatpush1.msra.mxu0 %v4724
    %v4726 = vand.u32 %v2459, 4294901760
    %v4727 = vsub.f32 %v2459, %v4726
    %v4728 = vand.u32 %v4727, 4294901760
    %4729 = vmatprep.subr.mxu0 %v4728
    %v4730 = vand.u32 %v2458, 4294901760
    %v4731 = vsub.f32 %v2458, %v4730
    %v4732 = vand.u32 %v4731, 4294901760
    %4733 = vmatpush1.msra.mxu0 %v4732
    %v4734 = vand.u32 %v2461, 4294901760
    %v4735 = vsub.f32 %v2461, %v4734
    %v4736 = vand.u32 %v4735, 4294901760
    %4737 = vmatprep.subr.mxu0 %v4736
    %v4738 = vand.u32 %v2460, 4294901760
    %v4739 = vsub.f32 %v2460, %v4738
    %v4740 = vand.u32 %v4739, 4294901760
    %4741 = vmatpush1.msra.mxu0 %v4740
    %v4742 = vand.u32 %v2463, 4294901760
    %v4743 = vsub.f32 %v2463, %v4742
    %v4744 = vand.u32 %v4743, 4294901760
    %4745 = vmatprep.subr.mxu0 %v4744
    %v4746 = vand.u32 %v2462, 4294901760
    %v4747 = vsub.f32 %v2462, %v4746
    %v4748 = vand.u32 %v4747, 4294901760
    %4749 = vmatpush1.msra.mxu0 %v4748
    %v4750 = vand.u32 %v2465, 4294901760
    %v4751 = vsub.f32 %v2465, %v4750
    %v4752 = vand.u32 %v4751, 4294901760
    %4753 = vmatprep.subr.mxu0 %v4752
    %v4754 = vand.u32 %v2464, 4294901760
    %v4755 = vsub.f32 %v2464, %v4754
    %v4756 = vand.u32 %v4755, 4294901760
    %4757 = vmatpush1.msra.mxu0 %v4756
    %v4758 = vand.u32 %v2467, 4294901760
    %v4759 = vsub.f32 %v2467, %v4758
    %v4760 = vand.u32 %v4759, 4294901760
    %4761 = vmatprep.subr.mxu0 %v4760
    %v4762 = vand.u32 %v2466, 4294901760
    %v4763 = vsub.f32 %v2466, %v4762
    %v4764 = vand.u32 %v4763, 4294901760
    %4765 = vmatpush1.msra.mxu0 %v4764
    %v4766 = vand.u32 %v2469, 4294901760
    %v4767 = vsub.f32 %v2469, %v4766
    %v4768 = vand.u32 %v4767, 4294901760
    %4769 = vmatprep.subr.mxu0 %v4768
    %v4770 = vand.u32 %v2468, 4294901760
    %v4771 = vsub.f32 %v2468, %v4770
    %v4772 = vand.u32 %v4771, 4294901760
    %4773 = vmatpush1.msra.mxu0 %v4772
    %v4774 = vand.u32 %v2471, 4294901760
    %v4775 = vsub.f32 %v2471, %v4774
    %v4776 = vand.u32 %v4775, 4294901760
    %4777 = vmatprep.subr.mxu0 %v4776
    %v4778 = vand.u32 %v2470, 4294901760
    %v4779 = vsub.f32 %v2470, %v4778
    %v4780 = vand.u32 %v4779, 4294901760
    %4781 = vmatpush1.msra.mxu0 %v4780
    %v4782 = vand.u32 %v2473, 4294901760
    %v4783 = vsub.f32 %v2473, %v4782
    %v4784 = vand.u32 %v4783, 4294901760
    %4785 = vmatprep.subr.mxu0 %v4784
    %v4786 = vand.u32 %v2472, 4294901760
    %v4787 = vsub.f32 %v2472, %v4786
    %v4788 = vand.u32 %v4787, 4294901760
    %4789 = vmatpush1.msra.mxu0 %v4788
    %v4790 = vand.u32 %v2475, 4294901760
    %v4791 = vsub.f32 %v2475, %v4790
    %v4792 = vand.u32 %v4791, 4294901760
    %4793 = vmatprep.subr.mxu0 %v4792
    %v4794 = vand.u32 %v2474, 4294901760
    %v4795 = vsub.f32 %v2474, %v4794
    %v4796 = vand.u32 %v4795, 4294901760
    %4797 = vmatpush1.msra.mxu0 %v4796
    %v4798 = vand.u32 %v2477, 4294901760
    %v4799 = vsub.f32 %v2477, %v4798
    %v4800 = vand.u32 %v4799, 4294901760
    %4801 = vmatprep.subr.mxu0 %v4800
    %v4802 = vand.u32 %v2476, 4294901760
    %v4803 = vsub.f32 %v2476, %v4802
    %v4804 = vand.u32 %v4803, 4294901760
    %4805 = vmatpush1.msra.mxu0 %v4804
    %v4806 = vand.u32 %v2479, 4294901760
    %v4807 = vsub.f32 %v2479, %v4806
    %v4808 = vand.u32 %v4807, 4294901760
    %4809 = vmatprep.subr.mxu0 %v4808
    %v4810 = vand.u32 %v2478, 4294901760
    %v4811 = vsub.f32 %v2478, %v4810
    %v4812 = vand.u32 %v4811, 4294901760
    %4813 = vmatpush1.msra.mxu0 %v4812
    %v4814 = vand.u32 %v2481, 4294901760
    %v4815 = vsub.f32 %v2481, %v4814
    %v4816 = vand.u32 %v4815, 4294901760
    %4817 = vmatprep.subr.mxu0 %v4816
    %v4818 = vand.u32 %v2480, 4294901760
    %v4819 = vsub.f32 %v2480, %v4818
    %v4820 = vand.u32 %v4819, 4294901760
    %4821 = vmatpush1.msra.mxu0 %v4820
    %v4822 = vand.u32 %v2483, 4294901760
    %v4823 = vsub.f32 %v2483, %v4822
    %v4824 = vand.u32 %v4823, 4294901760
    %4825 = vmatprep.subr.mxu0 %v4824
    %v4826 = vand.u32 %v2482, 4294901760
    %v4827 = vsub.f32 %v2482, %v4826
    %v4828 = vand.u32 %v4827, 4294901760
    %4829 = vmatpush1.msra.mxu0 %v4828
    %v4830 = vand.u32 %v2485, 4294901760
    %v4831 = vsub.f32 %v2485, %v4830
    %v4832 = vand.u32 %v4831, 4294901760
    %4833 = vmatprep.subr.mxu0 %v4832
    %v4834 = vand.u32 %v2484, 4294901760
    %v4835 = vsub.f32 %v2484, %v4834
    %v4836 = vand.u32 %v4835, 4294901760
    %4837 = vmatpush1.msra.mxu0 %v4836
    %v4838 = vand.u32 %v2487, 4294901760
    %v4839 = vsub.f32 %v2487, %v4838
    %v4840 = vand.u32 %v4839, 4294901760
    %4841 = vmatprep.subr.mxu0 %v4840
    %v4842 = vand.u32 %v2486, 4294901760
    %v4843 = vsub.f32 %v2486, %v4842
    %v4844 = vand.u32 %v4843, 4294901760
    %4845 = vmatpush1.msra.mxu0 %v4844
    %v4846 = vand.u32 %v2489, 4294901760
    %v4847 = vsub.f32 %v2489, %v4846
    %v4848 = vand.u32 %v4847, 4294901760
    %4849 = vmatprep.subr.mxu0 %v4848
    %v4850 = vand.u32 %v2488, 4294901760
    %v4851 = vsub.f32 %v2488, %v4850
    %v4852 = vand.u32 %v4851, 4294901760
    %4853 = vmatpush1.msra.mxu0 %v4852
    %v4854 = vand.u32 %v2491, 4294901760
    %v4855 = vsub.f32 %v2491, %v4854
    %v4856 = vand.u32 %v4855, 4294901760
    %4857 = vmatprep.subr.mxu0 %v4856
    %v4858 = vand.u32 %v2490, 4294901760
    %v4859 = vsub.f32 %v2490, %v4858
    %v4860 = vand.u32 %v4859, 4294901760
    %4861 = vmatpush1.msra.mxu0 %v4860
    %v4862 = vand.u32 %v2493, 4294901760
    %v4863 = vsub.f32 %v2493, %v4862
    %v4864 = vand.u32 %v4863, 4294901760
    %4865 = vmatprep.subr.mxu0 %v4864
    %v4866 = vand.u32 %v2492, 4294901760
    %v4867 = vsub.f32 %v2492, %v4866
    %v4868 = vand.u32 %v4867, 4294901760
    %4869 = vmatpush1.msra.mxu0 %v4868
    %v4870 = vand.u32 %v2495, 4294901760
    %v4871 = vsub.f32 %v2495, %v4870
    %v4872 = vand.u32 %v4871, 4294901760
    %4873 = vmatprep.subr.mxu0 %v4872
    %v4874 = vand.u32 %v2494, 4294901760
    %v4875 = vsub.f32 %v2494, %v4874
    %v4876 = vand.u32 %v4875, 4294901760
    %4877 = vmatpush1.msra.mxu0 %v4876
    %v4878 = vand.u32 %v2497, 4294901760
    %v4879 = vsub.f32 %v2497, %v4878
    %v4880 = vand.u32 %v4879, 4294901760
    %4881 = vmatprep.subr.mxu0 %v4880
    %v4882 = vand.u32 %v2496, 4294901760
    %v4883 = vsub.f32 %v2496, %v4882
    %v4884 = vand.u32 %v4883, 4294901760
    %4885 = vmatpush1.msra.mxu0 %v4884
    %v4886 = vand.u32 %v2499, 4294901760
    %v4887 = vsub.f32 %v2499, %v4886
    %v4888 = vand.u32 %v4887, 4294901760
    %4889 = vmatprep.subr.mxu0 %v4888
    %v4890 = vand.u32 %v2498, 4294901760
    %v4891 = vsub.f32 %v2498, %v4890
    %v4892 = vand.u32 %v4891, 4294901760
    %4893 = vmatpush1.msra.mxu0 %v4892
    %v4894 = vand.u32 %v2501, 4294901760
    %v4895 = vsub.f32 %v2501, %v4894
    %v4896 = vand.u32 %v4895, 4294901760
    %4897 = vmatprep.subr.mxu0 %v4896
    %v4898 = vand.u32 %v2500, 4294901760
    %v4899 = vsub.f32 %v2500, %v4898
    %v4900 = vand.u32 %v4899, 4294901760
    %4901 = vmatpush1.msra.mxu0 %v4900
    %v4902 = vand.u32 %v2503, 4294901760
    %v4903 = vsub.f32 %v2503, %v4902
    %v4904 = vand.u32 %v4903, 4294901760
    %4905 = vmatprep.subr.mxu0 %v4904
    %v4906 = vand.u32 %v2502, 4294901760
    %v4907 = vsub.f32 %v2502, %v4906
    %v4908 = vand.u32 %v4907, 4294901760
    %4909 = vmatpush1.msra.mxu0 %v4908
    %v4910 = vand.u32 %v2505, 4294901760
    %v4911 = vsub.f32 %v2505, %v4910
    %v4912 = vand.u32 %v4911, 4294901760
    %4913 = vmatprep.subr.mxu0 %v4912
    %v4914 = vand.u32 %v2504, 4294901760
    %v4915 = vsub.f32 %v2504, %v4914
    %v4916 = vand.u32 %v4915, 4294901760
    %4917 = vmatpush1.msra.mxu0 %v4916
    %v4918 = vand.u32 %v2507, 4294901760
    %v4919 = vsub.f32 %v2507, %v4918
    %v4920 = vand.u32 %v4919, 4294901760
    %4921 = vmatprep.subr.mxu0 %v4920
    %v4922 = vand.u32 %v2506, 4294901760
    %v4923 = vsub.f32 %v2506, %v4922
    %v4924 = vand.u32 %v4923, 4294901760
    %4925 = vmatpush1.msra.mxu0 %v4924
    %v4926 = vand.u32 %v2509, 4294901760
    %v4927 = vsub.f32 %v2509, %v4926
    %v4928 = vand.u32 %v4927, 4294901760
    %4929 = vmatprep.subr.mxu0 %v4928
    %v4930 = vand.u32 %v2508, 4294901760
    %v4931 = vsub.f32 %v2508, %v4930
    %v4932 = vand.u32 %v4931, 4294901760
    %4933 = vmatpush1.msra.mxu0 %v4932
    %v4934 = vand.u32 %v2379, 4294901760
    %4935 = vmatprep.mubr.f32.mxu0 %v4934
    %v4936 = vand.u32 %v2372, 4294901760
    %4937 = vmatmul.mubr.f32.gmra.mrb[0].mxu0 %v4936
    %v4938 = vpop.f32.mrb[0].mxu0
    %v4939 = vadd.f32 %v4674, %v4938
    %v4940 = vpop.f32.mrb[0].mxu0
    %v4941 = vadd.f32 %v4676, %v4940
    %4942 = vdwg.mxu0
    %v4943 = vand.u32 %v2447, 4294901760
    %4944 = vmatprep.subr.mxu0 %v4943
    %v4945 = vand.u32 %v2446, 4294901760
    %4946 = vmatpush1.msra.mxu0 %v4945
    %v4947 = vand.u32 %v2449, 4294901760
    %4948 = vmatprep.subr.mxu0 %v4947
    %v4949 = vand.u32 %v2448, 4294901760
    %4950 = vmatpush1.msra.mxu0 %v4949
    %v4951 = vand.u32 %v2451, 4294901760
    %4952 = vmatprep.subr.mxu0 %v4951
    %v4953 = vand.u32 %v2450, 4294901760
    %4954 = vmatpush1.msra.mxu0 %v4953
    %v4955 = vand.u32 %v2453, 4294901760
    %4956 = vmatprep.subr.mxu0 %v4955
    %v4957 = vand.u32 %v2452, 4294901760
    %4958 = vmatpush1.msra.mxu0 %v4957
    %v4959 = vand.u32 %v2455, 4294901760
    %4960 = vmatprep.subr.mxu0 %v4959
    %v4961 = vand.u32 %v2454, 4294901760
    %4962 = vmatpush1.msra.mxu0 %v4961
    %v4963 = vand.u32 %v2457, 4294901760
    %4964 = vmatprep.subr.mxu0 %v4963
    %v4965 = vand.u32 %v2456, 4294901760
    %4966 = vmatpush1.msra.mxu0 %v4965
    %v4967 = vand.u32 %v2459, 4294901760
    %4968 = vmatprep.subr.mxu0 %v4967
    %v4969 = vand.u32 %v2458, 4294901760
    %4970 = vmatpush1.msra.mxu0 %v4969
    %v4971 = vand.u32 %v2461, 4294901760
    %4972 = vmatprep.subr.mxu0 %v4971
    %v4973 = vand.u32 %v2460, 4294901760
    %4974 = vmatpush1.msra.mxu0 %v4973
    %v4975 = vand.u32 %v2463, 4294901760
    %4976 = vmatprep.subr.mxu0 %v4975
    %v4977 = vand.u32 %v2462, 4294901760
    %4978 = vmatpush1.msra.mxu0 %v4977
    %v4979 = vand.u32 %v2465, 4294901760
    %4980 = vmatprep.subr.mxu0 %v4979
    %v4981 = vand.u32 %v2464, 4294901760
    %4982 = vmatpush1.msra.mxu0 %v4981
    %v4983 = vand.u32 %v2467, 4294901760
    %4984 = vmatprep.subr.mxu0 %v4983
    %v4985 = vand.u32 %v2466, 4294901760
    %4986 = vmatpush1.msra.mxu0 %v4985
    %v4987 = vand.u32 %v2469, 4294901760
    %4988 = vmatprep.subr.mxu0 %v4987
    %v4989 = vand.u32 %v2468, 4294901760
    %4990 = vmatpush1.msra.mxu0 %v4989
    %v4991 = vand.u32 %v2471, 4294901760
    %4992 = vmatprep.subr.mxu0 %v4991
    %v4993 = vand.u32 %v2470, 4294901760
    %4994 = vmatpush1.msra.mxu0 %v4993
    %v4995 = vand.u32 %v2473, 4294901760
    %4996 = vmatprep.subr.mxu0 %v4995
    %v4997 = vand.u32 %v2472, 4294901760
    %4998 = vmatpush1.msra.mxu0 %v4997
    %v4999 = vand.u32 %v2475, 4294901760
    %5000 = vmatprep.subr.mxu0 %v4999
    %v5001 = vand.u32 %v2474, 4294901760
    %5002 = vmatpush1.msra.mxu0 %v5001
    %v5003 = vand.u32 %v2477, 4294901760
    %5004 = vmatprep.subr.mxu0 %v5003
    %v5005 = vand.u32 %v2476, 4294901760
    %5006 = vmatpush1.msra.mxu0 %v5005
    %v5007 = vand.u32 %v2479, 4294901760
    %5008 = vmatprep.subr.mxu0 %v5007
    %v5009 = vand.u32 %v2478, 4294901760
    %5010 = vmatpush1.msra.mxu0 %v5009
    %v5011 = vand.u32 %v2481, 4294901760
    %5012 = vmatprep.subr.mxu0 %v5011
    %v5013 = vand.u32 %v2480, 4294901760
    %5014 = vmatpush1.msra.mxu0 %v5013
    %v5015 = vand.u32 %v2483, 4294901760
    %5016 = vmatprep.subr.mxu0 %v5015
    %v5017 = vand.u32 %v2482, 4294901760
    %5018 = vmatpush1.msra.mxu0 %v5017
    %v5019 = vand.u32 %v2485, 4294901760
    %5020 = vmatprep.subr.mxu0 %v5019
    %v5021 = vand.u32 %v2484, 4294901760
    %5022 = vmatpush1.msra.mxu0 %v5021
    %v5023 = vand.u32 %v2487, 4294901760
    %5024 = vmatprep.subr.mxu0 %v5023
    %v5025 = vand.u32 %v2486, 4294901760
    %5026 = vmatpush1.msra.mxu0 %v5025
    %v5027 = vand.u32 %v2489, 4294901760
    %5028 = vmatprep.subr.mxu0 %v5027
    %v5029 = vand.u32 %v2488, 4294901760
    %5030 = vmatpush1.msra.mxu0 %v5029
    %v5031 = vand.u32 %v2491, 4294901760
    %5032 = vmatprep.subr.mxu0 %v5031
    %v5033 = vand.u32 %v2490, 4294901760
    %5034 = vmatpush1.msra.mxu0 %v5033
    %v5035 = vand.u32 %v2493, 4294901760
    %5036 = vmatprep.subr.mxu0 %v5035
    %v5037 = vand.u32 %v2492, 4294901760
    %5038 = vmatpush1.msra.mxu0 %v5037
    %v5039 = vand.u32 %v2495, 4294901760
    %5040 = vmatprep.subr.mxu0 %v5039
    %v5041 = vand.u32 %v2494, 4294901760
    %5042 = vmatpush1.msra.mxu0 %v5041
    %v5043 = vand.u32 %v2497, 4294901760
    %5044 = vmatprep.subr.mxu0 %v5043
    %v5045 = vand.u32 %v2496, 4294901760
    %5046 = vmatpush1.msra.mxu0 %v5045
    %v5047 = vand.u32 %v2499, 4294901760
    %5048 = vmatprep.subr.mxu0 %v5047
    %v5049 = vand.u32 %v2498, 4294901760
    %5050 = vmatpush1.msra.mxu0 %v5049
    %v5051 = vand.u32 %v2501, 4294901760
    %5052 = vmatprep.subr.mxu0 %v5051
    %v5053 = vand.u32 %v2500, 4294901760
    %5054 = vmatpush1.msra.mxu0 %v5053
    %v5055 = vand.u32 %v2503, 4294901760
    %5056 = vmatprep.subr.mxu0 %v5055
    %v5057 = vand.u32 %v2502, 4294901760
    %5058 = vmatpush1.msra.mxu0 %v5057
    %v5059 = vand.u32 %v2505, 4294901760
    %5060 = vmatprep.subr.mxu0 %v5059
    %v5061 = vand.u32 %v2504, 4294901760
    %5062 = vmatpush1.msra.mxu0 %v5061
    %v5063 = vand.u32 %v2507, 4294901760
    %5064 = vmatprep.subr.mxu0 %v5063
    %v5065 = vand.u32 %v2506, 4294901760
    %5066 = vmatpush1.msra.mxu0 %v5065
    %v5067 = vand.u32 %v2509, 4294901760
    %5068 = vmatprep.subr.mxu0 %v5067
    %v5069 = vand.u32 %v2508, 4294901760
    %5070 = vmatpush1.msra.mxu0 %v5069
    %v5071 = vand.u32 %v2379, 4294901760
    %5072 = vmatprep.mubr.f32.mxu0 %v5071
    %v5073 = vand.u32 %v2372, 4294901760
    %5074 = vmatmul.mubr.f32.gmra.mrb[0].mxu0 %v5073
    %v5075 = vpop.f32.mrb[0].mxu0
    %v5076 = vadd.f32 %v4939, %v5075
    %v5077 = vpop.f32.mrb[0].mxu0
    %v5078 = vadd.f32 %v4941, %v5077
    %5079 = vdwg.mxu0
    %v5080 = vxor.u32 %v5076, 2147483648
    %v5081 = vxor.u32 %v5078, 2147483648
    %v5082 = vmul.f32 %v5080, 1.442695
    %v5083 = vpow.pop %v5082
    %v5084 = vmul.f32 %v5081, 1.442695
    %v5085 = vpow.pop %v5084
    %v5086 = vadd.f32 %v5083, 1.0
    %v5087 = vadd.f32 %v5085, 1.0
    %v5088 = vrcp.pop %v5086
    %v5089 = vmul.f32 1.0, %v5088
    %v5090 = vrcp.pop %v5087
    %v5091 = vmul.f32 1.0, %v5090
    %v5094 = vcombine.low %v5089, %v5091
    %v5095 = vcombine.high %v5089, %v5091
    %v5097 = vunpack.c.l.s4 1966171168
    %v5098 = vunpack.c.0.s8 %v5097
    %v5099 = vlaneseq
    %v5100 = vshrl.u32 %v5099, 7
    %v5101 = vsub.s32 %v5098, %v5100
    %v5102 = vrot.slane %v5094, %v5101
    %v5104 = vunpack.c.l.s4 1966171168
    %v5105 = vunpack.c.0.s8 %v5104
    %v5106 = vlaneseq
    %v5107 = vshrl.u32 %v5106, 7
    %v5108 = vsub.s32 %v5105, %v5107
    %v5109 = vrot.slane %v5095, %v5108
    %v5110 = vcombine.high %v5102, %v5102
    %v5111 = vcombine.high %v5109, %v5109
    %v5113 = vunpack.c.l.s4 1966171168
    %v5114 = vunpack.c.0.s8 %v5113
    %v5115 = vlaneseq
    %v5116 = vshrl.u32 %v5115, 7
    %v5117 = vsub.s32 %v5114, %v5116
    %v5118 = vrot.slane %v5102, %v5117
    %v5120 = vunpack.c.l.s4 1966171168
    %v5121 = vunpack.c.0.s8 %v5120
    %v5122 = vlaneseq
    %v5123 = vshrl.u32 %v5122, 7
    %v5124 = vsub.s32 %v5121, %v5123
    %v5125 = vrot.slane %v5109, %v5124
    %v5127 = vunpack.c.l.s4 1966171168
    %v5128 = vunpack.c.0.s8 %v5127
    %v5129 = vlaneseq
    %v5130 = vshrl.u32 %v5129, 7
    %v5131 = vsub.s32 %v5128, %v5130
    %v5132 = vrot.slane %v5110, %v5131
    %v5134 = vunpack.c.l.s4 1966171168
    %v5135 = vunpack.c.0.s8 %v5134
    %v5136 = vlaneseq
    %v5137 = vshrl.u32 %v5136, 7
    %v5138 = vsub.s32 %v5135, %v5137
    %v5139 = vrot.slane %v5111, %v5138
    %v5140 = vcombine.high %v5118, %v5118
    %v5141 = vcombine.high %v5125, %v5125
    %v5142 = vcombine.high %v5132, %v5132
    %v5143 = vcombine.high %v5139, %v5139
    %v5144 = vlaneseq
    %v5145 = vshrl.u32 %v5144, 7
    %v5146 = vsub.s32 0, %v5145
    %v5147 = vrot.slane %v5118, %v5146
    %v5148 = vlaneseq
    %v5149 = vshrl.u32 %v5148, 7
    %v5150 = vsub.s32 1, %v5149
    %v5151 = vrot.slane %v5118, %v5150
    %v5152 = vlaneseq
    %v5153 = vshrl.u32 %v5152, 7
    %v5154 = vsub.s32 0, %v5153
    %v5155 = vrot.slane %v5132, %v5154
    %v5156 = vlaneseq
    %v5157 = vshrl.u32 %v5156, 7
    %v5158 = vsub.s32 1, %v5157
    %v5159 = vrot.slane %v5132, %v5158
    %v5160 = vlaneseq
    %v5161 = vshrl.u32 %v5160, 7
    %v5162 = vsub.s32 0, %v5161
    %v5163 = vrot.slane %v5140, %v5162
    %v5164 = vlaneseq
    %v5165 = vshrl.u32 %v5164, 7
    %v5166 = vsub.s32 1, %v5165
    %v5167 = vrot.slane %v5140, %v5166
    %v5168 = vlaneseq
    %v5169 = vshrl.u32 %v5168, 7
    %v5170 = vsub.s32 0, %v5169
    %v5171 = vrot.slane %v5142, %v5170
    %v5172 = vlaneseq
    %v5173 = vshrl.u32 %v5172, 7
    %v5174 = vsub.s32 1, %v5173
    %v5175 = vrot.slane %v5142, %v5174
    %v5176 = vlaneseq
    %v5177 = vshrl.u32 %v5176, 7
    %v5178 = vsub.s32 0, %v5177
    %v5179 = vrot.slane %v5125, %v5178
    %v5180 = vlaneseq
    %v5181 = vshrl.u32 %v5180, 7
    %v5182 = vsub.s32 1, %v5181
    %v5183 = vrot.slane %v5125, %v5182
    %v5184 = vlaneseq
    %v5185 = vshrl.u32 %v5184, 7
    %v5186 = vsub.s32 0, %v5185
    %v5187 = vrot.slane %v5139, %v5186
    %v5188 = vlaneseq
    %v5189 = vshrl.u32 %v5188, 7
    %v5190 = vsub.s32 1, %v5189
    %v5191 = vrot.slane %v5139, %v5190
    %v5192 = vlaneseq
    %v5193 = vshrl.u32 %v5192, 7
    %v5194 = vsub.s32 0, %v5193
    %v5195 = vrot.slane %v5141, %v5194
    %v5196 = vlaneseq
    %v5197 = vshrl.u32 %v5196, 7
    %v5198 = vsub.s32 1, %v5197
    %v5199 = vrot.slane %v5141, %v5198
    %v5200 = vlaneseq
    %v5201 = vshrl.u32 %v5200, 7
    %v5202 = vsub.s32 0, %v5201
    %v5203 = vrot.slane %v5143, %v5202
    %v5204 = vlaneseq
    %v5205 = vshrl.u32 %v5204, 7
    %v5206 = vsub.s32 1, %v5205
    %v5207 = vrot.slane %v5143, %v5206
    %v5224 = vmul.f32 %v1950, %v5147
    %v5225 = vmul.f32 %v1951, %v5151
    %v5226 = vmul.f32 %v1952, %v5147
    %v5227 = vmul.f32 %v1953, %v5151
    %v5228 = vmul.f32 %v1954, %v5147
    %v5229 = vmul.f32 %v1955, %v5151
    %v5230 = vmul.f32 %v1956, %v5147
    %v5231 = vmul.f32 %v1957, %v5151
    %v5232 = vmul.f32 %v1958, %v5155
    %v5233 = vmul.f32 %v1959, %v5159
    %v5234 = vmul.f32 %v1960, %v5155
    %v5235 = vmul.f32 %v1961, %v5159
    %v5236 = vmul.f32 %v1962, %v5155
    %v5237 = vmul.f32 %v1963, %v5159
    %v5238 = vmul.f32 %v1964, %v5155
    %v5239 = vmul.f32 %v1965, %v5159
    %v5240 = vmul.f32 %v1966, %v5163
    %v5241 = vmul.f32 %v1967, %v5167
    %v5242 = vmul.f32 %v1968, %v5163
    %v5243 = vmul.f32 %v1969, %v5167
    %v5244 = vmul.f32 %v1970, %v5163
    %v5245 = vmul.f32 %v1971, %v5167
    %v5246 = vmul.f32 %v1972, %v5163
    %v5247 = vmul.f32 %v1973, %v5167
    %v5248 = vmul.f32 %v1974, %v5171
    %v5249 = vmul.f32 %v1975, %v5175
    %v5250 = vmul.f32 %v1976, %v5171
    %v5251 = vmul.f32 %v1977, %v5175
    %v5252 = vmul.f32 %v1978, %v5171
    %v5253 = vmul.f32 %v1979, %v5175
    %v5254 = vmul.f32 %v1980, %v5171
    %v5255 = vmul.f32 %v1981, %v5175
    %v5256 = vmul.f32 %v1982, %v5179
    %v5257 = vmul.f32 %v1983, %v5183
    %v5258 = vmul.f32 %v1984, %v5179
    %v5259 = vmul.f32 %v1985, %v5183
    %v5260 = vmul.f32 %v1986, %v5179
    %v5261 = vmul.f32 %v1987, %v5183
    %v5262 = vmul.f32 %v1988, %v5179
    %v5263 = vmul.f32 %v1989, %v5183
    %v5264 = vmul.f32 %v1990, %v5187
    %v5265 = vmul.f32 %v1991, %v5191
    %v5266 = vmul.f32 %v1992, %v5187
    %v5267 = vmul.f32 %v1993, %v5191
    %v5268 = vmul.f32 %v1994, %v5187
    %v5269 = vmul.f32 %v1995, %v5191
    %v5270 = vmul.f32 %v1996, %v5187
    %v5271 = vmul.f32 %v1997, %v5191
    %v5272 = vmul.f32 %v1998, %v5195
    %v5273 = vmul.f32 %v1999, %v5199
    %v5274 = vmul.f32 %v2000, %v5195
    %v5275 = vmul.f32 %v2001, %v5199
    %v5276 = vmul.f32 %v2002, %v5195
    %v5277 = vmul.f32 %v2003, %v5199
    %v5278 = vmul.f32 %v2004, %v5195
    %v5279 = vmul.f32 %v2005, %v5199
    %v5280 = vmul.f32 %v2006, %v5203
    %v5281 = vmul.f32 %v2007, %v5207
    %v5282 = vmul.f32 %v2008, %v5203
    %v5283 = vmul.f32 %v2009, %v5207
    %v5284 = vmul.f32 %v2010, %v5203
    %v5285 = vmul.f32 %v2011, %v5207
    %v5286 = vmul.f32 %v2012, %v5203
    %v5287 = vmul.f32 %v2013, %v5207
    %5288 = vst [vmem:[#allocation8] sm:$0xff] %v5224
    %5289 = vst [vmem:[#allocation8 + $0x8] sm:$0xff] %v5225
    %5290 = vst [vmem:[#allocation8 + $0x10] sm:$0xff] %v5226
    %5291 = vst [vmem:[#allocation8 + $0x18] sm:$0xff] %v5227
    %5292 = vst [vmem:[#allocation8 + $0x20] sm:$0xff] %v5228
    %5293 = vst [vmem:[#allocation8 + $0x28] sm:$0xff] %v5229
    %5294 = vst [vmem:[#allocation8 + $0x30] sm:$0xff] %v5230
    %5295 = vst [vmem:[#allocation8 + $0x38] sm:$0xff] %v5231
    %5296 = vst [vmem:[#allocation8 + $0x40] sm:$0xff] %v5232
    %5297 = vst [vmem:[#allocation8 + $0x48] sm:$0xff] %v5233
    %5298 = vst [vmem:[#allocation8 + $0x50] sm:$0xff] %v5234
    %5299 = vst [vmem:[#allocation8 + $0x58] sm:$0xff] %v5235
    %5300 = vst [vmem:[#allocation8 + $0x60] sm:$0xff] %v5236
    %5301 = vst [vmem:[#allocation8 + $0x68] sm:$0xff] %v5237
    %5302 = vst [vmem:[#allocation8 + $0x70] sm:$0xff] %v5238
    %5303 = vst [vmem:[#allocation8 + $0x78] sm:$0xff] %v5239
    %5304 = vst [vmem:[#allocation8 + $0x80] sm:$0xff] %v5240
    %5305 = vst [vmem:[#allocation8 + $0x88] sm:$0xff] %v5241
    %5306 = vst [vmem:[#allocation8 + $0x90] sm:$0xff] %v5242
    %5307 = vst [vmem:[#allocation8 + $0x98] sm:$0xff] %v5243
    %5308 = vst [vmem:[#allocation8 + $0xa0] sm:$0xff] %v5244
    %5309 = vst [vmem:[#allocation8 + $0xa8] sm:$0xff] %v5245
    %5310 = vst [vmem:[#allocation8 + $0xb0] sm:$0xff] %v5246
    %5311 = vst [vmem:[#allocation8 + $0xb8] sm:$0xff] %v5247
    %5312 = vst [vmem:[#allocation8 + $0xc0] sm:$0xff] %v5248
    %5313 = vst [vmem:[#allocation8 + $0xc8] sm:$0xff] %v5249
    %5314 = vst [vmem:[#allocation8 + $0xd0] sm:$0xff] %v5250
    %5315 = vst [vmem:[#allocation8 + $0xd8] sm:$0xff] %v5251
    %5316 = vst [vmem:[#allocation8 + $0xe0] sm:$0xff] %v5252
    %5317 = vst [vmem:[#allocation8 + $0xe8] sm:$0xff] %v5253
    %5318 = vst [vmem:[#allocation8 + $0xf0] sm:$0xff] %v5254
    %5319 = vst [vmem:[#allocation8 + $0xf8] sm:$0xff] %v5255
    %5320 = vst [vmem:[#allocation8 + $0x100] sm:$0xff] %v5256
    %5321 = vst [vmem:[#allocation8 + $0x108] sm:$0xff] %v5257
    %5322 = vst [vmem:[#allocation8 + $0x110] sm:$0xff] %v5258
    %5323 = vst [vmem:[#allocation8 + $0x118] sm:$0xff] %v5259
    %5324 = vst [vmem:[#allocation8 + $0x120] sm:$0xff] %v5260
    %5325 = vst [vmem:[#allocation8 + $0x128] sm:$0xff] %v5261
    %5326 = vst [vmem:[#allocation8 + $0x130] sm:$0xff] %v5262
    %5327 = vst [vmem:[#allocation8 + $0x138] sm:$0xff] %v5263
    %5328 = vst [vmem:[#allocation8 + $0x140] sm:$0xff] %v5264
    %5329 = vst [vmem:[#allocation8 + $0x148] sm:$0xff] %v5265
    %5330 = vst [vmem:[#allocation8 + $0x150] sm:$0xff] %v5266
    %5331 = vst [vmem:[#allocation8 + $0x158] sm:$0xff] %v5267
    %5332 = vst [vmem:[#allocation8 + $0x160] sm:$0xff] %v5268
    %5333 = vst [vmem:[#allocation8 + $0x168] sm:$0xff] %v5269
    %5334 = vst [vmem:[#allocation8 + $0x170] sm:$0xff] %v5270
    %5335 = vst [vmem:[#allocation8 + $0x178] sm:$0xff] %v5271
    %5336 = vst [vmem:[#allocation8 + $0x180] sm:$0xff] %v5272
    %5337 = vst [vmem:[#allocation8 + $0x188] sm:$0xff] %v5273
    %5338 = vst [vmem:[#allocation8 + $0x190] sm:$0xff] %v5274
    %5339 = vst [vmem:[#allocation8 + $0x198] sm:$0xff] %v5275
    %5340 = vst [vmem:[#allocation8 + $0x1a0] sm:$0xff] %v5276
    %5341 = vst [vmem:[#allocation8 + $0x1a8] sm:$0xff] %v5277
    %5342 = vst [vmem:[#allocation8 + $0x1b0] sm:$0xff] %v5278
    %5343 = vst [vmem:[#allocation8 + $0x1b8] sm:$0xff] %v5279
    %5344 = vst [vmem:[#allocation8 + $0x1c0] sm:$0xff] %v5280
    %5345 = vst [vmem:[#allocation8 + $0x1c8] sm:$0xff] %v5281
    %5346 = vst [vmem:[#allocation8 + $0x1d0] sm:$0xff] %v5282
    %5347 = vst [vmem:[#allocation8 + $0x1d8] sm:$0xff] %v5283
    %5348 = vst [vmem:[#allocation8 + $0x1e0] sm:$0xff] %v5284
    %5349 = vst [vmem:[#allocation8 + $0x1e8] sm:$0xff] %v5285
    %5350 = vst [vmem:[#allocation8 + $0x1f0] sm:$0xff] %v5286
    %5351 = vst [vmem:[#allocation8 + $0x1f8] sm:$0xff] %v5287
    // Predicated region
    $region38: #{tpu_custom_call.1} parent=1 // pred_check
      _
    $region39: #{tpu_custom_call.1} parent=1 // pred_check_branch
      %5353 = sbr.rel (0) target = $region41
    $region40: #{tpu_custom_call.1} parent=1 // pred_region
      %s5355 = ssub.s32 8192, 8192
      %5356 = vsyncadd [#allocation5], %s5355
      %s5357 = sshll.u32 [#allocation8], 4
      %s5358 = int_to_ptr.vmem [resolvable:$true] %s5357
      %5363 = dma.vmem_to_hbm [thread:$0]  %s5358, 8192, %s7, [#allocation5], 256, 256, 16
    $region41: #{tpu_custom_call.1} parent=1 // pred_fallthru
      _
    // Predicated region
    $region42: #{tpu_custom_call.1} parent=1 // pred_check
      _
    $region43: #{tpu_custom_call.1} parent=1 // pred_check_branch
      %5365 = sbr.rel (0) target = $region45
    $region44: #{tpu_custom_call.1} parent=1 // pred_region
      %5366 = dma.done [#allocation5], 8192
    $region45: #{tpu_custom_call.1} parent=1 // pred_fallthru
      _
    %5367 = vsyncpa [#allocation4], 1
    %5368 = vsyncpa [#allocation7], 1
    %5369 = vsyncpa [#allocation5], 1

</llo_original>
